<compile_context>
chip_gen: v6e
topology: v6e:2x2x1
jax: 0.10.0
libtpu: 0.0.40
codegen_flags: <defaults>
</compile_context>

<pallas_src>
import math
import functools

import jax
import jax.numpy as jnp
from jax.experimental import pallas as pl
from jax.experimental.pallas import tpu as pltpu

# ---- model config (small, consistent with the module defaults) ----
N_HEADS = 4
EMBED_DIM = 32
N_LAYERS = 2
NODE_DIM = 3
FF_HIDDEN = 128
KEY_DIM = EMBED_DIM // N_HEADS
VAL_DIM = EMBED_DIM // N_HEADS
BN_EPS = 1e-5


# ---------------- fused encoder kernel ----------------

def _bn(x, gamma, beta):
    # Training-mode BatchNorm1d over the flattened (B*N, D) slab.
    mean = jnp.mean(x, axis=0, keepdims=True)
    var = jnp.mean(jnp.square(x - mean), axis=0, keepdims=True)
    return (x - mean) * jax.lax.rsqrt(var + BN_EPS) * gamma + beta


def _encoder_kernel(
    x_ref, iw_ref, ib_ref,
    wqkv_ref, wo_ref,
    bn1g_ref, bn1b_ref,
    w1_ref, b1_ref, w2_ref, b2_ref,
    bn2g_ref, bn2b_ref,
    h_out_ref, mean_out_ref,
    h_scr,
    *, batch, graph_size, n_heads, key_dim, val_dim,
):
    layer = pl.program_id(0)
    N = graph_size
    rows = batch * N
    D = h_scr.shape[-1]
    HK = n_heads * key_dim
    HV = n_heads * val_dim

    # -------- prologue (layer 0): init_embed as VPU multiply-adds (K=3) --------
    @pl.when(layer == 0)
    def _():
        h0 = jnp.broadcast_to(ib_ref[...], (rows, D))
        for kidx in range(x_ref.shape[1]):
            xk = jnp.broadcast_to(x_ref[:, kidx:kidx + 1], (rows, D))
            wk = jnp.broadcast_to(iw_ref[kidx:kidx + 1, :], (rows, D))
            h0 = h0 + xk * wk
        h_scr[...] = h0

    h = h_scr[...]                                                  # (B*N, D)

    # -------- MHA + skip: one fused QKV projection over all B*N rows --------
    # 1/sqrt(key_dim) is already folded into the Wq columns of wqkv.
    qkv = jnp.dot(h, wqkv_ref[...], preferred_element_type=jnp.float32)  # (B*N, 3*HK)

    heads_rows = []
    for b in range(batch):                                          # unrolled (tiny B)
        r0 = b * N
        q_b = qkv[r0:r0 + N, 0:HK]
        k_b = qkv[r0:r0 + N, HK:2 * HK]
        v_b = qkv[r0:r0 + N, 2 * HK:2 * HK + HV]
        head_outs = []
        for hd in range(n_heads):                                   # unrolled (tiny H)
            q_h = q_b[:, hd * key_dim:(hd + 1) * key_dim]
            k_h = k_b[:, hd * key_dim:(hd + 1) * key_dim]
            v_h = v_b[:, hd * val_dim:(hd + 1) * val_dim]
            compat = jnp.dot(q_h, k_h.T, preferred_element_type=jnp.float32)  # (N, N)
            compat = compat - jnp.max(compat, axis=-1, keepdims=True)
            e = jnp.exp(compat)
            inv = pl.reciprocal(jnp.sum(e, axis=-1, keepdims=True), approx=True)
            attn = e * inv
            head_outs.append(jnp.dot(attn, v_h, preferred_element_type=jnp.float32))
        heads_rows.append(jnp.concatenate(head_outs, axis=-1))      # (N, H*Vd)
    heads_cat = jnp.concatenate(heads_rows, axis=0)                 # (B*N, H*Vd)

    # Single fused output projection for all rows (matches torch.mm(heads, W_out.view(-1, D))).
    h = h + jnp.dot(heads_cat, wo_ref[...], preferred_element_type=jnp.float32)

    # -------- BatchNorm 1 --------
    h = _bn(h, bn1g_ref[...], bn1b_ref[...])

    # -------- FFN + skip --------
    f = jnp.maximum(
        jnp.dot(h, w1_ref[...], preferred_element_type=jnp.float32) + b1_ref[...], 0.0
    )
    h = h + jnp.dot(f, w2_ref[...], preferred_element_type=jnp.float32) + b2_ref[...]

    # -------- BatchNorm 2 --------
    h = _bn(h, bn2g_ref[...], bn2b_ref[...])

    h_scr[...] = h                                                  # carry to next layer

    # -------- epilogue (last layer): node embeddings + per-graph mean --------
    @pl.when(layer == pl.num_programs(0) - 1)
    def _():
        h_out_ref[...] = h
        means = [
            jnp.mean(h[b * N:(b + 1) * N, :], axis=0, keepdims=True)
            for b in range(batch)
        ]
        mean_out_ref[...] = jnp.concatenate(means, axis=0)


# ---------------- wrapper ----------------

def pack_params(p):
    """Pack per-layer params into layer-stacked, kernel-friendly arrays."""
    scale = 1.0 / math.sqrt(KEY_DIM)

    def qkv_flat(layer):
        # (H, D, Kd) -> (D, H*Kd); fold attention scale into Wq.
        wq = jnp.transpose(layer["Wq"], (1, 0, 2)).reshape(EMBED_DIM, N_HEADS * KEY_DIM) * scale
        wk = jnp.transpose(layer["Wk"], (1, 0, 2)).reshape(EMBED_DIM, N_HEADS * KEY_DIM)
        wv = jnp.transpose(layer["Wv"], (1, 0, 2)).reshape(EMBED_DIM, N_HEADS * VAL_DIM)
        return jnp.concatenate([wq, wk, wv], axis=-1)               # (D, 3*H*Kd)

    layers = p["layers"]
    return {
        "init_W": p["init_W"],
        "init_b": p["init_b"],
        "Wqkv": jnp.stack([qkv_flat(l) for l in layers]),                               # (L, D, 96)
        "Wo": jnp.stack([l["Wo"].reshape(N_HEADS * VAL_DIM, EMBED_DIM) for l in layers]),  # (L, H*Vd, D)
        "bn1_g": jnp.stack([l["bn1_g"] for l in layers]),                               # (L, 1, D)
        "bn1_b": jnp.stack([l["bn1_b"] for l in layers]),
        "W1": jnp.stack([l["W1"] for l in layers]),                                     # (L, D, FF)
        "b1": jnp.stack([l["b1"] for l in layers]),                                     # (L, 1, FF)
        "W2": jnp.stack([l["W2"] for l in layers]),                                     # (L, FF, D)
        "b2": jnp.stack([l["b2"] for l in layers]),                                     # (L, 1, D)
        "bn2_g": jnp.stack([l["bn2_g"] for l in layers]),
        "bn2_b": jnp.stack([l["bn2_b"] for l in layers]),
    }


def graph_attention_encoder(x, packed):
    B, N, nd = x.shape
    D = EMBED_DIM
    L = packed["Wqkv"].shape[0]
    x2d = x.reshape(B * N, nd)

    kernel = functools.partial(
        _encoder_kernel,
        batch=B, graph_size=N, n_heads=N_HEADS, key_dim=KEY_DIM, val_dim=VAL_DIM,
    )

    const2 = lambda l: (0, 0)        # arrays shared across layers
    perlayer3 = lambda l: (l, 0, 0)  # layer-stacked weights

    h2d, h_mean = pl.pallas_call(
        kernel,
        out_shape=(
            jax.ShapeDtypeStruct((B * N, D), jnp.float32),
            jax.ShapeDtypeStruct((B, D), jnp.float32),
        ),
        grid=(L,),
        in_specs=[
            pl.BlockSpec((B * N, nd), const2),                          # x (flattened)
            pl.BlockSpec((nd, D), const2),                              # init_W
            pl.BlockSpec((1, D), const2),                               # init_b
            pl.BlockSpec((None, D, 3 * N_HEADS * KEY_DIM), perlayer3),  # Wqkv
            pl.BlockSpec((None, N_HEADS * VAL_DIM, D), perlayer3),      # Wo (flat)
            pl.BlockSpec((None, 1, D), perlayer3),                      # bn1 gamma
            pl.BlockSpec((None, 1, D), perlayer3),                      # bn1 beta
            pl.BlockSpec((None, D, FF_HIDDEN), perlayer3),              # W1
            pl.BlockSpec((None, 1, FF_HIDDEN), perlayer3),              # b1
            pl.BlockSpec((None, FF_HIDDEN, D), perlayer3),              # W2
            pl.BlockSpec((None, 1, D), perlayer3),                      # b2
            pl.BlockSpec((None, 1, D), perlayer3),                      # bn2 gamma
            pl.BlockSpec((None, 1, D), perlayer3),                      # bn2 beta
        ],
        out_specs=(
            pl.BlockSpec((B * N, D), const2),
            pl.BlockSpec((B, D), const2),
        ),
        scratch_shapes=[pltpu.VMEM((B * N, D), jnp.float32)],           # resident h carry
        compiler_params=pltpu.CompilerParams(dimension_semantics=("arbitrary",)),
    )(
        x2d, packed["init_W"], packed["init_b"],
        packed["Wqkv"], packed["Wo"],
        packed["bn1_g"], packed["bn1_b"],
        packed["W1"], packed["b1"], packed["W2"], packed["b2"],
        packed["bn2_g"], packed["bn2_b"],
    )
    return h2d.reshape(B, N, D), h_mean


# ---------------- parameter init (deterministic, synthetic) ----------------

def init_params(key):
    def unif(k, shape, stdv):
        return jax.random.uniform(k, shape, jnp.float32, -stdv, stdv)

    keys = jax.random.split(key, 1 + N_LAYERS)
    k0, k1 = jax.random.split(keys[0])
    p = {
        "init_W": unif(k0, (NODE_DIM, EMBED_DIM), 1.0 / math.sqrt(NODE_DIM)),
        "init_b": unif(k1, (1, EMBED_DIM), 1.0 / math.sqrt(NODE_DIM)),
        "layers": [],
    }
    for li in range(N_LAYERS):
        lk = jax.random.split(keys[1 + li], 8)
        layer = dict(
            Wq=unif(lk[0], (N_HEADS, EMBED_DIM, KEY_DIM), 1.0 / math.sqrt(KEY_DIM)),
            Wk=unif(lk[1], (N_HEADS, EMBED_DIM, KEY_DIM), 1.0 / math.sqrt(KEY_DIM)),
            Wv=unif(lk[2], (N_HEADS, EMBED_DIM, VAL_DIM), 1.0 / math.sqrt(VAL_DIM)),
            Wo=unif(lk[3], (N_HEADS, VAL_DIM, EMBED_DIM), 1.0 / math.sqrt(EMBED_DIM)),
            bn1_g=jnp.ones((1, EMBED_DIM), jnp.float32),
            bn1_b=jnp.zeros((1, EMBED_DIM), jnp.float32),
            W1=unif(lk[4], (EMBED_DIM, FF_HIDDEN), 1.0 / math.sqrt(EMBED_DIM)),
            b1=unif(lk[5], (1, FF_HIDDEN), 1.0 / math.sqrt(EMBED_DIM)),
            W2=unif(lk[6], (FF_HIDDEN, EMBED_DIM), 1.0 / math.sqrt(FF_HIDDEN)),
            b2=unif(lk[7], (1, EMBED_DIM), 1.0 / math.sqrt(FF_HIDDEN)),
            bn2_g=jnp.ones((1, EMBED_DIM), jnp.float32),
            bn2_b=jnp.zeros((1, EMBED_DIM), jnp.float32),
        )
        p["layers"].append(layer)
    return p


# ---------------- pure-JAX reference for sanity checking ----------------

def _bn_ref(h, g, b):
    B, N, D = h.shape
    x = h.reshape(-1, D)
    mean = x.mean(0, keepdims=True)
    var = ((x - mean) ** 2).mean(0, keepdims=True)
    return ((x - mean) / jnp.sqrt(var + BN_EPS) * g + b).reshape(B, N, D)


def ref_forward(x, params):
    B, N, nd = x.shape
    h = (x.reshape(-1, nd) @ params["init_W"] + params["init_b"]).reshape(B, N, EMBED_DIM)
    for layer in params["layers"]:
        q = jnp.einsum("bnd,hdk->hbnk", h, layer["Wq"])
        k = jnp.einsum("bnd,hdk->hbnk", h, layer["Wk"])
        v = jnp.einsum("bnd,hdk->hbnk", h, layer["Wv"])
        compat = jnp.einsum("hbqk,hbnk->hbqn", q, k) / math.sqrt(KEY_DIM)
        attn = jax.nn.softmax(compat, axis=-1)
        heads = jnp.einsum("hbqn,hbnk->hbqk", attn, v)
        mha = jnp.einsum("hbqk,hkd->bqd", heads, layer["Wo"])
        h = _bn_ref(h + mha, layer["bn1_g"], layer["bn1_b"])
        x2 = h.reshape(-1, EMBED_DIM)
        ff = jnp.maximum(x2 @ layer["W1"] + layer["b1"], 0.0) @ layer["W2"] + layer["b2"]
        h = _bn_ref(h + ff.reshape(B, N, EMBED_DIM), layer["bn2_g"], layer["bn2_b"])
    return h, h.mean(axis=1)


if __name__ == "__main__":
    key = jax.random.PRNGKey(0)
    kx, kp = jax.random.split(key)
    B, N = 2, 8  # batch, graph_size
    x = jax.random.normal(kx, (B, N, NODE_DIM), jnp.float32)
    params = init_params(kp)
    packed = pack_params(params)   # pack once (QKV concat, scale folding, layer stacking)

    h, h_mean = graph_attention_encoder(x, packed)
    jax.block_until_ready((h, h_mean))

    h_ref, h_mean_ref = ref_forward(x, params)
    assert h.shape == (B, N, EMBED_DIM) and h_mean.shape == (B, EMBED_DIM)
    assert jnp.allclose(h, h_ref, atol=2e-2, rtol=2e-2), "node embeddings mismatch"
    assert jnp.allclose(h_mean, h_mean_ref, atol=2e-2, rtol=2e-2), "graph embedding mismatch"

    print("KERNEL_OK")
</pallas_src>

<mosaic_0001>
module attributes {stable_mosaic.version = 11 : i64} {
  func.func @_encoder_kernel(%arg0: i32, %arg1: memref<16x3xf32, #tpu.memory_space<vmem>>, %arg2: memref<3x32xf32, #tpu.memory_space<vmem>>, %arg3: memref<1x32xf32, #tpu.memory_space<vmem>>, %arg4: memref<1x32x96xf32, #tpu.memory_space<vmem>>, %arg5: memref<1x32x32xf32, #tpu.memory_space<vmem>>, %arg6: memref<1x1x32xf32, #tpu.memory_space<vmem>>, %arg7: memref<1x1x32xf32, #tpu.memory_space<vmem>>, %arg8: memref<1x32x128xf32, #tpu.memory_space<vmem>>, %arg9: memref<1x1x128xf32, #tpu.memory_space<vmem>>, %arg10: memref<1x128x32xf32, #tpu.memory_space<vmem>>, %arg11: memref<1x1x32xf32, #tpu.memory_space<vmem>>, %arg12: memref<1x1x32xf32, #tpu.memory_space<vmem>>, %arg13: memref<1x1x32xf32, #tpu.memory_space<vmem>>, %arg14: memref<16x32xf32, #tpu.memory_space<vmem>>, %arg15: memref<2x32xf32, #tpu.memory_space<vmem>>, %arg16: memref<16x32xf32, #tpu.memory_space<vmem>>) attributes {dimension_semantics = [#tpu.dimension_semantics<arbitrary>], iteration_bounds = array<i64: 2>, scalar_prefetch = 0 : i64, scratch_operands = 1 : i64, tpu.core_type = #tpu.core_type<tc>, window_params = [{pipeline_mode = #tpu.pipeline_mode<synchronous>, transform_indices = @transform_0, window_bounds = array<i64: 16, 3>}, {pipeline_mode = #tpu.pipeline_mode<synchronous>, transform_indices = @transform_1, window_bounds = array<i64: 3, 32>}, {pipeline_mode = #tpu.pipeline_mode<synchronous>, transform_indices = @transform_2, window_bounds = array<i64: 1, 32>}, {transform_indices = @transform_3, window_bounds = array<i64: 1, 32, 96>}, {transform_indices = @transform_4, window_bounds = array<i64: 1, 32, 32>}, {transform_indices = @transform_5, window_bounds = array<i64: 1, 1, 32>}, {transform_indices = @transform_6, window_bounds = array<i64: 1, 1, 32>}, {transform_indices = @transform_7, window_bounds = array<i64: 1, 32, 128>}, {transform_indices = @transform_8, window_bounds = array<i64: 1, 1, 128>}, {transform_indices = @transform_9, window_bounds = array<i64: 1, 128, 32>}, {transform_indices = @transform_10, window_bounds = array<i64: 1, 1, 32>}, {transform_indices = @transform_11, window_bounds = array<i64: 1, 1, 32>}, {transform_indices = @transform_12, window_bounds = array<i64: 1, 1, 32>}, {pipeline_mode = #tpu.pipeline_mode<synchronous>, transform_indices = @transform_13, window_bounds = array<i64: 16, 32>}, {pipeline_mode = #tpu.pipeline_mode<synchronous>, transform_indices = @transform_14, window_bounds = array<i64: 2, 32>}]} {
    %c0_i32 = arith.constant 0 : i32
    %0 = arith.cmpi eq, %arg0, %c0_i32 : i32
    %1 = arith.extui %0 : i1 to i32
    %c0_i32_0 = arith.constant 0 : i32
    %2 = arith.cmpi ne, %1, %c0_i32_0 : i32
    scf.if %2 {
      %c0_81 = arith.constant 0 : index
      %c0_82 = arith.constant 0 : index
      %221 = vector.load %arg3[%c0_81, %c0_82] : memref<1x32xf32, #tpu.memory_space<vmem>>, vector<1x32xf32>
      %222 = vector.shape_cast %221 : vector<1x32xf32> to vector<1x32xf32>
      %223 = vector.broadcast %222 : vector<1x32xf32> to vector<16x32xf32>
      %c0_83 = arith.constant 0 : index
      %c0_84 = arith.constant 0 : index
      %224 = vector.load %arg1[%c0_83, %c0_84] : memref<16x3xf32, #tpu.memory_space<vmem>>, vector<16x1xf32>
      %225 = vector.shape_cast %224 : vector<16x1xf32> to vector<16x1xf32>
      %226 = vector.broadcast %225 : vector<16x1xf32> to vector<16x32xf32>
      %c0_85 = arith.constant 0 : index
      %c0_86 = arith.constant 0 : index
      %227 = vector.load %arg2[%c0_85, %c0_86] : memref<3x32xf32, #tpu.memory_space<vmem>>, vector<1x32xf32>
      %228 = vector.shape_cast %227 : vector<1x32xf32> to vector<1x32xf32>
      %229 = vector.broadcast %228 : vector<1x32xf32> to vector<16x32xf32>
      %230 = arith.mulf %226, %229 : vector<16x32xf32>
      %231 = arith.addf %223, %230 : vector<16x32xf32>
      %c0_87 = arith.constant 0 : index
      %c1 = arith.constant 1 : index
      %232 = vector.load %arg1[%c0_87, %c1] : memref<16x3xf32, #tpu.memory_space<vmem>>, vector<16x1xf32>
      %233 = vector.shape_cast %232 : vector<16x1xf32> to vector<16x1xf32>
      %234 = vector.broadcast %233 : vector<16x1xf32> to vector<16x32xf32>
      %c1_88 = arith.constant 1 : index
      %c0_89 = arith.constant 0 : index
      %235 = vector.load %arg2[%c1_88, %c0_89] : memref<3x32xf32, #tpu.memory_space<vmem>>, vector<1x32xf32>
      %236 = vector.shape_cast %235 : vector<1x32xf32> to vector<1x32xf32>
      %237 = vector.broadcast %236 : vector<1x32xf32> to vector<16x32xf32>
      %238 = arith.mulf %234, %237 : vector<16x32xf32>
      %239 = arith.addf %231, %238 : vector<16x32xf32>
      %c0_90 = arith.constant 0 : index
      %c2 = arith.constant 2 : index
      %240 = vector.load %arg1[%c0_90, %c2] : memref<16x3xf32, #tpu.memory_space<vmem>>, vector<16x1xf32>
      %241 = vector.shape_cast %240 : vector<16x1xf32> to vector<16x1xf32>
      %242 = vector.broadcast %241 : vector<16x1xf32> to vector<16x32xf32>
      %c2_91 = arith.constant 2 : index
      %c0_92 = arith.constant 0 : index
      %243 = vector.load %arg2[%c2_91, %c0_92] : memref<3x32xf32, #tpu.memory_space<vmem>>, vector<1x32xf32>
      %244 = vector.shape_cast %243 : vector<1x32xf32> to vector<1x32xf32>
      %245 = vector.broadcast %244 : vector<1x32xf32> to vector<16x32xf32>
      %246 = arith.mulf %242, %245 : vector<16x32xf32>
      %247 = arith.addf %239, %246 : vector<16x32xf32>
      %c0_93 = arith.constant 0 : index
      %c0_94 = arith.constant 0 : index
      %248 = vector.load %arg16[%c0_93, %c0_94] : memref<16x32xf32, #tpu.memory_space<vmem>>, vector<16x32xf32>
      tpu.vector_store %arg16[%c0_93, %c0_94], %247 {strides = array<i32>} : memref<16x32xf32, #tpu.memory_space<vmem>>, vector<16x32xf32>,
    } else {
    }
    %c0 = arith.constant 0 : index
    %c0_1 = arith.constant 0 : index
    %3 = vector.load %arg16[%c0, %c0_1] : memref<16x32xf32, #tpu.memory_space<vmem>>, vector<16x32xf32>
    %c0_2 = arith.constant 0 : index
    %c0_3 = arith.constant 0 : index
    %c0_4 = arith.constant 0 : index
    %4 = vector.load %arg4[%c0_2, %c0_3, %c0_4] : memref<1x32x96xf32, #tpu.memory_space<vmem>>, vector<1x32x96xf32>
    %5 = vector.shape_cast %4 : vector<1x32x96xf32> to vector<32x96xf32>
    %cst = arith.constant dense<0.000000e+00> : vector<16x96xf32>
    %6 = tpu.matmul %3, %5, %cst {dimension_numbers = #tpu.dot_dimension_numbers<[1], [0], [0], [1], [0, 0, 1, 1], [], []>} : vector<16x32xf32>, vector<32x96xf32>, vector<16x96xf32> -> vector<16x96xf32>
    %7 = vector.extract_strided_slice %6 {offsets = [0, 0], sizes = [8, 32], strides = [1, 1]} : vector<16x96xf32> to vector<8x32xf32>
    %8 = vector.extract_strided_slice %6 {offsets = [0, 32], sizes = [8, 32], strides = [1, 1]} : vector<16x96xf32> to vector<8x32xf32>
    %9 = vector.extract_strided_slice %6 {offsets = [0, 64], sizes = [8, 32], strides = [1, 1]} : vector<16x96xf32> to vector<8x32xf32>
    %10 = vector.extract_strided_slice %7 {offsets = [0, 0], sizes = [8, 8], strides = [1, 1]} : vector<8x32xf32> to vector<8x8xf32>
    %11 = vector.extract_strided_slice %8 {offsets = [0, 0], sizes = [8, 8], strides = [1, 1]} : vector<8x32xf32> to vector<8x8xf32>
    %12 = vector.extract_strided_slice %9 {offsets = [0, 0], sizes = [8, 8], strides = [1, 1]} : vector<8x32xf32> to vector<8x8xf32>
    %13 = tpu.transpose %11, [1, 0] : vector<8x8xf32> -> vector<8x8xf32>
    %cst_5 = arith.constant dense<0.000000e+00> : vector<8x8xf32>
    %14 = tpu.matmul %10, %13, %cst_5 {dimension_numbers = #tpu.dot_dimension_numbers<[1], [0], [0], [1], [0, 0, 1, 1], [], []>} : vector<8x8xf32>, vector<8x8xf32>, vector<8x8xf32> -> vector<8x8xf32>
    %cst_6 = arith.constant dense<0xFF800000> : vector<8xf32>
    %15 = vector.multi_reduction <maximumf>, %14, %cst_6 [1] : vector<8x8xf32> to vector<8xf32>
    %16 = vector.shape_cast %15 : vector<8xf32> to vector<8x1xf32>
    %17 = vector.broadcast %16 : vector<8x1xf32> to vector<8x8xf32>
    %18 = arith.subf %14, %17 : vector<8x8xf32>
    %19 = math.exp %18 : vector<8x8xf32>
    %cst_7 = arith.constant dense<0.000000e+00> : vector<8xf32>
    %20 = vector.multi_reduction <add>, %19, %cst_7 [1] : vector<8x8xf32> to vector<8xf32>
    %21 = vector.shape_cast %20 : vector<8xf32> to vector<8x1xf32>
    %22 = tpu.reciprocal %21 {approx = true} : vector<8x1xf32> -> vector<8x1xf32>
    %23 = vector.broadcast %22 : vector<8x1xf32> to vector<8x8xf32>
    %24 = arith.mulf %19, %23 : vector<8x8xf32>
    %cst_8 = arith.constant dense<0.000000e+00> : vector<8x8xf32>
    %25 = tpu.matmul %24, %12, %cst_8 {dimension_numbers = #tpu.dot_dimension_numbers<[1], [0], [0], [1], [0, 0, 1, 1], [], []>} : vector<8x8xf32>, vector<8x8xf32>, vector<8x8xf32> -> vector<8x8xf32>
    %26 = vector.extract_strided_slice %7 {offsets = [0, 8], sizes = [8, 8], strides = [1, 1]} : vector<8x32xf32> to vector<8x8xf32>
    %27 = vector.extract_strided_slice %8 {offsets = [0, 8], sizes = [8, 8], strides = [1, 1]} : vector<8x32xf32> to vector<8x8xf32>
    %28 = vector.extract_strided_slice %9 {offsets = [0, 8], sizes = [8, 8], strides = [1, 1]} : vector<8x32xf32> to vector<8x8xf32>
    %29 = tpu.transpose %27, [1, 0] : vector<8x8xf32> -> vector<8x8xf32>
    %cst_9 = arith.constant dense<0.000000e+00> : vector<8x8xf32>
    %30 = tpu.matmul %26, %29, %cst_9 {dimension_numbers = #tpu.dot_dimension_numbers<[1], [0], [0], [1], [0, 0, 1, 1], [], []>} : vector<8x8xf32>, vector<8x8xf32>, vector<8x8xf32> -> vector<8x8xf32>
    %cst_10 = arith.constant dense<0xFF800000> : vector<8xf32>
    %31 = vector.multi_reduction <maximumf>, %30, %cst_10 [1] : vector<8x8xf32> to vector<8xf32>
    %32 = vector.shape_cast %31 : vector<8xf32> to vector<8x1xf32>
    %33 = vector.broadcast %32 : vector<8x1xf32> to vector<8x8xf32>
    %34 = arith.subf %30, %33 : vector<8x8xf32>
    %35 = math.exp %34 : vector<8x8xf32>
    %cst_11 = arith.constant dense<0.000000e+00> : vector<8xf32>
    %36 = vector.multi_reduction <add>, %35, %cst_11 [1] : vector<8x8xf32> to vector<8xf32>
    %37 = vector.shape_cast %36 : vector<8xf32> to vector<8x1xf32>
    %38 = tpu.reciprocal %37 {approx = true} : vector<8x1xf32> -> vector<8x1xf32>
    %39 = vector.broadcast %38 : vector<8x1xf32> to vector<8x8xf32>
    %40 = arith.mulf %35, %39 : vector<8x8xf32>
    %cst_12 = arith.constant dense<0.000000e+00> : vector<8x8xf32>
    %41 = tpu.matmul %40, %28, %cst_12 {dimension_numbers = #tpu.dot_dimension_numbers<[1], [0], [0], [1], [0, 0, 1, 1], [], []>} : vector<8x8xf32>, vector<8x8xf32>, vector<8x8xf32> -> vector<8x8xf32>
    %42 = vector.extract_strided_slice %7 {offsets = [0, 16], sizes = [8, 8], strides = [1, 1]} : vector<8x32xf32> to vector<8x8xf32>
    %43 = vector.extract_strided_slice %8 {offsets = [0, 16], sizes = [8, 8], strides = [1, 1]} : vector<8x32xf32> to vector<8x8xf32>
    %44 = vector.extract_strided_slice %9 {offsets = [0, 16], sizes = [8, 8], strides = [1, 1]} : vector<8x32xf32> to vector<8x8xf32>
    %45 = tpu.transpose %43, [1, 0] : vector<8x8xf32> -> vector<8x8xf32>
    %cst_13 = arith.constant dense<0.000000e+00> : vector<8x8xf32>
    %46 = tpu.matmul %42, %45, %cst_13 {dimension_numbers = #tpu.dot_dimension_numbers<[1], [0], [0], [1], [0, 0, 1, 1], [], []>} : vector<8x8xf32>, vector<8x8xf32>, vector<8x8xf32> -> vector<8x8xf32>
    %cst_14 = arith.constant dense<0xFF800000> : vector<8xf32>
    %47 = vector.multi_reduction <maximumf>, %46, %cst_14 [1] : vector<8x8xf32> to vector<8xf32>
    %48 = vector.shape_cast %47 : vector<8xf32> to vector<8x1xf32>
    %49 = vector.broadcast %48 : vector<8x1xf32> to vector<8x8xf32>
    %50 = arith.subf %46, %49 : vector<8x8xf32>
    %51 = math.exp %50 : vector<8x8xf32>
    %cst_15 = arith.constant dense<0.000000e+00> : vector<8xf32>
    %52 = vector.multi_reduction <add>, %51, %cst_15 [1] : vector<8x8xf32> to vector<8xf32>
    %53 = vector.shape_cast %52 : vector<8xf32> to vector<8x1xf32>
    %54 = tpu.reciprocal %53 {approx = true} : vector<8x1xf32> -> vector<8x1xf32>
    %55 = vector.broadcast %54 : vector<8x1xf32> to vector<8x8xf32>
    %56 = arith.mulf %51, %55 : vector<8x8xf32>
    %cst_16 = arith.constant dense<0.000000e+00> : vector<8x8xf32>
    %57 = tpu.matmul %56, %44, %cst_16 {dimension_numbers = #tpu.dot_dimension_numbers<[1], [0], [0], [1], [0, 0, 1, 1], [], []>} : vector<8x8xf32>, vector<8x8xf32>, vector<8x8xf32> -> vector<8x8xf32>
    %58 = vector.extract_strided_slice %7 {offsets = [0, 24], sizes = [8, 8], strides = [1, 1]} : vector<8x32xf32> to vector<8x8xf32>
    %59 = vector.extract_strided_slice %8 {offsets = [0, 24], sizes = [8, 8], strides = [1, 1]} : vector<8x32xf32> to vector<8x8xf32>
    %60 = vector.extract_strided_slice %9 {offsets = [0, 24], sizes = [8, 8], strides = [1, 1]} : vector<8x32xf32> to vector<8x8xf32>
    %61 = tpu.transpose %59, [1, 0] : vector<8x8xf32> -> vector<8x8xf32>
    %cst_17 = arith.constant dense<0.000000e+00> : vector<8x8xf32>
    %62 = tpu.matmul %58, %61, %cst_17 {dimension_numbers = #tpu.dot_dimension_numbers<[1], [0], [0], [1], [0, 0, 1, 1], [], []>} : vector<8x8xf32>, vector<8x8xf32>, vector<8x8xf32> -> vector<8x8xf32>
    %cst_18 = arith.constant dense<0xFF800000> : vector<8xf32>
    %63 = vector.multi_reduction <maximumf>, %62, %cst_18 [1] : vector<8x8xf32> to vector<8xf32>
    %64 = vector.shape_cast %63 : vector<8xf32> to vector<8x1xf32>
    %65 = vector.broadcast %64 : vector<8x1xf32> to vector<8x8xf32>
    %66 = arith.subf %62, %65 : vector<8x8xf32>
    %67 = math.exp %66 : vector<8x8xf32>
    %cst_19 = arith.constant dense<0.000000e+00> : vector<8xf32>
    %68 = vector.multi_reduction <add>, %67, %cst_19 [1] : vector<8x8xf32> to vector<8xf32>
    %69 = vector.shape_cast %68 : vector<8xf32> to vector<8x1xf32>
    %70 = tpu.reciprocal %69 {approx = true} : vector<8x1xf32> -> vector<8x1xf32>
    %71 = vector.broadcast %70 : vector<8x1xf32> to vector<8x8xf32>
    %72 = arith.mulf %67, %71 : vector<8x8xf32>
    %cst_20 = arith.constant dense<0.000000e+00> : vector<8x8xf32>
    %73 = tpu.matmul %72, %60, %cst_20 {dimension_numbers = #tpu.dot_dimension_numbers<[1], [0], [0], [1], [0, 0, 1, 1], [], []>} : vector<8x8xf32>, vector<8x8xf32>, vector<8x8xf32> -> vector<8x8xf32>
    %74 = tpu.concatenate %25, %41, %57, %73 in 1 : vector<8x8xf32>, vector<8x8xf32>, vector<8x8xf32>, vector<8x8xf32> -> vector<8x32xf32>
    %75 = vector.extract_strided_slice %6 {offsets = [8, 0], sizes = [8, 32], strides = [1, 1]} : vector<16x96xf32> to vector<8x32xf32>
    %76 = vector.extract_strided_slice %6 {offsets = [8, 32], sizes = [8, 32], strides = [1, 1]} : vector<16x96xf32> to vector<8x32xf32>
    %77 = vector.extract_strided_slice %6 {offsets = [8, 64], sizes = [8, 32], strides = [1, 1]} : vector<16x96xf32> to vector<8x32xf32>
    %78 = vector.extract_strided_slice %75 {offsets = [0, 0], sizes = [8, 8], strides = [1, 1]} : vector<8x32xf32> to vector<8x8xf32>
    %79 = vector.extract_strided_slice %76 {offsets = [0, 0], sizes = [8, 8], strides = [1, 1]} : vector<8x32xf32> to vector<8x8xf32>
    %80 = vector.extract_strided_slice %77 {offsets = [0, 0], sizes = [8, 8], strides = [1, 1]} : vector<8x32xf32> to vector<8x8xf32>
    %81 = tpu.transpose %79, [1, 0] : vector<8x8xf32> -> vector<8x8xf32>
    %cst_21 = arith.constant dense<0.000000e+00> : vector<8x8xf32>
    %82 = tpu.matmul %78, %81, %cst_21 {dimension_numbers = #tpu.dot_dimension_numbers<[1], [0], [0], [1], [0, 0, 1, 1], [], []>} : vector<8x8xf32>, vector<8x8xf32>, vector<8x8xf32> -> vector<8x8xf32>
    %cst_22 = arith.constant dense<0xFF800000> : vector<8xf32>
    %83 = vector.multi_reduction <maximumf>, %82, %cst_22 [1] : vector<8x8xf32> to vector<8xf32>
    %84 = vector.shape_cast %83 : vector<8xf32> to vector<8x1xf32>
    %85 = vector.broadcast %84 : vector<8x1xf32> to vector<8x8xf32>
    %86 = arith.subf %82, %85 : vector<8x8xf32>
    %87 = math.exp %86 : vector<8x8xf32>
    %cst_23 = arith.constant dense<0.000000e+00> : vector<8xf32>
    %88 = vector.multi_reduction <add>, %87, %cst_23 [1] : vector<8x8xf32> to vector<8xf32>
    %89 = vector.shape_cast %88 : vector<8xf32> to vector<8x1xf32>
    %90 = tpu.reciprocal %89 {approx = true} : vector<8x1xf32> -> vector<8x1xf32>
    %91 = vector.broadcast %90 : vector<8x1xf32> to vector<8x8xf32>
    %92 = arith.mulf %87, %91 : vector<8x8xf32>
    %cst_24 = arith.constant dense<0.000000e+00> : vector<8x8xf32>
    %93 = tpu.matmul %92, %80, %cst_24 {dimension_numbers = #tpu.dot_dimension_numbers<[1], [0], [0], [1], [0, 0, 1, 1], [], []>} : vector<8x8xf32>, vector<8x8xf32>, vector<8x8xf32> -> vector<8x8xf32>
    %94 = vector.extract_strided_slice %75 {offsets = [0, 8], sizes = [8, 8], strides = [1, 1]} : vector<8x32xf32> to vector<8x8xf32>
    %95 = vector.extract_strided_slice %76 {offsets = [0, 8], sizes = [8, 8], strides = [1, 1]} : vector<8x32xf32> to vector<8x8xf32>
    %96 = vector.extract_strided_slice %77 {offsets = [0, 8], sizes = [8, 8], strides = [1, 1]} : vector<8x32xf32> to vector<8x8xf32>
    %97 = tpu.transpose %95, [1, 0] : vector<8x8xf32> -> vector<8x8xf32>
    %cst_25 = arith.constant dense<0.000000e+00> : vector<8x8xf32>
    %98 = tpu.matmul %94, %97, %cst_25 {dimension_numbers = #tpu.dot_dimension_numbers<[1], [0], [0], [1], [0, 0, 1, 1], [], []>} : vector<8x8xf32>, vector<8x8xf32>, vector<8x8xf32> -> vector<8x8xf32>
    %cst_26 = arith.constant dense<0xFF800000> : vector<8xf32>
    %99 = vector.multi_reduction <maximumf>, %98, %cst_26 [1] : vector<8x8xf32> to vector<8xf32>
    %100 = vector.shape_cast %99 : vector<8xf32> to vector<8x1xf32>
    %101 = vector.broadcast %100 : vector<8x1xf32> to vector<8x8xf32>
    %102 = arith.subf %98, %101 : vector<8x8xf32>
    %103 = math.exp %102 : vector<8x8xf32>
    %cst_27 = arith.constant dense<0.000000e+00> : vector<8xf32>
    %104 = vector.multi_reduction <add>, %103, %cst_27 [1] : vector<8x8xf32> to vector<8xf32>
    %105 = vector.shape_cast %104 : vector<8xf32> to vector<8x1xf32>
    %106 = tpu.reciprocal %105 {approx = true} : vector<8x1xf32> -> vector<8x1xf32>
    %107 = vector.broadcast %106 : vector<8x1xf32> to vector<8x8xf32>
    %108 = arith.mulf %103, %107 : vector<8x8xf32>
    %cst_28 = arith.constant dense<0.000000e+00> : vector<8x8xf32>
    %109 = tpu.matmul %108, %96, %cst_28 {dimension_numbers = #tpu.dot_dimension_numbers<[1], [0], [0], [1], [0, 0, 1, 1], [], []>} : vector<8x8xf32>, vector<8x8xf32>, vector<8x8xf32> -> vector<8x8xf32>
    %110 = vector.extract_strided_slice %75 {offsets = [0, 16], sizes = [8, 8], strides = [1, 1]} : vector<8x32xf32> to vector<8x8xf32>
    %111 = vector.extract_strided_slice %76 {offsets = [0, 16], sizes = [8, 8], strides = [1, 1]} : vector<8x32xf32> to vector<8x8xf32>
    %112 = vector.extract_strided_slice %77 {offsets = [0, 16], sizes = [8, 8], strides = [1, 1]} : vector<8x32xf32> to vector<8x8xf32>
    %113 = tpu.transpose %111, [1, 0] : vector<8x8xf32> -> vector<8x8xf32>
    %cst_29 = arith.constant dense<0.000000e+00> : vector<8x8xf32>
    %114 = tpu.matmul %110, %113, %cst_29 {dimension_numbers = #tpu.dot_dimension_numbers<[1], [0], [0], [1], [0, 0, 1, 1], [], []>} : vector<8x8xf32>, vector<8x8xf32>, vector<8x8xf32> -> vector<8x8xf32>
    %cst_30 = arith.constant dense<0xFF800000> : vector<8xf32>
    %115 = vector.multi_reduction <maximumf>, %114, %cst_30 [1] : vector<8x8xf32> to vector<8xf32>
    %116 = vector.shape_cast %115 : vector<8xf32> to vector<8x1xf32>
    %117 = vector.broadcast %116 : vector<8x1xf32> to vector<8x8xf32>
    %118 = arith.subf %114, %117 : vector<8x8xf32>
    %119 = math.exp %118 : vector<8x8xf32>
    %cst_31 = arith.constant dense<0.000000e+00> : vector<8xf32>
    %120 = vector.multi_reduction <add>, %119, %cst_31 [1] : vector<8x8xf32> to vector<8xf32>
    %121 = vector.shape_cast %120 : vector<8xf32> to vector<8x1xf32>
    %122 = tpu.reciprocal %121 {approx = true} : vector<8x1xf32> -> vector<8x1xf32>
    %123 = vector.broadcast %122 : vector<8x1xf32> to vector<8x8xf32>
    %124 = arith.mulf %119, %123 : vector<8x8xf32>
    %cst_32 = arith.constant dense<0.000000e+00> : vector<8x8xf32>
    %125 = tpu.matmul %124, %112, %cst_32 {dimension_numbers = #tpu.dot_dimension_numbers<[1], [0], [0], [1], [0, 0, 1, 1], [], []>} : vector<8x8xf32>, vector<8x8xf32>, vector<8x8xf32> -> vector<8x8xf32>
    %126 = vector.extract_strided_slice %75 {offsets = [0, 24], sizes = [8, 8], strides = [1, 1]} : vector<8x32xf32> to vector<8x8xf32>
    %127 = vector.extract_strided_slice %76 {offsets = [0, 24], sizes = [8, 8], strides = [1, 1]} : vector<8x32xf32> to vector<8x8xf32>
    %128 = vector.extract_strided_slice %77 {offsets = [0, 24], sizes = [8, 8], strides = [1, 1]} : vector<8x32xf32> to vector<8x8xf32>
    %129 = tpu.transpose %127, [1, 0] : vector<8x8xf32> -> vector<8x8xf32>
    %cst_33 = arith.constant dense<0.000000e+00> : vector<8x8xf32>
    %130 = tpu.matmul %126, %129, %cst_33 {dimension_numbers = #tpu.dot_dimension_numbers<[1], [0], [0], [1], [0, 0, 1, 1], [], []>} : vector<8x8xf32>, vector<8x8xf32>, vector<8x8xf32> -> vector<8x8xf32>
    %cst_34 = arith.constant dense<0xFF800000> : vector<8xf32>
    %131 = vector.multi_reduction <maximumf>, %130, %cst_34 [1] : vector<8x8xf32> to vector<8xf32>
    %132 = vector.shape_cast %131 : vector<8xf32> to vector<8x1xf32>
    %133 = vector.broadcast %132 : vector<8x1xf32> to vector<8x8xf32>
    %134 = arith.subf %130, %133 : vector<8x8xf32>
    %135 = math.exp %134 : vector<8x8xf32>
    %cst_35 = arith.constant dense<0.000000e+00> : vector<8xf32>
    %136 = vector.multi_reduction <add>, %135, %cst_35 [1] : vector<8x8xf32> to vector<8xf32>
    %137 = vector.shape_cast %136 : vector<8xf32> to vector<8x1xf32>
    %138 = tpu.reciprocal %137 {approx = true} : vector<8x1xf32> -> vector<8x1xf32>
    %139 = vector.broadcast %138 : vector<8x1xf32> to vector<8x8xf32>
    %140 = arith.mulf %135, %139 : vector<8x8xf32>
    %cst_36 = arith.constant dense<0.000000e+00> : vector<8x8xf32>
    %141 = tpu.matmul %140, %128, %cst_36 {dimension_numbers = #tpu.dot_dimension_numbers<[1], [0], [0], [1], [0, 0, 1, 1], [], []>} : vector<8x8xf32>, vector<8x8xf32>, vector<8x8xf32> -> vector<8x8xf32>
    %142 = tpu.concatenate %93, %109, %125, %141 in 1 : vector<8x8xf32>, vector<8x8xf32>, vector<8x8xf32>, vector<8x8xf32> -> vector<8x32xf32>
    %143 = tpu.concatenate %74, %142 in 0 : vector<8x32xf32>, vector<8x32xf32> -> vector<16x32xf32>
    %c0_37 = arith.constant 0 : index
    %c0_38 = arith.constant 0 : index
    %c0_39 = arith.constant 0 : index
    %144 = vector.load %arg5[%c0_37, %c0_38, %c0_39] : memref<1x32x32xf32, #tpu.memory_space<vmem>>, vector<1x32x32xf32>
    %145 = vector.shape_cast %144 : vector<1x32x32xf32> to vector<32x32xf32>
    %cst_40 = arith.constant dense<0.000000e+00> : vector<16x32xf32>
    %146 = tpu.matmul %143, %145, %cst_40 {dimension_numbers = #tpu.dot_dimension_numbers<[1], [0], [0], [1], [0, 0, 1, 1], [], []>} : vector<16x32xf32>, vector<32x32xf32>, vector<16x32xf32> -> vector<16x32xf32>
    %147 = arith.addf %3, %146 : vector<16x32xf32>
    %c0_41 = arith.constant 0 : index
    %c0_42 = arith.constant 0 : index
    %c0_43 = arith.constant 0 : index
    %148 = vector.load %arg6[%c0_41, %c0_42, %c0_43] : memref<1x1x32xf32, #tpu.memory_space<vmem>>, vector<1x1x32xf32>
    %149 = vector.shape_cast %148 : vector<1x1x32xf32> to vector<1x32xf32>
    %c0_44 = arith.constant 0 : index
    %c0_45 = arith.constant 0 : index
    %c0_46 = arith.constant 0 : index
    %150 = vector.load %arg7[%c0_44, %c0_45, %c0_46] : memref<1x1x32xf32, #tpu.memory_space<vmem>>, vector<1x1x32xf32>
    %151 = vector.shape_cast %150 : vector<1x1x32xf32> to vector<1x32xf32>
    %cst_47 = arith.constant dense<0.000000e+00> : vector<32xf32>
    %152 = vector.multi_reduction <add>, %147, %cst_47 [0] : vector<16x32xf32> to vector<32xf32>
    %153 = vector.shape_cast %152 : vector<32xf32> to vector<1x32xf32>
    %cst_48 = arith.constant 1.600000e+01 : f32
    %154 = vector.broadcast %cst_48 : f32 to vector<1x32xf32>
    %155 = arith.divf %153, %154 : vector<1x32xf32>
    %156 = vector.broadcast %155 : vector<1x32xf32> to vector<16x32xf32>
    %157 = arith.subf %147, %156 : vector<16x32xf32>
    %158 = arith.mulf %157, %157 : vector<16x32xf32>
    %cst_49 = arith.constant dense<0.000000e+00> : vector<32xf32>
    %159 = vector.multi_reduction <add>, %158, %cst_49 [0] : vector<16x32xf32> to vector<32xf32>
    %160 = vector.shape_cast %159 : vector<32xf32> to vector<1x32xf32>
    %cst_50 = arith.constant 1.600000e+01 : f32
    %161 = vector.broadcast %cst_50 : f32 to vector<1x32xf32>
    %162 = arith.divf %160, %161 : vector<1x32xf32>
    %163 = vector.broadcast %155 : vector<1x32xf32> to vector<16x32xf32>
    %164 = arith.subf %147, %163 : vector<16x32xf32>
    %cst_51 = arith.constant 9.99999974E-6 : f32
    %165 = vector.broadcast %cst_51 : f32 to vector<1x32xf32>
    %166 = arith.addf %162, %165 : vector<1x32xf32>
    %167 = math.rsqrt %166 : vector<1x32xf32>
    %168 = vector.broadcast %167 : vector<1x32xf32> to vector<16x32xf32>
    %169 = arith.mulf %164, %168 : vector<16x32xf32>
    %170 = vector.broadcast %149 : vector<1x32xf32> to vector<16x32xf32>
    %171 = arith.mulf %169, %170 : vector<16x32xf32>
    %172 = vector.broadcast %151 : vector<1x32xf32> to vector<16x32xf32>
    %173 = arith.addf %171, %172 : vector<16x32xf32>
    %c0_52 = arith.constant 0 : index
    %c0_53 = arith.constant 0 : index
    %c0_54 = arith.constant 0 : index
    %174 = vector.load %arg8[%c0_52, %c0_53, %c0_54] : memref<1x32x128xf32, #tpu.memory_space<vmem>>, vector<1x32x128xf32>
    %175 = vector.shape_cast %174 : vector<1x32x128xf32> to vector<32x128xf32>
    %cst_55 = arith.constant dense<0.000000e+00> : vector<16x128xf32>
    %176 = tpu.matmul %173, %175, %cst_55 {dimension_numbers = #tpu.dot_dimension_numbers<[1], [0], [0], [1], [0, 0, 1, 1], [], []>} : vector<16x32xf32>, vector<32x128xf32>, vector<16x128xf32> -> vector<16x128xf32>
    %c0_56 = arith.constant 0 : index
    %c0_57 = arith.constant 0 : index
    %c0_58 = arith.constant 0 : index
    %177 = vector.load %arg9[%c0_56, %c0_57, %c0_58] : memref<1x1x128xf32, #tpu.memory_space<vmem>>, vector<1x1x128xf32>
    %178 = vector.shape_cast %177 : vector<1x1x128xf32> to vector<1x128xf32>
    %179 = vector.broadcast %178 : vector<1x128xf32> to vector<16x128xf32>
    %180 = arith.addf %176, %179 : vector<16x128xf32>
    %cst_59 = arith.constant 0.000000e+00 : f32
    %181 = vector.broadcast %cst_59 : f32 to vector<16x128xf32>
    %182 = arith.maximumf %180, %181 : vector<16x128xf32>
    %c0_60 = arith.constant 0 : index
    %c0_61 = arith.constant 0 : index
    %c0_62 = arith.constant 0 : index
    %183 = vector.load %arg10[%c0_60, %c0_61, %c0_62] : memref<1x128x32xf32, #tpu.memory_space<vmem>>, vector<1x128x32xf32>
    %184 = vector.shape_cast %183 : vector<1x128x32xf32> to vector<128x32xf32>
    %cst_63 = arith.constant dense<0.000000e+00> : vector<16x32xf32>
    %185 = tpu.matmul %182, %184, %cst_63 {dimension_numbers = #tpu.dot_dimension_numbers<[1], [0], [0], [1], [0, 0, 1, 1], [], []>} : vector<16x128xf32>, vector<128x32xf32>, vector<16x32xf32> -> vector<16x32xf32>
    %186 = arith.addf %173, %185 : vector<16x32xf32>
    %c0_64 = arith.constant 0 : index
    %c0_65 = arith.constant 0 : index
    %c0_66 = arith.constant 0 : index
    %187 = vector.load %arg11[%c0_64, %c0_65, %c0_66] : memref<1x1x32xf32, #tpu.memory_space<vmem>>, vector<1x1x32xf32>
    %188 = vector.shape_cast %187 : vector<1x1x32xf32> to vector<1x32xf32>
    %189 = vector.broadcast %188 : vector<1x32xf32> to vector<16x32xf32>
    %190 = arith.addf %186, %189 : vector<16x32xf32>
    %c0_67 = arith.constant 0 : index
    %c0_68 = arith.constant 0 : index
    %c0_69 = arith.constant 0 : index
    %191 = vector.load %arg12[%c0_67, %c0_68, %c0_69] : memref<1x1x32xf32, #tpu.memory_space<vmem>>, vector<1x1x32xf32>
    %192 = vector.shape_cast %191 : vector<1x1x32xf32> to vector<1x32xf32>
    %c0_70 = arith.constant 0 : index
    %c0_71 = arith.constant 0 : index
    %c0_72 = arith.constant 0 : index
    %193 = vector.load %arg13[%c0_70, %c0_71, %c0_72] : memref<1x1x32xf32, #tpu.memory_space<vmem>>, vector<1x1x32xf32>
    %194 = vector.shape_cast %193 : vector<1x1x32xf32> to vector<1x32xf32>
    %cst_73 = arith.constant dense<0.000000e+00> : vector<32xf32>
    %195 = vector.multi_reduction <add>, %190, %cst_73 [0] : vector<16x32xf32> to vector<32xf32>
    %196 = vector.shape_cast %195 : vector<32xf32> to vector<1x32xf32>
    %cst_74 = arith.constant 1.600000e+01 : f32
    %197 = vector.broadcast %cst_74 : f32 to vector<1x32xf32>
    %198 = arith.divf %196, %197 : vector<1x32xf32>
    %199 = vector.broadcast %198 : vector<1x32xf32> to vector<16x32xf32>
    %200 = arith.subf %190, %199 : vector<16x32xf32>
    %201 = arith.mulf %200, %200 : vector<16x32xf32>
    %cst_75 = arith.constant dense<0.000000e+00> : vector<32xf32>
    %202 = vector.multi_reduction <add>, %201, %cst_75 [0] : vector<16x32xf32> to vector<32xf32>
    %203 = vector.shape_cast %202 : vector<32xf32> to vector<1x32xf32>
    %cst_76 = arith.constant 1.600000e+01 : f32
    %204 = vector.broadcast %cst_76 : f32 to vector<1x32xf32>
    %205 = arith.divf %203, %204 : vector<1x32xf32>
    %206 = vector.broadcast %198 : vector<1x32xf32> to vector<16x32xf32>
    %207 = arith.subf %190, %206 : vector<16x32xf32>
    %cst_77 = arith.constant 9.99999974E-6 : f32
    %208 = vector.broadcast %cst_77 : f32 to vector<1x32xf32>
    %209 = arith.addf %205, %208 : vector<1x32xf32>
    %210 = math.rsqrt %209 : vector<1x32xf32>
    %211 = vector.broadcast %210 : vector<1x32xf32> to vector<16x32xf32>
    %212 = arith.mulf %207, %211 : vector<16x32xf32>
    %213 = vector.broadcast %192 : vector<1x32xf32> to vector<16x32xf32>
    %214 = arith.mulf %212, %213 : vector<16x32xf32>
    %215 = vector.broadcast %194 : vector<1x32xf32> to vector<16x32xf32>
    %216 = arith.addf %214, %215 : vector<16x32xf32>
    %c0_78 = arith.constant 0 : index
    %c0_79 = arith.constant 0 : index
    %217 = vector.load %arg16[%c0_78, %c0_79] : memref<16x32xf32, #tpu.memory_space<vmem>>, vector<16x32xf32>
    tpu.vector_store %arg16[%c0_78, %c0_79], %216 {strides = array<i32>} : memref<16x32xf32, #tpu.memory_space<vmem>>, vector<16x32xf32>,
    %c1_i32 = arith.constant 1 : i32
    %218 = arith.cmpi eq, %arg0, %c1_i32 : i32
    %219 = arith.extui %218 : i1 to i32
    %c0_i32_80 = arith.constant 0 : i32
    %220 = arith.cmpi ne, %219, %c0_i32_80 : i32
    scf.if %220 {
      %c0_81 = arith.constant 0 : index
      %c0_82 = arith.constant 0 : index
      %221 = vector.load %arg14[%c0_81, %c0_82] : memref<16x32xf32, #tpu.memory_space<vmem>>, vector<16x32xf32>
      tpu.vector_store %arg14[%c0_81, %c0_82], %216 {strides = array<i32>} : memref<16x32xf32, #tpu.memory_space<vmem>>, vector<16x32xf32>,
      %222 = vector.extract_strided_slice %216 {offsets = [0, 0], sizes = [8, 32], strides = [1, 1]} : vector<16x32xf32> to vector<8x32xf32>
      %cst_83 = arith.constant dense<0.000000e+00> : vector<32xf32>
      %223 = vector.multi_reduction <add>, %222, %cst_83 [0] : vector<8x32xf32> to vector<32xf32>
      %224 = vector.shape_cast %223 : vector<32xf32> to vector<1x32xf32>
      %cst_84 = arith.constant 8.000000e+00 : f32
      %225 = vector.broadcast %cst_84 : f32 to vector<1x32xf32>
      %226 = arith.divf %224, %225 : vector<1x32xf32>
      %227 = vector.extract_strided_slice %216 {offsets = [8, 0], sizes = [8, 32], strides = [1, 1]} : vector<16x32xf32> to vector<8x32xf32>
      %cst_85 = arith.constant dense<0.000000e+00> : vector<32xf32>
      %228 = vector.multi_reduction <add>, %227, %cst_85 [0] : vector<8x32xf32> to vector<32xf32>
      %229 = vector.shape_cast %228 : vector<32xf32> to vector<1x32xf32>
      %cst_86 = arith.constant 8.000000e+00 : f32
      %230 = vector.broadcast %cst_86 : f32 to vector<1x32xf32>
      %231 = arith.divf %229, %230 : vector<1x32xf32>
      %232 = tpu.concatenate %226, %231 in 0 : vector<1x32xf32>, vector<1x32xf32> -> vector<2x32xf32>
      %c0_87 = arith.constant 0 : index
      %c0_88 = arith.constant 0 : index
      %233 = vector.load %arg15[%c0_87, %c0_88] : memref<2x32xf32, #tpu.memory_space<vmem>>, vector<2x32xf32>
      tpu.vector_store %arg15[%c0_87, %c0_88], %232 {strides = array<i32>} : memref<2x32xf32, #tpu.memory_space<vmem>>, vector<2x32xf32>,
    } else {
    }
    return
  }
  func.func @transform_0(%arg0: i32) -> (i32, i32) {
    %c0_i32 = arith.constant 0 : i32
    %c0_i32_0 = arith.constant 0 : i32
    %c0_i32_1 = arith.constant 0 : i32
    return %c0_i32, %c0_i32_0 : i32, i32
  }
  func.func @transform_1(%arg0: i32) -> (i32, i32) {
    %c0_i32 = arith.constant 0 : i32
    %c0_i32_0 = arith.constant 0 : i32
    %c0_i32_1 = arith.constant 0 : i32
    return %c0_i32, %c0_i32_0 : i32, i32
  }
  func.func @transform_2(%arg0: i32) -> (i32, i32) {
    %c0_i32 = arith.constant 0 : i32
    %c0_i32_0 = arith.constant 0 : i32
    %c0_i32_1 = arith.constant 0 : i32
    return %c0_i32, %c0_i32_0 : i32, i32
  }
  func.func @transform_3(%arg0: i32) -> (i32, i32, i32) {
    %c0_i32 = arith.constant 0 : i32
    %c0_i32_0 = arith.constant 0 : i32
    %c0_i32_1 = arith.constant 0 : i32
    return %arg0, %c0_i32, %c0_i32_0 : i32, i32, i32
  }
  func.func @transform_4(%arg0: i32) -> (i32, i32, i32) {
    %c0_i32 = arith.constant 0 : i32
    %c0_i32_0 = arith.constant 0 : i32
    %c0_i32_1 = arith.constant 0 : i32
    return %arg0, %c0_i32, %c0_i32_0 : i32, i32, i32
  }
  func.func @transform_5(%arg0: i32) -> (i32, i32, i32) {
    %c0_i32 = arith.constant 0 : i32
    %c0_i32_0 = arith.constant 0 : i32
    %c0_i32_1 = arith.constant 0 : i32
    return %arg0, %c0_i32, %c0_i32_0 : i32, i32, i32
  }
  func.func @transform_6(%arg0: i32) -> (i32, i32, i32) {
    %c0_i32 = arith.constant 0 : i32
    %c0_i32_0 = arith.constant 0 : i32
    %c0_i32_1 = arith.constant 0 : i32
    return %arg0, %c0_i32, %c0_i32_0 : i32, i32, i32
  }
  func.func @transform_7(%arg0: i32) -> (i32, i32, i32) {
    %c0_i32 = arith.constant 0 : i32
    %c0_i32_0 = arith.constant 0 : i32
    %c0_i32_1 = arith.constant 0 : i32
    return %arg0, %c0_i32, %c0_i32_0 : i32, i32, i32
  }
  func.func @transform_8(%arg0: i32) -> (i32, i32, i32) {
    %c0_i32 = arith.constant 0 : i32
    %c0_i32_0 = arith.constant 0 : i32
    %c0_i32_1 = arith.constant 0 : i32
    return %arg0, %c0_i32, %c0_i32_0 : i32, i32, i32
  }
  func.func @transform_9(%arg0: i32) -> (i32, i32, i32) {
    %c0_i32 = arith.constant 0 : i32
    %c0_i32_0 = arith.constant 0 : i32
    %c0_i32_1 = arith.constant 0 : i32
    return %arg0, %c0_i32, %c0_i32_0 : i32, i32, i32
  }
  func.func @transform_10(%arg0: i32) -> (i32, i32, i32) {
    %c0_i32 = arith.constant 0 : i32
    %c0_i32_0 = arith.constant 0 : i32
    %c0_i32_1 = arith.constant 0 : i32
    return %arg0, %c0_i32, %c0_i32_0 : i32, i32, i32
  }
  func.func @transform_11(%arg0: i32) -> (i32, i32, i32) {
    %c0_i32 = arith.constant 0 : i32
    %c0_i32_0 = arith.constant 0 : i32
    %c0_i32_1 = arith.constant 0 : i32
    return %arg0, %c0_i32, %c0_i32_0 : i32, i32, i32
  }
  func.func @transform_12(%arg0: i32) -> (i32, i32, i32) {
    %c0_i32 = arith.constant 0 : i32
    %c0_i32_0 = arith.constant 0 : i32
    %c0_i32_1 = arith.constant 0 : i32
    return %arg0, %c0_i32, %c0_i32_0 : i32, i32, i32
  }
  func.func @transform_13(%arg0: i32) -> (i32, i32) {
    %c0_i32 = arith.constant 0 : i32
    %c0_i32_0 = arith.constant 0 : i32
    %c0_i32_1 = arith.constant 0 : i32
    return %c0_i32, %c0_i32_0 : i32, i32
  }
  func.func @transform_14(%arg0: i32) -> (i32, i32) {
    %c0_i32 = arith.constant 0 : i32
    %c0_i32_0 = arith.constant 0 : i32
    %c0_i32_1 = arith.constant 0 : i32
    return %c0_i32, %c0_i32_0 : i32, i32
  }
}

</mosaic_0001>

<llo_original>
// kernel: tpu_custom_call.1
$region0: #{tpu_custom_call.1}
  #allocation0 [shape = 'u32[]', space=smem, size = 0x4, offset = 0x4, fixed_abs, tag = 'smem constant byte address 0x4 - core index']
  #allocation1 [shape = 'u32[144,128]{1,0:T(1,128)}', space=vmem, size = 0x12000, scoped, tag = 'internal scratch']
  #allocation2 [shape = 'f32[16,32]{1,0:T(8,128)}', space=vmem, size = 0x2000, scoped, tag = 'scratch operand']
  %s0 = inlined_call_operand.vmem [shape: f32[16,3], index: 0, kind: input, shape index: {}]
  %s1 = inlined_call_operand.vmem [shape: f32[3,32], index: 1, kind: input, shape index: {}]
  %s2 = inlined_call_operand.vmem [shape: f32[1,32], index: 2, kind: input, shape index: {}]
  %s3 = inlined_call_operand.vmem [shape: f32[2,32,96], index: 3, kind: input, shape index: {}]
  %s4 = inlined_call_operand.vmem [shape: f32[2,32,32], index: 4, kind: input, shape index: {}]
  %s5 = inlined_call_operand.vmem [shape: f32[2,1,32], index: 5, kind: input, shape index: {}]
  %s6 = inlined_call_operand.vmem [shape: f32[2,1,32], index: 6, kind: input, shape index: {}]
  %s7 = inlined_call_operand.vmem [shape: f32[2,32,128], index: 7, kind: input, shape index: {}]
  %s8 = inlined_call_operand.vmem [shape: f32[2,1,128], index: 8, kind: input, shape index: {}]
  %s9 = inlined_call_operand.vmem [shape: f32[2,128,32], index: 9, kind: input, shape index: {}]
  %s10 = inlined_call_operand.vmem [shape: f32[2,1,32], index: 10, kind: input, shape index: {}]
  %s11 = inlined_call_operand.vmem [shape: f32[2,1,32], index: 11, kind: input, shape index: {}]
  %s12 = inlined_call_operand.vmem [shape: f32[2,1,32], index: 12, kind: input, shape index: {}]
  %s13 = inlined_call_operand.hbm [shape: f32[16,32], index: 13, kind: output, shape index: {0}]
  %s14 = inlined_call_operand.hbm [shape: f32[2,32], index: 14, kind: output, shape index: {1}]
  %15 = xla_tuple %s13, %s14
  %s16 = sld [smem:[#allocation0]]
  $region101: #{tpu_custom_call.1} parent=0
    _
  %s18 = ssub.s32 1, %s16
  %s19 = scalar_select 0, %s18, %s16
  $region1: #{tpu_custom_call.1} parent=0
    #allocation3 [shape = 'u8[8192]{0}', space=vmem, size = 0x2000, scoped, tag = 'output window, operand 0, single buffered']
    #allocation4 [shape = 's32[2]{0}', space=sflag, size = 0x8, scoped, tag = 'scoped memory for tpu_custom_call.1']
    #allocation5 [shape = 'u8[1024]{0}', space=vmem, size = 0x400, scoped, tag = 'output window, operand 1, single buffered']
    #allocation6 [shape = 's32[1]{0}', space=sflag, size = 0x4, scoped, tag = 'scoped memory for tpu_custom_call.1']
    %20 = vsyncpa [#allocation4], 0
    %21 = vsyncpa [#allocation6], 0
    loop: start=0, step=1, limit=4
    $region2: #{tpu_custom_call.1} parent=1 // loop_pre_header
      _
    $region3: #{tpu_custom_call.1} parent=1 // loop_header
      %s23 = sphi 0, %s27
      %p24 = scmp.ge.s32.totalorder %s23, 4
      %s31 = sphi 0, %s31
      %s33 = sphi 0, %s31
      %s34 = sphi 0, %s33
      %s48 = sphi 0, %s34
      %s52 = sphi 0, %s52
      %s54 = sphi 0, %s52
      %s55 = sphi 0, %s54
      %s69 = sphi 0, %s55
      %s73 = sphi 0, %s73
      %s75 = sphi 0, %s73
      %s76 = sphi 0, %s75
      %s90 = sphi 0, %s76
      %s96 = sphi 0, %s98
      %s99 = sphi 0, %s96
      %s100 = sphi 0, %s99
      %s116 = sphi 0, %s100
      %s122 = sphi 0, %s124
      %s125 = sphi 0, %s122
      %s126 = sphi 0, %s125
      %s142 = sphi 0, %s126
      %s148 = sphi 0, %s150
      %s151 = sphi 0, %s148
      %s152 = sphi 0, %s151
      %s168 = sphi 0, %s152
      %s174 = sphi 0, %s176
      %s177 = sphi 0, %s174
      %s178 = sphi 0, %s177
      %s194 = sphi 0, %s178
      %s200 = sphi 0, %s202
      %s203 = sphi 0, %s200
      %s204 = sphi 0, %s203
      %s220 = sphi 0, %s204
      %s226 = sphi 0, %s228
      %s229 = sphi 0, %s226
      %s230 = sphi 0, %s229
      %s246 = sphi 0, %s230
      %s252 = sphi 0, %s254
      %s255 = sphi 0, %s252
      %s256 = sphi 0, %s255
      %s272 = sphi 0, %s256
      %s278 = sphi 0, %s280
      %s281 = sphi 0, %s278
      %s282 = sphi 0, %s281
      %s298 = sphi 0, %s282
      %s304 = sphi 0, %s306
      %s307 = sphi 0, %s304
      %s308 = sphi 0, %s307
      %s324 = sphi 0, %s308
      %s330 = sphi 0, %s332
      %s333 = sphi 0, %s330
      %s334 = sphi 0, %s333
      %s350 = sphi 0, %s334
      %s354 = sphi 0, %s354
      %s356 = sphi 0, %s354
      %s357 = sphi 0, %s356
      %s371 = sphi 0, %s357
      %s375 = sphi 0, %s375
      %s377 = sphi 0, %s375
      %s378 = sphi 0, %s377
      %s392 = sphi 0, %s378
    $region4: #{tpu_custom_call.1} parent=1 // loop_header_branch
      %26 = sbr.rel (%p24) target = $region8
    $region5: #{tpu_custom_call.1} parent=1 // loop_body
      %s28 = ssub.s32 %s23, 1
      %s29 = ssub.s32 %s23, 2
      %s30 = sadd.s32 %s23, 1
      %s32 = sadd.s32 %s31, 1
      %p35 = scmp.eq.s32.totalorder %s23, 1
      %p36 = scmp.ne.s32.totalorder %s31, %s33
      %p37 = scmp.eq.s32.totalorder %s23, 0
      %p38 = por %p36, %p37
      %p39 = scmp.ne.s32.totalorder %s31, %s33
      %p40 = scmp.eq.s32.totalorder %s28, 1
      %p41 = por %p39, %p40
      %p42 = scmp.ne.s32.totalorder %s33, %s34
      %p43 = scmp.eq.s32.totalorder %s28, 0
      %p44 = por %p42, %p43
      %p45 = scmp.ne.s32.totalorder %s33, %s34
      %p46 = scmp.eq.s32.totalorder %s29, 1
      %p47 = por %p45, %p46
      %p49 = scmp.ne.s32.totalorder %s34, %s48
      %p50 = scmp.eq.s32.totalorder %s29, 0
      %p51 = por %p49, %p50
      %s53 = sadd.s32 %s52, 1
      %p56 = scmp.eq.s32.totalorder %s23, 1
      %p57 = scmp.ne.s32.totalorder %s52, %s54
      %p58 = scmp.eq.s32.totalorder %s23, 0
      %p59 = por %p57, %p58
      %p60 = scmp.ne.s32.totalorder %s52, %s54
      %p61 = scmp.eq.s32.totalorder %s28, 1
      %p62 = por %p60, %p61
      %p63 = scmp.ne.s32.totalorder %s54, %s55
      %p64 = scmp.eq.s32.totalorder %s28, 0
      %p65 = por %p63, %p64
      %p66 = scmp.ne.s32.totalorder %s54, %s55
      %p67 = scmp.eq.s32.totalorder %s29, 1
      %p68 = por %p66, %p67
      %p70 = scmp.ne.s32.totalorder %s55, %s69
      %p71 = scmp.eq.s32.totalorder %s29, 0
      %p72 = por %p70, %p71
      %s74 = sadd.s32 %s73, 1
      %p77 = scmp.eq.s32.totalorder %s23, 1
      %p78 = scmp.ne.s32.totalorder %s73, %s75
      %p79 = scmp.eq.s32.totalorder %s23, 0
      %p80 = por %p78, %p79
      %p81 = scmp.ne.s32.totalorder %s73, %s75
      %p82 = scmp.eq.s32.totalorder %s28, 1
      %p83 = por %p81, %p82
      %p84 = scmp.ne.s32.totalorder %s75, %s76
      %p85 = scmp.eq.s32.totalorder %s28, 0
      %p86 = por %p84, %p85
      %p87 = scmp.ne.s32.totalorder %s75, %s76
      %p88 = scmp.eq.s32.totalorder %s29, 1
      %p89 = por %p87, %p88
      %p91 = scmp.ne.s32.totalorder %s76, %s90
      %p92 = scmp.eq.s32.totalorder %s29, 0
      %p93 = por %p91, %p92
      %s94 = ssub.s32 %s23, %s30
      %p95 = scmp.eq.s32.totalorder %s94, 0
      %s97 = sadd.s32 %s96, 1
      %s98 = scalar_select %p95, %s96, %s97
      %p101 = pneg %p95
      %p102 = scmp.eq.s32.totalorder %s23, 1
      %p103 = por %p101, %p102
      %p104 = scmp.ne.s32.totalorder %s96, %s99
      %p105 = scmp.eq.s32.totalorder %s23, 0
      %p106 = por %p104, %p105
      %p107 = scmp.ne.s32.totalorder %s96, %s99
      %p108 = scmp.eq.s32.totalorder %s28, 1
      %p109 = por %p107, %p108
      %p110 = scmp.ne.s32.totalorder %s99, %s100
      %p111 = scmp.eq.s32.totalorder %s28, 0
      %p112 = por %p110, %p111
      %p113 = scmp.ne.s32.totalorder %s99, %s100
      %p114 = scmp.eq.s32.totalorder %s29, 1
      %p115 = por %p113, %p114
      %p117 = scmp.ne.s32.totalorder %s100, %s116
      %p118 = scmp.eq.s32.totalorder %s29, 0
      %p119 = por %p117, %p118
      %s120 = ssub.s32 %s23, %s30
      %p121 = scmp.eq.s32.totalorder %s120, 0
      %s123 = sadd.s32 %s122, 1
      %s124 = scalar_select %p121, %s122, %s123
      %p127 = pneg %p121
      %p128 = scmp.eq.s32.totalorder %s23, 1
      %p129 = por %p127, %p128
      %p130 = scmp.ne.s32.totalorder %s122, %s125
      %p131 = scmp.eq.s32.totalorder %s23, 0
      %p132 = por %p130, %p131
      %p133 = scmp.ne.s32.totalorder %s122, %s125
      %p134 = scmp.eq.s32.totalorder %s28, 1
      %p135 = por %p133, %p134
      %p136 = scmp.ne.s32.totalorder %s125, %s126
      %p137 = scmp.eq.s32.totalorder %s28, 0
      %p138 = por %p136, %p137
      %p139 = scmp.ne.s32.totalorder %s125, %s126
      %p140 = scmp.eq.s32.totalorder %s29, 1
      %p141 = por %p139, %p140
      %p143 = scmp.ne.s32.totalorder %s126, %s142
      %p144 = scmp.eq.s32.totalorder %s29, 0
      %p145 = por %p143, %p144
      %s146 = ssub.s32 %s23, %s30
      %p147 = scmp.eq.s32.totalorder %s146, 0
      %s149 = sadd.s32 %s148, 1
      %s150 = scalar_select %p147, %s148, %s149
      %p153 = pneg %p147
      %p154 = scmp.eq.s32.totalorder %s23, 1
      %p155 = por %p153, %p154
      %p156 = scmp.ne.s32.totalorder %s148, %s151
      %p157 = scmp.eq.s32.totalorder %s23, 0
      %p158 = por %p156, %p157
      %p159 = scmp.ne.s32.totalorder %s148, %s151
      %p160 = scmp.eq.s32.totalorder %s28, 1
      %p161 = por %p159, %p160
      %p162 = scmp.ne.s32.totalorder %s151, %s152
      %p163 = scmp.eq.s32.totalorder %s28, 0
      %p164 = por %p162, %p163
      %p165 = scmp.ne.s32.totalorder %s151, %s152
      %p166 = scmp.eq.s32.totalorder %s29, 1
      %p167 = por %p165, %p166
      %p169 = scmp.ne.s32.totalorder %s152, %s168
      %p170 = scmp.eq.s32.totalorder %s29, 0
      %p171 = por %p169, %p170
      %s172 = ssub.s32 %s23, %s30
      %p173 = scmp.eq.s32.totalorder %s172, 0
      %s175 = sadd.s32 %s174, 1
      %s176 = scalar_select %p173, %s174, %s175
      %p179 = pneg %p173
      %p180 = scmp.eq.s32.totalorder %s23, 1
      %p181 = por %p179, %p180
      %p182 = scmp.ne.s32.totalorder %s174, %s177
      %p183 = scmp.eq.s32.totalorder %s23, 0
      %p184 = por %p182, %p183
      %p185 = scmp.ne.s32.totalorder %s174, %s177
      %p186 = scmp.eq.s32.totalorder %s28, 1
      %p187 = por %p185, %p186
      %p188 = scmp.ne.s32.totalorder %s177, %s178
      %p189 = scmp.eq.s32.totalorder %s28, 0
      %p190 = por %p188, %p189
      %p191 = scmp.ne.s32.totalorder %s177, %s178
      %p192 = scmp.eq.s32.totalorder %s29, 1
      %p193 = por %p191, %p192
      %p195 = scmp.ne.s32.totalorder %s178, %s194
      %p196 = scmp.eq.s32.totalorder %s29, 0
      %p197 = por %p195, %p196
      %s198 = ssub.s32 %s23, %s30
      %p199 = scmp.eq.s32.totalorder %s198, 0
      %s201 = sadd.s32 %s200, 1
      %s202 = scalar_select %p199, %s200, %s201
      %p205 = pneg %p199
      %p206 = scmp.eq.s32.totalorder %s23, 1
      %p207 = por %p205, %p206
      %p208 = scmp.ne.s32.totalorder %s200, %s203
      %p209 = scmp.eq.s32.totalorder %s23, 0
      %p210 = por %p208, %p209
      %p211 = scmp.ne.s32.totalorder %s200, %s203
      %p212 = scmp.eq.s32.totalorder %s28, 1
      %p213 = por %p211, %p212
      %p214 = scmp.ne.s32.totalorder %s203, %s204
      %p215 = scmp.eq.s32.totalorder %s28, 0
      %p216 = por %p214, %p215
      %p217 = scmp.ne.s32.totalorder %s203, %s204
      %p218 = scmp.eq.s32.totalorder %s29, 1
      %p219 = por %p217, %p218
      %p221 = scmp.ne.s32.totalorder %s204, %s220
      %p222 = scmp.eq.s32.totalorder %s29, 0
      %p223 = por %p221, %p222
      %s224 = ssub.s32 %s23, %s30
      %p225 = scmp.eq.s32.totalorder %s224, 0
      %s227 = sadd.s32 %s226, 1
      %s228 = scalar_select %p225, %s226, %s227
      %p231 = pneg %p225
      %p232 = scmp.eq.s32.totalorder %s23, 1
      %p233 = por %p231, %p232
      %p234 = scmp.ne.s32.totalorder %s226, %s229
      %p235 = scmp.eq.s32.totalorder %s23, 0
      %p236 = por %p234, %p235
      %p237 = scmp.ne.s32.totalorder %s226, %s229
      %p238 = scmp.eq.s32.totalorder %s28, 1
      %p239 = por %p237, %p238
      %p240 = scmp.ne.s32.totalorder %s229, %s230
      %p241 = scmp.eq.s32.totalorder %s28, 0
      %p242 = por %p240, %p241
      %p243 = scmp.ne.s32.totalorder %s229, %s230
      %p244 = scmp.eq.s32.totalorder %s29, 1
      %p245 = por %p243, %p244
      %p247 = scmp.ne.s32.totalorder %s230, %s246
      %p248 = scmp.eq.s32.totalorder %s29, 0
      %p249 = por %p247, %p248
      %s250 = ssub.s32 %s23, %s30
      %p251 = scmp.eq.s32.totalorder %s250, 0
      %s253 = sadd.s32 %s252, 1
      %s254 = scalar_select %p251, %s252, %s253
      %p257 = pneg %p251
      %p258 = scmp.eq.s32.totalorder %s23, 1
      %p259 = por %p257, %p258
      %p260 = scmp.ne.s32.totalorder %s252, %s255
      %p261 = scmp.eq.s32.totalorder %s23, 0
      %p262 = por %p260, %p261
      %p263 = scmp.ne.s32.totalorder %s252, %s255
      %p264 = scmp.eq.s32.totalorder %s28, 1
      %p265 = por %p263, %p264
      %p266 = scmp.ne.s32.totalorder %s255, %s256
      %p267 = scmp.eq.s32.totalorder %s28, 0
      %p268 = por %p266, %p267
      %p269 = scmp.ne.s32.totalorder %s255, %s256
      %p270 = scmp.eq.s32.totalorder %s29, 1
      %p271 = por %p269, %p270
      %p273 = scmp.ne.s32.totalorder %s256, %s272
      %p274 = scmp.eq.s32.totalorder %s29, 0
      %p275 = por %p273, %p274
      %s276 = ssub.s32 %s23, %s30
      %p277 = scmp.eq.s32.totalorder %s276, 0
      %s279 = sadd.s32 %s278, 1
      %s280 = scalar_select %p277, %s278, %s279
      %p283 = pneg %p277
      %p284 = scmp.eq.s32.totalorder %s23, 1
      %p285 = por %p283, %p284
      %p286 = scmp.ne.s32.totalorder %s278, %s281
      %p287 = scmp.eq.s32.totalorder %s23, 0
      %p288 = por %p286, %p287
      %p289 = scmp.ne.s32.totalorder %s278, %s281
      %p290 = scmp.eq.s32.totalorder %s28, 1
      %p291 = por %p289, %p290
      %p292 = scmp.ne.s32.totalorder %s281, %s282
      %p293 = scmp.eq.s32.totalorder %s28, 0
      %p294 = por %p292, %p293
      %p295 = scmp.ne.s32.totalorder %s281, %s282
      %p296 = scmp.eq.s32.totalorder %s29, 1
      %p297 = por %p295, %p296
      %p299 = scmp.ne.s32.totalorder %s282, %s298
      %p300 = scmp.eq.s32.totalorder %s29, 0
      %p301 = por %p299, %p300
      %s302 = ssub.s32 %s23, %s30
      %p303 = scmp.eq.s32.totalorder %s302, 0
      %s305 = sadd.s32 %s304, 1
      %s306 = scalar_select %p303, %s304, %s305
      %p309 = pneg %p303
      %p310 = scmp.eq.s32.totalorder %s23, 1
      %p311 = por %p309, %p310
      %p312 = scmp.ne.s32.totalorder %s304, %s307
      %p313 = scmp.eq.s32.totalorder %s23, 0
      %p314 = por %p312, %p313
      %p315 = scmp.ne.s32.totalorder %s304, %s307
      %p316 = scmp.eq.s32.totalorder %s28, 1
      %p317 = por %p315, %p316
      %p318 = scmp.ne.s32.totalorder %s307, %s308
      %p319 = scmp.eq.s32.totalorder %s28, 0
      %p320 = por %p318, %p319
      %p321 = scmp.ne.s32.totalorder %s307, %s308
      %p322 = scmp.eq.s32.totalorder %s29, 1
      %p323 = por %p321, %p322
      %p325 = scmp.ne.s32.totalorder %s308, %s324
      %p326 = scmp.eq.s32.totalorder %s29, 0
      %p327 = por %p325, %p326
      %s328 = ssub.s32 %s23, %s30
      %p329 = scmp.eq.s32.totalorder %s328, 0
      %s331 = sadd.s32 %s330, 1
      %s332 = scalar_select %p329, %s330, %s331
      %p335 = pneg %p329
      %p336 = scmp.eq.s32.totalorder %s23, 1
      %p337 = por %p335, %p336
      %p338 = scmp.ne.s32.totalorder %s330, %s333
      %p339 = scmp.eq.s32.totalorder %s23, 0
      %p340 = por %p338, %p339
      %p341 = scmp.ne.s32.totalorder %s330, %s333
      %p342 = scmp.eq.s32.totalorder %s28, 1
      %p343 = por %p341, %p342
      %p344 = scmp.ne.s32.totalorder %s333, %s334
      %p345 = scmp.eq.s32.totalorder %s28, 0
      %p346 = por %p344, %p345
      %p347 = scmp.ne.s32.totalorder %s333, %s334
      %p348 = scmp.eq.s32.totalorder %s29, 1
      %p349 = por %p347, %p348
      %p351 = scmp.ne.s32.totalorder %s334, %s350
      %p352 = scmp.eq.s32.totalorder %s29, 0
      %p353 = por %p351, %p352
      %s355 = sadd.s32 %s354, 1
      %p358 = scmp.eq.s32.totalorder %s23, 1
      %p359 = scmp.ne.s32.totalorder %s354, %s356
      %p360 = scmp.eq.s32.totalorder %s23, 0
      %p361 = por %p359, %p360
      %p362 = scmp.ne.s32.totalorder %s354, %s356
      %p363 = scmp.eq.s32.totalorder %s28, 1
      %p364 = por %p362, %p363
      %p365 = scmp.ne.s32.totalorder %s356, %s357
      %p366 = scmp.eq.s32.totalorder %s28, 0
      %p367 = por %p365, %p366
      %p368 = scmp.ne.s32.totalorder %s356, %s357
      %p369 = scmp.eq.s32.totalorder %s29, 1
      %p370 = por %p368, %p369
      %p372 = scmp.ne.s32.totalorder %s357, %s371
      %p373 = scmp.eq.s32.totalorder %s29, 0
      %p374 = por %p372, %p373
      %s376 = sadd.s32 %s375, 1
      %p379 = scmp.eq.s32.totalorder %s23, 1
      %p380 = scmp.ne.s32.totalorder %s375, %s377
      %p381 = scmp.eq.s32.totalorder %s23, 0
      %p382 = por %p380, %p381
      %p383 = scmp.ne.s32.totalorder %s375, %s377
      %p384 = scmp.eq.s32.totalorder %s28, 1
      %p385 = por %p383, %p384
      %p386 = scmp.ne.s32.totalorder %s377, %s378
      %p387 = scmp.eq.s32.totalorder %s28, 0
      %p388 = por %p386, %p387
      %p389 = scmp.ne.s32.totalorder %s377, %s378
      %p390 = scmp.eq.s32.totalorder %s29, 1
      %p391 = por %p389, %p390
      %p393 = scmp.ne.s32.totalorder %s378, %s392
      %p394 = scmp.eq.s32.totalorder %s29, 0
      %p395 = por %p393, %p394
      %p396 = scmp.le.s32.totalorder 1, %s23
      %p397 = scmp.lt.s32.totalorder %s23, 3
      %p398 = pnand %p396, %p397
      %p399 = pneg %p398
      // Predicated region
      $region9: #{tpu_custom_call.1} parent=5 // pred_check
        _
      $region10: #{tpu_custom_call.1} parent=5 // pred_check_branch
        %401 = sbr.rel (%p398) target = $region12
      $region11: #{tpu_custom_call.1} parent=5 // pred_region
        %s402 = ssub.s32 %s23, 1
        // Predicated region
        $region13: #{tpu_custom_call.1} parent=11 // pred_check
          %p403 = pneg %p44
        $region14: #{tpu_custom_call.1} parent=11 // pred_check_branch
          %405 = sbr.rel (%p403) target = $region16
        $region15: #{tpu_custom_call.1} parent=11 // pred_region
          _
        $region16: #{tpu_custom_call.1} parent=11 // pred_fallthru
          _
        // Predicated region
        $region17: #{tpu_custom_call.1} parent=11 // pred_check
          %p406 = pneg %p65
        $region18: #{tpu_custom_call.1} parent=11 // pred_check_branch
          %408 = sbr.rel (%p406) target = $region20
        $region19: #{tpu_custom_call.1} parent=11 // pred_region
          _
        $region20: #{tpu_custom_call.1} parent=11 // pred_fallthru
          _
        // Predicated region
        $region21: #{tpu_custom_call.1} parent=11 // pred_check
          %p409 = pneg %p86
        $region22: #{tpu_custom_call.1} parent=11 // pred_check_branch
          %411 = sbr.rel (%p409) target = $region24
        $region23: #{tpu_custom_call.1} parent=11 // pred_region
          _
        $region24: #{tpu_custom_call.1} parent=11 // pred_fallthru
          _
      $region12: #{tpu_custom_call.1} parent=5 // pred_fallthru
        _
      %p412 = scmp.lt.s32.totalorder %s23, 2
      // Predicated region
      $region25: #{tpu_custom_call.1} parent=5 // pred_check
        %p413 = pneg %p412
      $region26: #{tpu_custom_call.1} parent=5 // pred_check_branch
        %415 = sbr.rel (%p413) target = $region28
      $region27: #{tpu_custom_call.1} parent=5 // pred_region
        // Predicated region
        $region29: #{tpu_custom_call.1} parent=27 // pred_check
          %p416 = pneg %p106
        $region30: #{tpu_custom_call.1} parent=27 // pred_check_branch
          %418 = sbr.rel (%p416) target = $region32
        $region31: #{tpu_custom_call.1} parent=27 // pred_region
          %p419 = scmp.lt.s32.totalorder %s23, 1
          %s420 = scalar_select %p419, %s23, 1
          %s421 = smul.addr %s420, 4
          %s422 = smul.addr %s421, 8
          %s423 = scalar_lea.vmem %s3, %s422
        $region32: #{tpu_custom_call.1} parent=27 // pred_fallthru
          _
        // Predicated region
        $region33: #{tpu_custom_call.1} parent=27 // pred_check
          %p424 = pneg %p132
        $region34: #{tpu_custom_call.1} parent=27 // pred_check_branch
          %426 = sbr.rel (%p424) target = $region36
        $region35: #{tpu_custom_call.1} parent=27 // pred_region
          %p427 = scmp.lt.s32.totalorder %s23, 1
          %s428 = scalar_select %p427, %s23, 1
          %s429 = smul.addr %s428, 4
          %s430 = smul.addr %s429, 8
          %s431 = scalar_lea.vmem %s4, %s430
        $region36: #{tpu_custom_call.1} parent=27 // pred_fallthru
          _
        // Predicated region
        $region37: #{tpu_custom_call.1} parent=27 // pred_check
          %p432 = pneg %p158
        $region38: #{tpu_custom_call.1} parent=27 // pred_check_branch
          %434 = sbr.rel (%p432) target = $region40
        $region39: #{tpu_custom_call.1} parent=27 // pred_region
          %p435 = scmp.lt.s32.totalorder %s23, 1
          %s436 = scalar_select %p435, %s23, 1
          %s437 = scalar_lea.vmem %s5, %s436
        $region40: #{tpu_custom_call.1} parent=27 // pred_fallthru
          _
        // Predicated region
        $region41: #{tpu_custom_call.1} parent=27 // pred_check
          %p438 = pneg %p184
        $region42: #{tpu_custom_call.1} parent=27 // pred_check_branch
          %440 = sbr.rel (%p438) target = $region44
        $region43: #{tpu_custom_call.1} parent=27 // pred_region
          %p441 = scmp.lt.s32.totalorder %s23, 1
          %s442 = scalar_select %p441, %s23, 1
          %s443 = scalar_lea.vmem %s6, %s442
        $region44: #{tpu_custom_call.1} parent=27 // pred_fallthru
          _
        // Predicated region
        $region45: #{tpu_custom_call.1} parent=27 // pred_check
          %p444 = pneg %p210
        $region46: #{tpu_custom_call.1} parent=27 // pred_check_branch
          %446 = sbr.rel (%p444) target = $region48
        $region47: #{tpu_custom_call.1} parent=27 // pred_region
          %p447 = scmp.lt.s32.totalorder %s23, 1
          %s448 = scalar_select %p447, %s23, 1
          %s449 = smul.addr %s448, 4
          %s450 = smul.addr %s449, 8
          %s451 = scalar_lea.vmem %s7, %s450
        $region48: #{tpu_custom_call.1} parent=27 // pred_fallthru
          _
        // Predicated region
        $region49: #{tpu_custom_call.1} parent=27 // pred_check
          %p452 = pneg %p236
        $region50: #{tpu_custom_call.1} parent=27 // pred_check_branch
          %454 = sbr.rel (%p452) target = $region52
        $region51: #{tpu_custom_call.1} parent=27 // pred_region
          %p455 = scmp.lt.s32.totalorder %s23, 1
          %s456 = scalar_select %p455, %s23, 1
          %s457 = scalar_lea.vmem %s8, %s456
        $region52: #{tpu_custom_call.1} parent=27 // pred_fallthru
          _
        // Predicated region
        $region53: #{tpu_custom_call.1} parent=27 // pred_check
          %p458 = pneg %p262
        $region54: #{tpu_custom_call.1} parent=27 // pred_check_branch
          %460 = sbr.rel (%p458) target = $region56
        $region55: #{tpu_custom_call.1} parent=27 // pred_region
          %p461 = scmp.lt.s32.totalorder %s23, 1
          %s462 = scalar_select %p461, %s23, 1
          %s463 = smul.addr %s462, 16
          %s464 = smul.addr %s463, 8
          %s465 = scalar_lea.vmem %s9, %s464
        $region56: #{tpu_custom_call.1} parent=27 // pred_fallthru
          _
        // Predicated region
        $region57: #{tpu_custom_call.1} parent=27 // pred_check
          %p466 = pneg %p288
        $region58: #{tpu_custom_call.1} parent=27 // pred_check_branch
          %468 = sbr.rel (%p466) target = $region60
        $region59: #{tpu_custom_call.1} parent=27 // pred_region
          %p469 = scmp.lt.s32.totalorder %s23, 1
          %s470 = scalar_select %p469, %s23, 1
          %s471 = scalar_lea.vmem %s10, %s470
        $region60: #{tpu_custom_call.1} parent=27 // pred_fallthru
          _
        // Predicated region
        $region61: #{tpu_custom_call.1} parent=27 // pred_check
          %p472 = pneg %p314
        $region62: #{tpu_custom_call.1} parent=27 // pred_check_branch
          %474 = sbr.rel (%p472) target = $region64
        $region63: #{tpu_custom_call.1} parent=27 // pred_region
          %p475 = scmp.lt.s32.totalorder %s23, 1
          %s476 = scalar_select %p475, %s23, 1
          %s477 = scalar_lea.vmem %s11, %s476
        $region64: #{tpu_custom_call.1} parent=27 // pred_fallthru
          _
        // Predicated region
        $region65: #{tpu_custom_call.1} parent=27 // pred_check
          %p478 = pneg %p340
        $region66: #{tpu_custom_call.1} parent=27 // pred_check_branch
          %480 = sbr.rel (%p478) target = $region68
        $region67: #{tpu_custom_call.1} parent=27 // pred_region
          %p481 = scmp.lt.s32.totalorder %s23, 1
          %s482 = scalar_select %p481, %s23, 1
          %s483 = scalar_lea.vmem %s12, %s482
        $region68: #{tpu_custom_call.1} parent=27 // pred_fallthru
          _
      $region28: #{tpu_custom_call.1} parent=5 // pred_fallthru
        _
      %p484 = scmp.le.s32.totalorder 1, %s23
      %p485 = scmp.lt.s32.totalorder %s23, 3
      %p486 = pnand %p484, %p485
      %p487 = pneg %p486
      // Predicated region
      $region69: #{tpu_custom_call.1} parent=5 // pred_check
        _
      $region70: #{tpu_custom_call.1} parent=5 // pred_check_branch
        %489 = sbr.rel (%p486) target = $region72
      $region71: #{tpu_custom_call.1} parent=5 // pred_region
        %s490 = ssub.s32 %s23, 1
        %p491 = pneg %p44
        %p492 = pneg %p41
        %p493 = pneg %p65
        %p494 = pneg %p62
        %p495 = pneg %p86
        %p496 = pneg %p83
        %p497 = scmp.lt.s32.totalorder %s28, 1
        %s498 = scalar_select %p497, %s28, 1
        %s499 = smul.addr %s498, 4
        %s500 = smul.addr %s499, 8
        %s501 = scalar_lea.vmem %s3, %s500
        %p502 = pneg %p112
        %p503 = pneg %p109
        %p504 = scmp.lt.s32.totalorder %s28, 1
        %s505 = scalar_select %p504, %s28, 1
        %s506 = smul.addr %s505, 4
        %s507 = smul.addr %s506, 8
        %s508 = scalar_lea.vmem %s4, %s507
        %p509 = pneg %p138
        %p510 = pneg %p135
        %p511 = scmp.lt.s32.totalorder %s28, 1
        %s512 = scalar_select %p511, %s28, 1
        %s513 = scalar_lea.vmem %s5, %s512
        %p514 = pneg %p164
        %p515 = pneg %p161
        %p516 = scmp.lt.s32.totalorder %s28, 1
        %s517 = scalar_select %p516, %s28, 1
        %s518 = scalar_lea.vmem %s6, %s517
        %p519 = pneg %p190
        %p520 = pneg %p187
        %p521 = scmp.lt.s32.totalorder %s28, 1
        %s522 = scalar_select %p521, %s28, 1
        %s523 = smul.addr %s522, 4
        %s524 = smul.addr %s523, 8
        %s525 = scalar_lea.vmem %s7, %s524
        %p526 = pneg %p216
        %p527 = pneg %p213
        %p528 = scmp.lt.s32.totalorder %s28, 1
        %s529 = scalar_select %p528, %s28, 1
        %s530 = scalar_lea.vmem %s8, %s529
        %p531 = pneg %p242
        %p532 = pneg %p239
        %p533 = scmp.lt.s32.totalorder %s28, 1
        %s534 = scalar_select %p533, %s28, 1
        %s535 = smul.addr %s534, 16
        %s536 = smul.addr %s535, 8
        %s537 = scalar_lea.vmem %s9, %s536
        %p538 = pneg %p268
        %p539 = pneg %p265
        %p540 = scmp.lt.s32.totalorder %s28, 1
        %s541 = scalar_select %p540, %s28, 1
        %s542 = scalar_lea.vmem %s10, %s541
        %p543 = pneg %p294
        %p544 = pneg %p291
        %p545 = scmp.lt.s32.totalorder %s28, 1
        %s546 = scalar_select %p545, %s28, 1
        %s547 = scalar_lea.vmem %s11, %s546
        %p548 = pneg %p320
        %p549 = pneg %p317
        %p550 = scmp.lt.s32.totalorder %s28, 1
        %s551 = scalar_select %p550, %s28, 1
        %s552 = scalar_lea.vmem %s12, %s551
        %p553 = pneg %p346
        %p554 = pneg %p343
        %p555 = pneg %p367
        %p556 = pneg %p364
        %p557 = pneg %p388
        %p558 = pneg %p385
        %p559 = scmp.lt.s32.totalorder %s28, 1
        %s560 = scalar_select %p559, %s28, 1
        %s561 = smul.addr %s560, 4
        %s562 = smul.addr %s561, 8
        %s563 = scalar_lea.vmem %s3, %s562
        %p564 = scmp.lt.s32.totalorder %s28, 1
        %s565 = scalar_select %p564, %s28, 1
        %s566 = smul.addr %s565, 4
        %s567 = smul.addr %s566, 8
        %s568 = scalar_lea.vmem %s4, %s567
        %p569 = scmp.lt.s32.totalorder %s28, 1
        %s570 = scalar_select %p569, %s28, 1
        %s571 = scalar_lea.vmem %s5, %s570
        %p572 = scmp.lt.s32.totalorder %s28, 1
        %s573 = scalar_select %p572, %s28, 1
        %s574 = scalar_lea.vmem %s6, %s573
        %p575 = scmp.lt.s32.totalorder %s28, 1
        %s576 = scalar_select %p575, %s28, 1
        %s577 = smul.addr %s576, 4
        %s578 = smul.addr %s577, 8
        %s579 = scalar_lea.vmem %s7, %s578
        %p580 = scmp.lt.s32.totalorder %s28, 1
        %s581 = scalar_select %p580, %s28, 1
        %s582 = scalar_lea.vmem %s8, %s581
        %p583 = scmp.lt.s32.totalorder %s28, 1
        %s584 = scalar_select %p583, %s28, 1
        %s585 = smul.addr %s584, 16
        %s586 = smul.addr %s585, 8
        %s587 = scalar_lea.vmem %s9, %s586
        %p588 = scmp.lt.s32.totalorder %s28, 1
        %s589 = scalar_select %p588, %s28, 1
        %s590 = scalar_lea.vmem %s10, %s589
        %p591 = scmp.lt.s32.totalorder %s28, 1
        %s592 = scalar_select %p591, %s28, 1
        %s593 = scalar_lea.vmem %s11, %s592
        %p594 = scmp.lt.s32.totalorder %s28, 1
        %s595 = scalar_select %p594, %s28, 1
        %s596 = scalar_lea.vmem %s12, %s595
        %p597 = scmp.eq.s32.totalorder %s28, 0
        // Predicated region
        $region73: #{tpu_custom_call.1} parent=71 // pred_check
          %p598 = pneg %p597
        $region74: #{tpu_custom_call.1} parent=71 // pred_check_branch
          %600 = sbr.rel (%p598) target = $region76
        $region75: #{tpu_custom_call.1} parent=71 // pred_region
          %v601 = vld [vmem:[%s2] sm:$0x1]
          %v603 = vlaneseq
          %v604 = vshrl.u32 %v603, 7
          %v605 = vsub.s32 0, %v604
          %v606 = vrot.slane %v601, %v605
          %v608 = vld [vmem:[%s0] sm:$0xff]
          %v609 = vld [vmem:[%s0 + $0x8] sm:$0xff]
          %611 = vset.pattern.permute.xlu0 0
          %612 = vperm.xlu0 %611, %v608
          %v613 = vpop.permute.xlu0 %612
          %616 = vset.pattern.permute.xlu0 0
          %617 = vperm.xlu0 %616, %v609
          %v618 = vpop.permute.xlu0 %617
          %v620 = vld [vmem:[%s1] sm:$0x1]
          %v621 = vlaneseq
          %v622 = vshrl.u32 %v621, 7
          %v623 = vsub.s32 0, %v622
          %v624 = vrot.slane %v620, %v623
          %v625 = vmul.f32 %v613, %v624
          %v626 = vmul.f32 %v618, %v624
          %v627 = vadd.f32 %v606, %v625
          %v628 = vadd.f32 %v606, %v626
          %629 = vset.pattern.permute.xlu0 1
          %630 = vperm.xlu0 %629, %v608
          %v631 = vpop.permute.xlu0 %630
          %633 = vset.pattern.permute.xlu0 1
          %634 = vperm.xlu0 %633, %v609
          %v635 = vpop.permute.xlu0 %634
          %v637 = vld [vmem:[%s1 + $0x1] sm:$0x1]
          %v638 = vlaneseq
          %v639 = vshrl.u32 %v638, 7
          %v640 = vsub.s32 0, %v639
          %v641 = vrot.slane %v637, %v640
          %v642 = vmul.f32 %v631, %v641
          %v643 = vmul.f32 %v635, %v641
          %v644 = vadd.f32 %v627, %v642
          %v645 = vadd.f32 %v628, %v643
          %646 = vset.pattern.permute.xlu0 2
          %647 = vperm.xlu0 %646, %v608
          %v648 = vpop.permute.xlu0 %647
          %650 = vset.pattern.permute.xlu0 2
          %651 = vperm.xlu0 %650, %v609
          %v652 = vpop.permute.xlu0 %651
          %v654 = vld [vmem:[%s1 + $0x2] sm:$0x1]
          %v655 = vlaneseq
          %v656 = vshrl.u32 %v655, 7
          %v657 = vsub.s32 0, %v656
          %v658 = vrot.slane %v654, %v657
          %v659 = vmul.f32 %v648, %v658
          %v660 = vmul.f32 %v652, %v658
          %v661 = vadd.f32 %v644, %v659
          %v662 = vadd.f32 %v645, %v660
          %vm663 = vcmask 261120
          %664 = vst.msk [vmem:[#allocation2] sm:$0xff] %vm663, %v661
          %665 = vst.msk [vmem:[#allocation2 + $0x8] sm:$0xff] %vm663, %v662
        $region76: #{tpu_custom_call.1} parent=71 // pred_fallthru
          _
        %v666 = vld [vmem:[#allocation2] sm:$0xff]
        %v667 = vld [vmem:[#allocation2 + $0x8] sm:$0xff]
        %v668 = vld [vmem:[%s563] sm:$0xff]
        %v669 = vld [vmem:[%s563 + $0x8] sm:$0xff]
        %v670 = vld [vmem:[%s563 + $0x10] sm:$0xff]
        %v671 = vld [vmem:[%s563 + $0x18] sm:$0xff]
        %vm672 = vcmask 261120
        %v674 = vsel %vm672, %v666, 0
        %v677 = vsel %vm672, %v667, 0
        %679 = vmatprep.subr.mxu0 0.0
        %680 = vmatpush1.msra.mxu0 0.0
        %681 = vmatprep.subr.mxu0 0.0
        %682 = vmatpush1.msra.mxu0 0.0
        %683 = vmatprep.subr.mxu0 0.0
        %684 = vmatpush1.msra.mxu0 0.0
        %685 = vmatprep.subr.mxu0 0.0
        %686 = vmatpush1.msra.mxu0 0.0
        %687 = vmatprep.subr.mxu0 0.0
        %688 = vmatpush1.msra.mxu0 0.0
        %689 = vmatprep.subr.mxu0 0.0
        %690 = vmatpush1.msra.mxu0 0.0
        %691 = vmatprep.subr.mxu0 0.0
        %692 = vmatpush1.msra.mxu0 0.0
        %693 = vmatprep.subr.mxu0 0.0
        %694 = vmatpush1.msra.mxu0 0.0
        %695 = vmatprep.subr.mxu0 0.0
        %696 = vmatpush1.msra.mxu0 0.0
        %697 = vmatprep.subr.mxu0 0.0
        %698 = vmatpush1.msra.mxu0 0.0
        %699 = vmatprep.subr.mxu0 0.0
        %700 = vmatpush1.msra.mxu0 0.0
        %701 = vmatprep.subr.mxu0 0.0
        %702 = vmatpush1.msra.mxu0 0.0
        %703 = vmatprep.subr.mxu0 0.0
        %704 = vmatpush1.msra.mxu0 %v671
        %705 = vmatprep.subr.mxu0 0.0
        %706 = vmatpush1.msra.mxu0 %v670
        %707 = vmatprep.subr.mxu0 0.0
        %708 = vmatpush1.msra.mxu0 %v669
        %709 = vmatprep.subr.mxu0 0.0
        %710 = vmatpush1.msra.mxu0 %v668
        %711 = vmatprep.subr.mxu0 0.0
        %712 = vmatpush2.msra.mxu0 0.0
        %713 = vmatprep.subr.mxu0 0.0
        %714 = vmatpush2.msra.mxu0 0.0
        %715 = vmatprep.subr.mxu0 0.0
        %716 = vmatpush2.msra.mxu0 0.0
        %717 = vmatprep.subr.mxu0 0.0
        %718 = vmatpush2.msra.mxu0 0.0
        %719 = vmatprep.subr.mxu0 0.0
        %720 = vmatpush2.msra.mxu0 0.0
        %721 = vmatprep.subr.mxu0 0.0
        %722 = vmatpush2.msra.mxu0 0.0
        %723 = vmatprep.subr.mxu0 0.0
        %724 = vmatpush2.msra.mxu0 0.0
        %725 = vmatprep.subr.mxu0 0.0
        %726 = vmatpush2.msra.mxu0 0.0
        %727 = vmatprep.subr.mxu0 0.0
        %728 = vmatpush2.msra.mxu0 0.0
        %729 = vmatprep.subr.mxu0 0.0
        %730 = vmatpush2.msra.mxu0 0.0
        %731 = vmatprep.subr.mxu0 0.0
        %732 = vmatpush2.msra.mxu0 0.0
        %733 = vmatprep.subr.mxu0 0.0
        %734 = vmatpush2.msra.mxu0 0.0
        %735 = vmatprep.subr.mxu0 0.0
        %736 = vmatpush2.msra.mxu0 0.0
        %737 = vmatprep.subr.mxu0 0.0
        %738 = vmatpush2.msra.mxu0 0.0
        %739 = vmatprep.subr.mxu0 0.0
        %740 = vmatpush2.msra.mxu0 0.0
        %741 = vmatprep.subr.mxu0 0.0
        %742 = vmatpush2.msra.mxu0 0.0
        %743 = vmatprep.mubr.f32.mxu0 0.0
        %744 = vmatmul.mubr.f32.gmra.mxu0 %v674
        %v745 = vpop.f32.mrf.mxu0
        %v746 = vadd.f32 0.0, %v745
        %v747 = vpop.f32.mrf.mxu0
        %748 = vmatprep.mubr.f32.mxu0 0.0
        %749 = vmatmul.mubr.f32.gmra.mxu0 %v677
        %v750 = vpop.f32.mrf.mxu0
        %v751 = vadd.f32 0.0, %v750
        %v752 = vpop.f32.mrf.mxu0
        %753 = vdwg.mxu0
        %755 = vrot.lane.b32.xlu0 %v746, 96
        %v756 = vpop.permute.xlu0 %755
        %vm757 = vcmask 64512
        %v758 = vsel %vm757, %v746, 0
        %v760 = vsel %vm757, %v756, 0
        %762 = vmatprep.subr.mxu0 0.0
        %763 = vmatpush1.xpose.msra.mxu0 0.0
        %764 = vmatprep.subr.mxu0 0.0
        %765 = vmatpush1.xpose.msra.mxu0 0.0
        %766 = vmatprep.subr.mxu0 0.0
        %767 = vmatpush1.xpose.msra.mxu0 0.0
        %768 = vmatprep.subr.mxu0 0.0
        %769 = vmatpush1.xpose.msra.mxu0 0.0
        %770 = vmatprep.subr.mxu0 0.0
        %771 = vmatpush1.xpose.msra.mxu0 0.0
        %772 = vmatprep.subr.mxu0 0.0
        %773 = vmatpush1.xpose.msra.mxu0 0.0
        %774 = vmatprep.subr.mxu0 0.0
        %775 = vmatpush1.xpose.msra.mxu0 0.0
        %776 = vmatprep.subr.mxu0 0.0
        %777 = vmatpush1.xpose.msra.mxu0 0.0
        %778 = vmatprep.subr.mxu0 0.0
        %779 = vmatpush1.xpose.msra.mxu0 0.0
        %780 = vmatprep.subr.mxu0 0.0
        %781 = vmatpush1.xpose.msra.mxu0 0.0
        %782 = vmatprep.subr.mxu0 0.0
        %783 = vmatpush1.xpose.msra.mxu0 0.0
        %784 = vmatprep.subr.mxu0 0.0
        %785 = vmatpush1.xpose.msra.mxu0 0.0
        %786 = vmatprep.subr.mxu0 0.0
        %787 = vmatpush1.xpose.msra.mxu0 0.0
        %788 = vmatprep.subr.mxu0 0.0
        %789 = vmatpush1.xpose.msra.mxu0 0.0
        %790 = vmatprep.subr.mxu0 0.0
        %791 = vmatpush1.xpose.msra.mxu0 0.0
        %792 = vmatprep.subr.mxu0 0.0
        %793 = vmatpush1.xpose.msra.mxu0 %v760
        %794 = vmatprep.subr.mxu0 0.0
        %795 = vmatpush2.xpose.msra.mxu0 0.0
        %796 = vmatprep.subr.mxu0 0.0
        %797 = vmatpush2.xpose.msra.mxu0 0.0
        %798 = vmatprep.subr.mxu0 0.0
        %799 = vmatpush2.xpose.msra.mxu0 0.0
        %800 = vmatprep.subr.mxu0 0.0
        %801 = vmatpush2.xpose.msra.mxu0 0.0
        %802 = vmatprep.subr.mxu0 0.0
        %803 = vmatpush2.xpose.msra.mxu0 0.0
        %804 = vmatprep.subr.mxu0 0.0
        %805 = vmatpush2.xpose.msra.mxu0 0.0
        %806 = vmatprep.subr.mxu0 0.0
        %807 = vmatpush2.xpose.msra.mxu0 0.0
        %808 = vmatprep.subr.mxu0 0.0
        %809 = vmatpush2.xpose.msra.mxu0 0.0
        %810 = vmatprep.subr.mxu0 0.0
        %811 = vmatpush2.xpose.msra.mxu0 0.0
        %812 = vmatprep.subr.mxu0 0.0
        %813 = vmatpush2.xpose.msra.mxu0 0.0
        %814 = vmatprep.subr.mxu0 0.0
        %815 = vmatpush2.xpose.msra.mxu0 0.0
        %816 = vmatprep.subr.mxu0 0.0
        %817 = vmatpush2.xpose.msra.mxu0 0.0
        %818 = vmatprep.subr.mxu0 0.0
        %819 = vmatpush2.xpose.msra.mxu0 0.0
        %820 = vmatprep.subr.mxu0 0.0
        %821 = vmatpush2.xpose.msra.mxu0 0.0
        %822 = vmatprep.subr.mxu0 0.0
        %823 = vmatpush2.xpose.msra.mxu0 0.0
        %824 = vmatprep.subr.mxu0 0.0
        %825 = vmatpush2.xpose.msra.mxu0 0.0
        %826 = vmatprep.mubr.f32.mxu0 0.0
        %827 = vmatmul.mubr.f32.gmra.mxu0 %v758
        %v828 = vpop.f32.mrf.mxu0
        %v829 = vadd.f32 0.0, %v828
        %v830 = vpop.f32.mrf.mxu0
        %831 = vdwg.mxu0
        %v832 = vsel %vm757, %v829, -inf
        %833 = vmax.xlane.f32.xlu0 %v832
        %v834 = vpop.xlane.xlu0 %833
        %v835 = vsub.f32 %v829, %v834
        %v836 = vmul.f32 %v835, 1.442695
        %v837 = vpow.pop %v836
        %v838 = vsel %vm757, %v837, 0.0
        %839 = vadd.xlane.f32.xlu0 %v838
        %v840 = vpop.xlane.xlu0 %839
        %v841 = vrcp.pop %v840
        %v842 = vmul.f32 %v837, %v841
        %843 = vrot.lane.b32.xlu0 %v746, 64
        %v844 = vpop.permute.xlu0 %843
        %v847 = vsel %vm757, %v842, 0
        %849 = vmatprep.subr.mxu0 0.0
        %850 = vmatpush1.msra.mxu0 0.0
        %851 = vmatprep.subr.mxu0 0.0
        %852 = vmatpush1.msra.mxu0 0.0
        %853 = vmatprep.subr.mxu0 0.0
        %854 = vmatpush1.msra.mxu0 0.0
        %855 = vmatprep.subr.mxu0 0.0
        %856 = vmatpush1.msra.mxu0 0.0
        %857 = vmatprep.subr.mxu0 0.0
        %858 = vmatpush1.msra.mxu0 0.0
        %859 = vmatprep.subr.mxu0 0.0
        %860 = vmatpush1.msra.mxu0 0.0
        %861 = vmatprep.subr.mxu0 0.0
        %862 = vmatpush1.msra.mxu0 0.0
        %863 = vmatprep.subr.mxu0 0.0
        %864 = vmatpush1.msra.mxu0 0.0
        %865 = vmatprep.subr.mxu0 0.0
        %866 = vmatpush1.msra.mxu0 0.0
        %867 = vmatprep.subr.mxu0 0.0
        %868 = vmatpush1.msra.mxu0 0.0
        %869 = vmatprep.subr.mxu0 0.0
        %870 = vmatpush1.msra.mxu0 0.0
        %871 = vmatprep.subr.mxu0 0.0
        %872 = vmatpush1.msra.mxu0 0.0
        %873 = vmatprep.subr.mxu0 0.0
        %874 = vmatpush1.msra.mxu0 0.0
        %875 = vmatprep.subr.mxu0 0.0
        %876 = vmatpush1.msra.mxu0 0.0
        %877 = vmatprep.subr.mxu0 0.0
        %878 = vmatpush1.msra.mxu0 0.0
        %879 = vmatprep.subr.mxu0 0.0
        %880 = vmatpush1.msra.mxu0 %v844
        %881 = vmatprep.subr.mxu0 0.0
        %882 = vmatpush2.msra.mxu0 0.0
        %883 = vmatprep.subr.mxu0 0.0
        %884 = vmatpush2.msra.mxu0 0.0
        %885 = vmatprep.subr.mxu0 0.0
        %886 = vmatpush2.msra.mxu0 0.0
        %887 = vmatprep.subr.mxu0 0.0
        %888 = vmatpush2.msra.mxu0 0.0
        %889 = vmatprep.subr.mxu0 0.0
        %890 = vmatpush2.msra.mxu0 0.0
        %891 = vmatprep.subr.mxu0 0.0
        %892 = vmatpush2.msra.mxu0 0.0
        %893 = vmatprep.subr.mxu0 0.0
        %894 = vmatpush2.msra.mxu0 0.0
        %895 = vmatprep.subr.mxu0 0.0
        %896 = vmatpush2.msra.mxu0 0.0
        %897 = vmatprep.subr.mxu0 0.0
        %898 = vmatpush2.msra.mxu0 0.0
        %899 = vmatprep.subr.mxu0 0.0
        %900 = vmatpush2.msra.mxu0 0.0
        %901 = vmatprep.subr.mxu0 0.0
        %902 = vmatpush2.msra.mxu0 0.0
        %903 = vmatprep.subr.mxu0 0.0
        %904 = vmatpush2.msra.mxu0 0.0
        %905 = vmatprep.subr.mxu0 0.0
        %906 = vmatpush2.msra.mxu0 0.0
        %907 = vmatprep.subr.mxu0 0.0
        %908 = vmatpush2.msra.mxu0 0.0
        %909 = vmatprep.subr.mxu0 0.0
        %910 = vmatpush2.msra.mxu0 0.0
        %911 = vmatprep.subr.mxu0 0.0
        %912 = vmatpush2.msra.mxu0 0.0
        %913 = vmatprep.mubr.f32.mxu0 0.0
        %914 = vmatmul.mubr.f32.gmra.mxu0 %v847
        %v915 = vpop.f32.mrf.mxu0
        %v916 = vadd.f32 0.0, %v915
        %v917 = vpop.f32.mrf.mxu0
        %918 = vdwg.mxu0
        %919 = vrot.lane.b32.xlu0 %v746, 120
        %v920 = vpop.permute.xlu0 %919
        %921 = vrot.lane.b32.xlu0 %v746, 88
        %v922 = vpop.permute.xlu0 %921
        %v923 = vsel %vm757, %v920, 0
        %v925 = vsel %vm757, %v922, 0
        %927 = vmatprep.subr.mxu0 0.0
        %928 = vmatpush1.xpose.msra.mxu0 0.0
        %929 = vmatprep.subr.mxu0 0.0
        %930 = vmatpush1.xpose.msra.mxu0 0.0
        %931 = vmatprep.subr.mxu0 0.0
        %932 = vmatpush1.xpose.msra.mxu0 0.0
        %933 = vmatprep.subr.mxu0 0.0
        %934 = vmatpush1.xpose.msra.mxu0 0.0
        %935 = vmatprep.subr.mxu0 0.0
        %936 = vmatpush1.xpose.msra.mxu0 0.0
        %937 = vmatprep.subr.mxu0 0.0
        %938 = vmatpush1.xpose.msra.mxu0 0.0
        %939 = vmatprep.subr.mxu0 0.0
        %940 = vmatpush1.xpose.msra.mxu0 0.0
        %941 = vmatprep.subr.mxu0 0.0
        %942 = vmatpush1.xpose.msra.mxu0 0.0
        %943 = vmatprep.subr.mxu0 0.0
        %944 = vmatpush1.xpose.msra.mxu0 0.0
        %945 = vmatprep.subr.mxu0 0.0
        %946 = vmatpush1.xpose.msra.mxu0 0.0
        %947 = vmatprep.subr.mxu0 0.0
        %948 = vmatpush1.xpose.msra.mxu0 0.0
        %949 = vmatprep.subr.mxu0 0.0
        %950 = vmatpush1.xpose.msra.mxu0 0.0
        %951 = vmatprep.subr.mxu0 0.0
        %952 = vmatpush1.xpose.msra.mxu0 0.0
        %953 = vmatprep.subr.mxu0 0.0
        %954 = vmatpush1.xpose.msra.mxu0 0.0
        %955 = vmatprep.subr.mxu0 0.0
        %956 = vmatpush1.xpose.msra.mxu0 0.0
        %957 = vmatprep.subr.mxu0 0.0
        %958 = vmatpush1.xpose.msra.mxu0 %v925
        %959 = vmatprep.subr.mxu0 0.0
        %960 = vmatpush2.xpose.msra.mxu0 0.0
        %961 = vmatprep.subr.mxu0 0.0
        %962 = vmatpush2.xpose.msra.mxu0 0.0
        %963 = vmatprep.subr.mxu0 0.0
        %964 = vmatpush2.xpose.msra.mxu0 0.0
        %965 = vmatprep.subr.mxu0 0.0
        %966 = vmatpush2.xpose.msra.mxu0 0.0
        %967 = vmatprep.subr.mxu0 0.0
        %968 = vmatpush2.xpose.msra.mxu0 0.0
        %969 = vmatprep.subr.mxu0 0.0
        %970 = vmatpush2.xpose.msra.mxu0 0.0
        %971 = vmatprep.subr.mxu0 0.0
        %972 = vmatpush2.xpose.msra.mxu0 0.0
        %973 = vmatprep.subr.mxu0 0.0
        %974 = vmatpush2.xpose.msra.mxu0 0.0
        %975 = vmatprep.subr.mxu0 0.0
        %976 = vmatpush2.xpose.msra.mxu0 0.0
        %977 = vmatprep.subr.mxu0 0.0
        %978 = vmatpush2.xpose.msra.mxu0 0.0
        %979 = vmatprep.subr.mxu0 0.0
        %980 = vmatpush2.xpose.msra.mxu0 0.0
        %981 = vmatprep.subr.mxu0 0.0
        %982 = vmatpush2.xpose.msra.mxu0 0.0
        %983 = vmatprep.subr.mxu0 0.0
        %984 = vmatpush2.xpose.msra.mxu0 0.0
        %985 = vmatprep.subr.mxu0 0.0
        %986 = vmatpush2.xpose.msra.mxu0 0.0
        %987 = vmatprep.subr.mxu0 0.0
        %988 = vmatpush2.xpose.msra.mxu0 0.0
        %989 = vmatprep.subr.mxu0 0.0
        %990 = vmatpush2.xpose.msra.mxu0 0.0
        %991 = vmatprep.mubr.f32.mxu0 0.0
        %992 = vmatmul.mubr.f32.gmra.mxu0 %v923
        %v993 = vpop.f32.mrf.mxu0
        %v994 = vadd.f32 0.0, %v993
        %v995 = vpop.f32.mrf.mxu0
        %996 = vdwg.mxu0
        %v997 = vsel %vm757, %v994, -inf
        %998 = vmax.xlane.f32.xlu0 %v997
        %v999 = vpop.xlane.xlu0 %998
        %v1000 = vsub.f32 %v994, %v999
        %v1001 = vmul.f32 %v1000, 1.442695
        %v1002 = vpow.pop %v1001
        %v1003 = vsel %vm757, %v1002, 0.0
        %1004 = vadd.xlane.f32.xlu0 %v1003
        %v1005 = vpop.xlane.xlu0 %1004
        %v1006 = vrcp.pop %v1005
        %v1007 = vmul.f32 %v1002, %v1006
        %1008 = vrot.lane.b32.xlu0 %v746, 56
        %v1009 = vpop.permute.xlu0 %1008
        %v1012 = vsel %vm757, %v1007, 0
        %1014 = vmatprep.subr.mxu0 0.0
        %1015 = vmatpush1.msra.mxu0 0.0
        %1016 = vmatprep.subr.mxu0 0.0
        %1017 = vmatpush1.msra.mxu0 0.0
        %1018 = vmatprep.subr.mxu0 0.0
        %1019 = vmatpush1.msra.mxu0 0.0
        %1020 = vmatprep.subr.mxu0 0.0
        %1021 = vmatpush1.msra.mxu0 0.0
        %1022 = vmatprep.subr.mxu0 0.0
        %1023 = vmatpush1.msra.mxu0 0.0
        %1024 = vmatprep.subr.mxu0 0.0
        %1025 = vmatpush1.msra.mxu0 0.0
        %1026 = vmatprep.subr.mxu0 0.0
        %1027 = vmatpush1.msra.mxu0 0.0
        %1028 = vmatprep.subr.mxu0 0.0
        %1029 = vmatpush1.msra.mxu0 0.0
        %1030 = vmatprep.subr.mxu0 0.0
        %1031 = vmatpush1.msra.mxu0 0.0
        %1032 = vmatprep.subr.mxu0 0.0
        %1033 = vmatpush1.msra.mxu0 0.0
        %1034 = vmatprep.subr.mxu0 0.0
        %1035 = vmatpush1.msra.mxu0 0.0
        %1036 = vmatprep.subr.mxu0 0.0
        %1037 = vmatpush1.msra.mxu0 0.0
        %1038 = vmatprep.subr.mxu0 0.0
        %1039 = vmatpush1.msra.mxu0 0.0
        %1040 = vmatprep.subr.mxu0 0.0
        %1041 = vmatpush1.msra.mxu0 0.0
        %1042 = vmatprep.subr.mxu0 0.0
        %1043 = vmatpush1.msra.mxu0 0.0
        %1044 = vmatprep.subr.mxu0 0.0
        %1045 = vmatpush1.msra.mxu0 %v1009
        %1046 = vmatprep.subr.mxu0 0.0
        %1047 = vmatpush2.msra.mxu0 0.0
        %1048 = vmatprep.subr.mxu0 0.0
        %1049 = vmatpush2.msra.mxu0 0.0
        %1050 = vmatprep.subr.mxu0 0.0
        %1051 = vmatpush2.msra.mxu0 0.0
        %1052 = vmatprep.subr.mxu0 0.0
        %1053 = vmatpush2.msra.mxu0 0.0
        %1054 = vmatprep.subr.mxu0 0.0
        %1055 = vmatpush2.msra.mxu0 0.0
        %1056 = vmatprep.subr.mxu0 0.0
        %1057 = vmatpush2.msra.mxu0 0.0
        %1058 = vmatprep.subr.mxu0 0.0
        %1059 = vmatpush2.msra.mxu0 0.0
        %1060 = vmatprep.subr.mxu0 0.0
        %1061 = vmatpush2.msra.mxu0 0.0
        %1062 = vmatprep.subr.mxu0 0.0
        %1063 = vmatpush2.msra.mxu0 0.0
        %1064 = vmatprep.subr.mxu0 0.0
        %1065 = vmatpush2.msra.mxu0 0.0
        %1066 = vmatprep.subr.mxu0 0.0
        %1067 = vmatpush2.msra.mxu0 0.0
        %1068 = vmatprep.subr.mxu0 0.0
        %1069 = vmatpush2.msra.mxu0 0.0
        %1070 = vmatprep.subr.mxu0 0.0
        %1071 = vmatpush2.msra.mxu0 0.0
        %1072 = vmatprep.subr.mxu0 0.0
        %1073 = vmatpush2.msra.mxu0 0.0
        %1074 = vmatprep.subr.mxu0 0.0
        %1075 = vmatpush2.msra.mxu0 0.0
        %1076 = vmatprep.subr.mxu0 0.0
        %1077 = vmatpush2.msra.mxu0 0.0
        %1078 = vmatprep.mubr.f32.mxu0 0.0
        %1079 = vmatmul.mubr.f32.gmra.mxu0 %v1012
        %v1080 = vpop.f32.mrf.mxu0
        %v1081 = vadd.f32 0.0, %v1080
        %v1082 = vpop.f32.mrf.mxu0
        %1083 = vdwg.mxu0
        %1084 = vrot.lane.b32.xlu0 %v746, 112
        %v1085 = vpop.permute.xlu0 %1084
        %1086 = vrot.lane.b32.xlu0 %v746, 80
        %v1087 = vpop.permute.xlu0 %1086
        %v1088 = vsel %vm757, %v1085, 0
        %v1090 = vsel %vm757, %v1087, 0
        %1092 = vmatprep.subr.mxu0 0.0
        %1093 = vmatpush1.xpose.msra.mxu0 0.0
        %1094 = vmatprep.subr.mxu0 0.0
        %1095 = vmatpush1.xpose.msra.mxu0 0.0
        %1096 = vmatprep.subr.mxu0 0.0
        %1097 = vmatpush1.xpose.msra.mxu0 0.0
        %1098 = vmatprep.subr.mxu0 0.0
        %1099 = vmatpush1.xpose.msra.mxu0 0.0
        %1100 = vmatprep.subr.mxu0 0.0
        %1101 = vmatpush1.xpose.msra.mxu0 0.0
        %1102 = vmatprep.subr.mxu0 0.0
        %1103 = vmatpush1.xpose.msra.mxu0 0.0
        %1104 = vmatprep.subr.mxu0 0.0
        %1105 = vmatpush1.xpose.msra.mxu0 0.0
        %1106 = vmatprep.subr.mxu0 0.0
        %1107 = vmatpush1.xpose.msra.mxu0 0.0
        %1108 = vmatprep.subr.mxu0 0.0
        %1109 = vmatpush1.xpose.msra.mxu0 0.0
        %1110 = vmatprep.subr.mxu0 0.0
        %1111 = vmatpush1.xpose.msra.mxu0 0.0
        %1112 = vmatprep.subr.mxu0 0.0
        %1113 = vmatpush1.xpose.msra.mxu0 0.0
        %1114 = vmatprep.subr.mxu0 0.0
        %1115 = vmatpush1.xpose.msra.mxu0 0.0
        %1116 = vmatprep.subr.mxu0 0.0
        %1117 = vmatpush1.xpose.msra.mxu0 0.0
        %1118 = vmatprep.subr.mxu0 0.0
        %1119 = vmatpush1.xpose.msra.mxu0 0.0
        %1120 = vmatprep.subr.mxu0 0.0
        %1121 = vmatpush1.xpose.msra.mxu0 0.0
        %1122 = vmatprep.subr.mxu0 0.0
        %1123 = vmatpush1.xpose.msra.mxu0 %v1090
        %1124 = vmatprep.subr.mxu0 0.0
        %1125 = vmatpush2.xpose.msra.mxu0 0.0
        %1126 = vmatprep.subr.mxu0 0.0
        %1127 = vmatpush2.xpose.msra.mxu0 0.0
        %1128 = vmatprep.subr.mxu0 0.0
        %1129 = vmatpush2.xpose.msra.mxu0 0.0
        %1130 = vmatprep.subr.mxu0 0.0
        %1131 = vmatpush2.xpose.msra.mxu0 0.0
        %1132 = vmatprep.subr.mxu0 0.0
        %1133 = vmatpush2.xpose.msra.mxu0 0.0
        %1134 = vmatprep.subr.mxu0 0.0
        %1135 = vmatpush2.xpose.msra.mxu0 0.0
        %1136 = vmatprep.subr.mxu0 0.0
        %1137 = vmatpush2.xpose.msra.mxu0 0.0
        %1138 = vmatprep.subr.mxu0 0.0
        %1139 = vmatpush2.xpose.msra.mxu0 0.0
        %1140 = vmatprep.subr.mxu0 0.0
        %1141 = vmatpush2.xpose.msra.mxu0 0.0
        %1142 = vmatprep.subr.mxu0 0.0
        %1143 = vmatpush2.xpose.msra.mxu0 0.0
        %1144 = vmatprep.subr.mxu0 0.0
        %1145 = vmatpush2.xpose.msra.mxu0 0.0
        %1146 = vmatprep.subr.mxu0 0.0
        %1147 = vmatpush2.xpose.msra.mxu0 0.0
        %1148 = vmatprep.subr.mxu0 0.0
        %1149 = vmatpush2.xpose.msra.mxu0 0.0
        %1150 = vmatprep.subr.mxu0 0.0
        %1151 = vmatpush2.xpose.msra.mxu0 0.0
        %1152 = vmatprep.subr.mxu0 0.0
        %1153 = vmatpush2.xpose.msra.mxu0 0.0
        %1154 = vmatprep.subr.mxu0 0.0
        %1155 = vmatpush2.xpose.msra.mxu0 0.0
        %1156 = vmatprep.mubr.f32.mxu0 0.0
        %1157 = vmatmul.mubr.f32.gmra.mxu0 %v1088
        %v1158 = vpop.f32.mrf.mxu0
        %v1159 = vadd.f32 0.0, %v1158
        %v1160 = vpop.f32.mrf.mxu0
        %1161 = vdwg.mxu0
        %v1162 = vsel %vm757, %v1159, -inf
        %1163 = vmax.xlane.f32.xlu0 %v1162
        %v1164 = vpop.xlane.xlu0 %1163
        %v1165 = vsub.f32 %v1159, %v1164
        %v1166 = vmul.f32 %v1165, 1.442695
        %v1167 = vpow.pop %v1166
        %v1168 = vsel %vm757, %v1167, 0.0
        %1169 = vadd.xlane.f32.xlu0 %v1168
        %v1170 = vpop.xlane.xlu0 %1169
        %v1171 = vrcp.pop %v1170
        %v1172 = vmul.f32 %v1167, %v1171
        %1173 = vrot.lane.b32.xlu0 %v746, 48
        %v1174 = vpop.permute.xlu0 %1173
        %v1177 = vsel %vm757, %v1172, 0
        %1179 = vmatprep.subr.mxu0 0.0
        %1180 = vmatpush1.msra.mxu0 0.0
        %1181 = vmatprep.subr.mxu0 0.0
        %1182 = vmatpush1.msra.mxu0 0.0
        %1183 = vmatprep.subr.mxu0 0.0
        %1184 = vmatpush1.msra.mxu0 0.0
        %1185 = vmatprep.subr.mxu0 0.0
        %1186 = vmatpush1.msra.mxu0 0.0
        %1187 = vmatprep.subr.mxu0 0.0
        %1188 = vmatpush1.msra.mxu0 0.0
        %1189 = vmatprep.subr.mxu0 0.0
        %1190 = vmatpush1.msra.mxu0 0.0
        %1191 = vmatprep.subr.mxu0 0.0
        %1192 = vmatpush1.msra.mxu0 0.0
        %1193 = vmatprep.subr.mxu0 0.0
        %1194 = vmatpush1.msra.mxu0 0.0
        %1195 = vmatprep.subr.mxu0 0.0
        %1196 = vmatpush1.msra.mxu0 0.0
        %1197 = vmatprep.subr.mxu0 0.0
        %1198 = vmatpush1.msra.mxu0 0.0
        %1199 = vmatprep.subr.mxu0 0.0
        %1200 = vmatpush1.msra.mxu0 0.0
        %1201 = vmatprep.subr.mxu0 0.0
        %1202 = vmatpush1.msra.mxu0 0.0
        %1203 = vmatprep.subr.mxu0 0.0
        %1204 = vmatpush1.msra.mxu0 0.0
        %1205 = vmatprep.subr.mxu0 0.0
        %1206 = vmatpush1.msra.mxu0 0.0
        %1207 = vmatprep.subr.mxu0 0.0
        %1208 = vmatpush1.msra.mxu0 0.0
        %1209 = vmatprep.subr.mxu0 0.0
        %1210 = vmatpush1.msra.mxu0 %v1174
        %1211 = vmatprep.subr.mxu0 0.0
        %1212 = vmatpush2.msra.mxu0 0.0
        %1213 = vmatprep.subr.mxu0 0.0
        %1214 = vmatpush2.msra.mxu0 0.0
        %1215 = vmatprep.subr.mxu0 0.0
        %1216 = vmatpush2.msra.mxu0 0.0
        %1217 = vmatprep.subr.mxu0 0.0
        %1218 = vmatpush2.msra.mxu0 0.0
        %1219 = vmatprep.subr.mxu0 0.0
        %1220 = vmatpush2.msra.mxu0 0.0
        %1221 = vmatprep.subr.mxu0 0.0
        %1222 = vmatpush2.msra.mxu0 0.0
        %1223 = vmatprep.subr.mxu0 0.0
        %1224 = vmatpush2.msra.mxu0 0.0
        %1225 = vmatprep.subr.mxu0 0.0
        %1226 = vmatpush2.msra.mxu0 0.0
        %1227 = vmatprep.subr.mxu0 0.0
        %1228 = vmatpush2.msra.mxu0 0.0
        %1229 = vmatprep.subr.mxu0 0.0
        %1230 = vmatpush2.msra.mxu0 0.0
        %1231 = vmatprep.subr.mxu0 0.0
        %1232 = vmatpush2.msra.mxu0 0.0
        %1233 = vmatprep.subr.mxu0 0.0
        %1234 = vmatpush2.msra.mxu0 0.0
        %1235 = vmatprep.subr.mxu0 0.0
        %1236 = vmatpush2.msra.mxu0 0.0
        %1237 = vmatprep.subr.mxu0 0.0
        %1238 = vmatpush2.msra.mxu0 0.0
        %1239 = vmatprep.subr.mxu0 0.0
        %1240 = vmatpush2.msra.mxu0 0.0
        %1241 = vmatprep.subr.mxu0 0.0
        %1242 = vmatpush2.msra.mxu0 0.0
        %1243 = vmatprep.mubr.f32.mxu0 0.0
        %1244 = vmatmul.mubr.f32.gmra.mxu0 %v1177
        %v1245 = vpop.f32.mrf.mxu0
        %v1246 = vadd.f32 0.0, %v1245
        %v1247 = vpop.f32.mrf.mxu0
        %1248 = vdwg.mxu0
        %1249 = vrot.lane.b32.xlu0 %v746, 104
        %v1250 = vpop.permute.xlu0 %1249
        %1251 = vrot.lane.b32.xlu0 %v746, 72
        %v1252 = vpop.permute.xlu0 %1251
        %v1253 = vsel %vm757, %v1250, 0
        %v1255 = vsel %vm757, %v1252, 0
        %1257 = vmatprep.subr.mxu0 0.0
        %1258 = vmatpush1.xpose.msra.mxu0 0.0
        %1259 = vmatprep.subr.mxu0 0.0
        %1260 = vmatpush1.xpose.msra.mxu0 0.0
        %1261 = vmatprep.subr.mxu0 0.0
        %1262 = vmatpush1.xpose.msra.mxu0 0.0
        %1263 = vmatprep.subr.mxu0 0.0
        %1264 = vmatpush1.xpose.msra.mxu0 0.0
        %1265 = vmatprep.subr.mxu0 0.0
        %1266 = vmatpush1.xpose.msra.mxu0 0.0
        %1267 = vmatprep.subr.mxu0 0.0
        %1268 = vmatpush1.xpose.msra.mxu0 0.0
        %1269 = vmatprep.subr.mxu0 0.0
        %1270 = vmatpush1.xpose.msra.mxu0 0.0
        %1271 = vmatprep.subr.mxu0 0.0
        %1272 = vmatpush1.xpose.msra.mxu0 0.0
        %1273 = vmatprep.subr.mxu0 0.0
        %1274 = vmatpush1.xpose.msra.mxu0 0.0
        %1275 = vmatprep.subr.mxu0 0.0
        %1276 = vmatpush1.xpose.msra.mxu0 0.0
        %1277 = vmatprep.subr.mxu0 0.0
        %1278 = vmatpush1.xpose.msra.mxu0 0.0
        %1279 = vmatprep.subr.mxu0 0.0
        %1280 = vmatpush1.xpose.msra.mxu0 0.0
        %1281 = vmatprep.subr.mxu0 0.0
        %1282 = vmatpush1.xpose.msra.mxu0 0.0
        %1283 = vmatprep.subr.mxu0 0.0
        %1284 = vmatpush1.xpose.msra.mxu0 0.0
        %1285 = vmatprep.subr.mxu0 0.0
        %1286 = vmatpush1.xpose.msra.mxu0 0.0
        %1287 = vmatprep.subr.mxu0 0.0
        %1288 = vmatpush1.xpose.msra.mxu0 %v1255
        %1289 = vmatprep.subr.mxu0 0.0
        %1290 = vmatpush2.xpose.msra.mxu0 0.0
        %1291 = vmatprep.subr.mxu0 0.0
        %1292 = vmatpush2.xpose.msra.mxu0 0.0
        %1293 = vmatprep.subr.mxu0 0.0
        %1294 = vmatpush2.xpose.msra.mxu0 0.0
        %1295 = vmatprep.subr.mxu0 0.0
        %1296 = vmatpush2.xpose.msra.mxu0 0.0
        %1297 = vmatprep.subr.mxu0 0.0
        %1298 = vmatpush2.xpose.msra.mxu0 0.0
        %1299 = vmatprep.subr.mxu0 0.0
        %1300 = vmatpush2.xpose.msra.mxu0 0.0
        %1301 = vmatprep.subr.mxu0 0.0
        %1302 = vmatpush2.xpose.msra.mxu0 0.0
        %1303 = vmatprep.subr.mxu0 0.0
        %1304 = vmatpush2.xpose.msra.mxu0 0.0
        %1305 = vmatprep.subr.mxu0 0.0
        %1306 = vmatpush2.xpose.msra.mxu0 0.0
        %1307 = vmatprep.subr.mxu0 0.0
        %1308 = vmatpush2.xpose.msra.mxu0 0.0
        %1309 = vmatprep.subr.mxu0 0.0
        %1310 = vmatpush2.xpose.msra.mxu0 0.0
        %1311 = vmatprep.subr.mxu0 0.0
        %1312 = vmatpush2.xpose.msra.mxu0 0.0
        %1313 = vmatprep.subr.mxu0 0.0
        %1314 = vmatpush2.xpose.msra.mxu0 0.0
        %1315 = vmatprep.subr.mxu0 0.0
        %1316 = vmatpush2.xpose.msra.mxu0 0.0
        %1317 = vmatprep.subr.mxu0 0.0
        %1318 = vmatpush2.xpose.msra.mxu0 0.0
        %1319 = vmatprep.subr.mxu0 0.0
        %1320 = vmatpush2.xpose.msra.mxu0 0.0
        %1321 = vmatprep.mubr.f32.mxu0 0.0
        %1322 = vmatmul.mubr.f32.gmra.mxu0 %v1253
        %v1323 = vpop.f32.mrf.mxu0
        %v1324 = vadd.f32 0.0, %v1323
        %v1325 = vpop.f32.mrf.mxu0
        %1326 = vdwg.mxu0
        %v1327 = vsel %vm757, %v1324, -inf
        %1328 = vmax.xlane.f32.xlu0 %v1327
        %v1329 = vpop.xlane.xlu0 %1328
        %v1330 = vsub.f32 %v1324, %v1329
        %v1331 = vmul.f32 %v1330, 1.442695
        %v1332 = vpow.pop %v1331
        %v1333 = vsel %vm757, %v1332, 0.0
        %1334 = vadd.xlane.f32.xlu0 %v1333
        %v1335 = vpop.xlane.xlu0 %1334
        %v1336 = vrcp.pop %v1335
        %v1337 = vmul.f32 %v1332, %v1336
        %1338 = vrot.lane.b32.xlu0 %v746, 40
        %v1339 = vpop.permute.xlu0 %1338
        %v1342 = vsel %vm757, %v1337, 0
        %1344 = vmatprep.subr.mxu0 0.0
        %1345 = vmatpush1.msra.mxu0 0.0
        %1346 = vmatprep.subr.mxu0 0.0
        %1347 = vmatpush1.msra.mxu0 0.0
        %1348 = vmatprep.subr.mxu0 0.0
        %1349 = vmatpush1.msra.mxu0 0.0
        %1350 = vmatprep.subr.mxu0 0.0
        %1351 = vmatpush1.msra.mxu0 0.0
        %1352 = vmatprep.subr.mxu0 0.0
        %1353 = vmatpush1.msra.mxu0 0.0
        %1354 = vmatprep.subr.mxu0 0.0
        %1355 = vmatpush1.msra.mxu0 0.0
        %1356 = vmatprep.subr.mxu0 0.0
        %1357 = vmatpush1.msra.mxu0 0.0
        %1358 = vmatprep.subr.mxu0 0.0
        %1359 = vmatpush1.msra.mxu0 0.0
        %1360 = vmatprep.subr.mxu0 0.0
        %1361 = vmatpush1.msra.mxu0 0.0
        %1362 = vmatprep.subr.mxu0 0.0
        %1363 = vmatpush1.msra.mxu0 0.0
        %1364 = vmatprep.subr.mxu0 0.0
        %1365 = vmatpush1.msra.mxu0 0.0
        %1366 = vmatprep.subr.mxu0 0.0
        %1367 = vmatpush1.msra.mxu0 0.0
        %1368 = vmatprep.subr.mxu0 0.0
        %1369 = vmatpush1.msra.mxu0 0.0
        %1370 = vmatprep.subr.mxu0 0.0
        %1371 = vmatpush1.msra.mxu0 0.0
        %1372 = vmatprep.subr.mxu0 0.0
        %1373 = vmatpush1.msra.mxu0 0.0
        %1374 = vmatprep.subr.mxu0 0.0
        %1375 = vmatpush1.msra.mxu0 %v1339
        %1376 = vmatprep.subr.mxu0 0.0
        %1377 = vmatpush2.msra.mxu0 0.0
        %1378 = vmatprep.subr.mxu0 0.0
        %1379 = vmatpush2.msra.mxu0 0.0
        %1380 = vmatprep.subr.mxu0 0.0
        %1381 = vmatpush2.msra.mxu0 0.0
        %1382 = vmatprep.subr.mxu0 0.0
        %1383 = vmatpush2.msra.mxu0 0.0
        %1384 = vmatprep.subr.mxu0 0.0
        %1385 = vmatpush2.msra.mxu0 0.0
        %1386 = vmatprep.subr.mxu0 0.0
        %1387 = vmatpush2.msra.mxu0 0.0
        %1388 = vmatprep.subr.mxu0 0.0
        %1389 = vmatpush2.msra.mxu0 0.0
        %1390 = vmatprep.subr.mxu0 0.0
        %1391 = vmatpush2.msra.mxu0 0.0
        %1392 = vmatprep.subr.mxu0 0.0
        %1393 = vmatpush2.msra.mxu0 0.0
        %1394 = vmatprep.subr.mxu0 0.0
        %1395 = vmatpush2.msra.mxu0 0.0
        %1396 = vmatprep.subr.mxu0 0.0
        %1397 = vmatpush2.msra.mxu0 0.0
        %1398 = vmatprep.subr.mxu0 0.0
        %1399 = vmatpush2.msra.mxu0 0.0
        %1400 = vmatprep.subr.mxu0 0.0
        %1401 = vmatpush2.msra.mxu0 0.0
        %1402 = vmatprep.subr.mxu0 0.0
        %1403 = vmatpush2.msra.mxu0 0.0
        %1404 = vmatprep.subr.mxu0 0.0
        %1405 = vmatpush2.msra.mxu0 0.0
        %1406 = vmatprep.subr.mxu0 0.0
        %1407 = vmatpush2.msra.mxu0 0.0
        %1408 = vmatprep.mubr.f32.mxu0 0.0
        %1409 = vmatmul.mubr.f32.gmra.mxu0 %v1342
        %v1410 = vpop.f32.mrf.mxu0
        %v1411 = vadd.f32 0.0, %v1410
        %v1412 = vpop.f32.mrf.mxu0
        %1413 = vdwg.mxu0
        %1415 = vrot.lane.b32.xlu0 %v1081, 8
        %v1416 = vpop.permute.xlu0 %1415
        %1419 = vrot.lane.b32.xlu0 %v1246, 16
        %v1420 = vpop.permute.xlu0 %1419
        %1423 = vrot.lane.b32.xlu0 %v1411, 24
        %v1424 = vpop.permute.xlu0 %1423
        %v1426 = vsel %vm757, %v916, %v1416
        %vm1427 = vcmask 130048
        %v1428 = vsel %vm1427, %v1426, %v1420
        %vm1429 = vcmask 195584
        %v1430 = vsel %vm1429, %v1428, %v1424
        %1432 = vrot.lane.b32.xlu0 %v751, 96
        %v1433 = vpop.permute.xlu0 %1432
        %v1434 = vsel %vm757, %v751, 0
        %v1436 = vsel %vm757, %v1433, 0
        %1438 = vmatprep.subr.mxu0 0.0
        %1439 = vmatpush1.xpose.msra.mxu0 0.0
        %1440 = vmatprep.subr.mxu0 0.0
        %1441 = vmatpush1.xpose.msra.mxu0 0.0
        %1442 = vmatprep.subr.mxu0 0.0
        %1443 = vmatpush1.xpose.msra.mxu0 0.0
        %1444 = vmatprep.subr.mxu0 0.0
        %1445 = vmatpush1.xpose.msra.mxu0 0.0
        %1446 = vmatprep.subr.mxu0 0.0
        %1447 = vmatpush1.xpose.msra.mxu0 0.0
        %1448 = vmatprep.subr.mxu0 0.0
        %1449 = vmatpush1.xpose.msra.mxu0 0.0
        %1450 = vmatprep.subr.mxu0 0.0
        %1451 = vmatpush1.xpose.msra.mxu0 0.0
        %1452 = vmatprep.subr.mxu0 0.0
        %1453 = vmatpush1.xpose.msra.mxu0 0.0
        %1454 = vmatprep.subr.mxu0 0.0
        %1455 = vmatpush1.xpose.msra.mxu0 0.0
        %1456 = vmatprep.subr.mxu0 0.0
        %1457 = vmatpush1.xpose.msra.mxu0 0.0
        %1458 = vmatprep.subr.mxu0 0.0
        %1459 = vmatpush1.xpose.msra.mxu0 0.0
        %1460 = vmatprep.subr.mxu0 0.0
        %1461 = vmatpush1.xpose.msra.mxu0 0.0
        %1462 = vmatprep.subr.mxu0 0.0
        %1463 = vmatpush1.xpose.msra.mxu0 0.0
        %1464 = vmatprep.subr.mxu0 0.0
        %1465 = vmatpush1.xpose.msra.mxu0 0.0
        %1466 = vmatprep.subr.mxu0 0.0
        %1467 = vmatpush1.xpose.msra.mxu0 0.0
        %1468 = vmatprep.subr.mxu0 0.0
        %1469 = vmatpush1.xpose.msra.mxu0 %v1436
        %1470 = vmatprep.subr.mxu0 0.0
        %1471 = vmatpush2.xpose.msra.mxu0 0.0
        %1472 = vmatprep.subr.mxu0 0.0
        %1473 = vmatpush2.xpose.msra.mxu0 0.0
        %1474 = vmatprep.subr.mxu0 0.0
        %1475 = vmatpush2.xpose.msra.mxu0 0.0
        %1476 = vmatprep.subr.mxu0 0.0
        %1477 = vmatpush2.xpose.msra.mxu0 0.0
        %1478 = vmatprep.subr.mxu0 0.0
        %1479 = vmatpush2.xpose.msra.mxu0 0.0
        %1480 = vmatprep.subr.mxu0 0.0
        %1481 = vmatpush2.xpose.msra.mxu0 0.0
        %1482 = vmatprep.subr.mxu0 0.0
        %1483 = vmatpush2.xpose.msra.mxu0 0.0
        %1484 = vmatprep.subr.mxu0 0.0
        %1485 = vmatpush2.xpose.msra.mxu0 0.0
        %1486 = vmatprep.subr.mxu0 0.0
        %1487 = vmatpush2.xpose.msra.mxu0 0.0
        %1488 = vmatprep.subr.mxu0 0.0
        %1489 = vmatpush2.xpose.msra.mxu0 0.0
        %1490 = vmatprep.subr.mxu0 0.0
        %1491 = vmatpush2.xpose.msra.mxu0 0.0
        %1492 = vmatprep.subr.mxu0 0.0
        %1493 = vmatpush2.xpose.msra.mxu0 0.0
        %1494 = vmatprep.subr.mxu0 0.0
        %1495 = vmatpush2.xpose.msra.mxu0 0.0
        %1496 = vmatprep.subr.mxu0 0.0
        %1497 = vmatpush2.xpose.msra.mxu0 0.0
        %1498 = vmatprep.subr.mxu0 0.0
        %1499 = vmatpush2.xpose.msra.mxu0 0.0
        %1500 = vmatprep.subr.mxu0 0.0
        %1501 = vmatpush2.xpose.msra.mxu0 0.0
        %1502 = vmatprep.mubr.f32.mxu0 0.0
        %1503 = vmatmul.mubr.f32.gmra.mxu0 %v1434
        %v1504 = vpop.f32.mrf.mxu0
        %v1505 = vadd.f32 0.0, %v1504
        %v1506 = vpop.f32.mrf.mxu0
        %1507 = vdwg.mxu0
        %v1508 = vsel %vm757, %v1505, -inf
        %1509 = vmax.xlane.f32.xlu0 %v1508
        %v1510 = vpop.xlane.xlu0 %1509
        %v1511 = vsub.f32 %v1505, %v1510
        %v1512 = vmul.f32 %v1511, 1.442695
        %v1513 = vpow.pop %v1512
        %v1514 = vsel %vm757, %v1513, 0.0
        %1515 = vadd.xlane.f32.xlu0 %v1514
        %v1516 = vpop.xlane.xlu0 %1515
        %v1517 = vrcp.pop %v1516
        %v1518 = vmul.f32 %v1513, %v1517
        %1519 = vrot.lane.b32.xlu0 %v751, 64
        %v1520 = vpop.permute.xlu0 %1519
        %v1523 = vsel %vm757, %v1518, 0
        %1525 = vmatprep.subr.mxu0 0.0
        %1526 = vmatpush1.msra.mxu0 0.0
        %1527 = vmatprep.subr.mxu0 0.0
        %1528 = vmatpush1.msra.mxu0 0.0
        %1529 = vmatprep.subr.mxu0 0.0
        %1530 = vmatpush1.msra.mxu0 0.0
        %1531 = vmatprep.subr.mxu0 0.0
        %1532 = vmatpush1.msra.mxu0 0.0
        %1533 = vmatprep.subr.mxu0 0.0
        %1534 = vmatpush1.msra.mxu0 0.0
        %1535 = vmatprep.subr.mxu0 0.0
        %1536 = vmatpush1.msra.mxu0 0.0
        %1537 = vmatprep.subr.mxu0 0.0
        %1538 = vmatpush1.msra.mxu0 0.0
        %1539 = vmatprep.subr.mxu0 0.0
        %1540 = vmatpush1.msra.mxu0 0.0
        %1541 = vmatprep.subr.mxu0 0.0
        %1542 = vmatpush1.msra.mxu0 0.0
        %1543 = vmatprep.subr.mxu0 0.0
        %1544 = vmatpush1.msra.mxu0 0.0
        %1545 = vmatprep.subr.mxu0 0.0
        %1546 = vmatpush1.msra.mxu0 0.0
        %1547 = vmatprep.subr.mxu0 0.0
        %1548 = vmatpush1.msra.mxu0 0.0
        %1549 = vmatprep.subr.mxu0 0.0
        %1550 = vmatpush1.msra.mxu0 0.0
        %1551 = vmatprep.subr.mxu0 0.0
        %1552 = vmatpush1.msra.mxu0 0.0
        %1553 = vmatprep.subr.mxu0 0.0
        %1554 = vmatpush1.msra.mxu0 0.0
        %1555 = vmatprep.subr.mxu0 0.0
        %1556 = vmatpush1.msra.mxu0 %v1520
        %1557 = vmatprep.subr.mxu0 0.0
        %1558 = vmatpush2.msra.mxu0 0.0
        %1559 = vmatprep.subr.mxu0 0.0
        %1560 = vmatpush2.msra.mxu0 0.0
        %1561 = vmatprep.subr.mxu0 0.0
        %1562 = vmatpush2.msra.mxu0 0.0
        %1563 = vmatprep.subr.mxu0 0.0
        %1564 = vmatpush2.msra.mxu0 0.0
        %1565 = vmatprep.subr.mxu0 0.0
        %1566 = vmatpush2.msra.mxu0 0.0
        %1567 = vmatprep.subr.mxu0 0.0
        %1568 = vmatpush2.msra.mxu0 0.0
        %1569 = vmatprep.subr.mxu0 0.0
        %1570 = vmatpush2.msra.mxu0 0.0
        %1571 = vmatprep.subr.mxu0 0.0
        %1572 = vmatpush2.msra.mxu0 0.0
        %1573 = vmatprep.subr.mxu0 0.0
        %1574 = vmatpush2.msra.mxu0 0.0
        %1575 = vmatprep.subr.mxu0 0.0
        %1576 = vmatpush2.msra.mxu0 0.0
        %1577 = vmatprep.subr.mxu0 0.0
        %1578 = vmatpush2.msra.mxu0 0.0
        %1579 = vmatprep.subr.mxu0 0.0
        %1580 = vmatpush2.msra.mxu0 0.0
        %1581 = vmatprep.subr.mxu0 0.0
        %1582 = vmatpush2.msra.mxu0 0.0
        %1583 = vmatprep.subr.mxu0 0.0
        %1584 = vmatpush2.msra.mxu0 0.0
        %1585 = vmatprep.subr.mxu0 0.0
        %1586 = vmatpush2.msra.mxu0 0.0
        %1587 = vmatprep.subr.mxu0 0.0
        %1588 = vmatpush2.msra.mxu0 0.0
        %1589 = vmatprep.mubr.f32.mxu0 0.0
        %1590 = vmatmul.mubr.f32.gmra.mxu0 %v1523
        %v1591 = vpop.f32.mrf.mxu0
        %v1592 = vadd.f32 0.0, %v1591
        %v1593 = vpop.f32.mrf.mxu0
        %1594 = vdwg.mxu0
        %1595 = vrot.lane.b32.xlu0 %v751, 120
        %v1596 = vpop.permute.xlu0 %1595
        %1597 = vrot.lane.b32.xlu0 %v751, 88
        %v1598 = vpop.permute.xlu0 %1597
        %v1599 = vsel %vm757, %v1596, 0
        %v1601 = vsel %vm757, %v1598, 0
        %1603 = vmatprep.subr.mxu0 0.0
        %1604 = vmatpush1.xpose.msra.mxu0 0.0
        %1605 = vmatprep.subr.mxu0 0.0
        %1606 = vmatpush1.xpose.msra.mxu0 0.0
        %1607 = vmatprep.subr.mxu0 0.0
        %1608 = vmatpush1.xpose.msra.mxu0 0.0
        %1609 = vmatprep.subr.mxu0 0.0
        %1610 = vmatpush1.xpose.msra.mxu0 0.0
        %1611 = vmatprep.subr.mxu0 0.0
        %1612 = vmatpush1.xpose.msra.mxu0 0.0
        %1613 = vmatprep.subr.mxu0 0.0
        %1614 = vmatpush1.xpose.msra.mxu0 0.0
        %1615 = vmatprep.subr.mxu0 0.0
        %1616 = vmatpush1.xpose.msra.mxu0 0.0
        %1617 = vmatprep.subr.mxu0 0.0
        %1618 = vmatpush1.xpose.msra.mxu0 0.0
        %1619 = vmatprep.subr.mxu0 0.0
        %1620 = vmatpush1.xpose.msra.mxu0 0.0
        %1621 = vmatprep.subr.mxu0 0.0
        %1622 = vmatpush1.xpose.msra.mxu0 0.0
        %1623 = vmatprep.subr.mxu0 0.0
        %1624 = vmatpush1.xpose.msra.mxu0 0.0
        %1625 = vmatprep.subr.mxu0 0.0
        %1626 = vmatpush1.xpose.msra.mxu0 0.0
        %1627 = vmatprep.subr.mxu0 0.0
        %1628 = vmatpush1.xpose.msra.mxu0 0.0
        %1629 = vmatprep.subr.mxu0 0.0
        %1630 = vmatpush1.xpose.msra.mxu0 0.0
        %1631 = vmatprep.subr.mxu0 0.0
        %1632 = vmatpush1.xpose.msra.mxu0 0.0
        %1633 = vmatprep.subr.mxu0 0.0
        %1634 = vmatpush1.xpose.msra.mxu0 %v1601
        %1635 = vmatprep.subr.mxu0 0.0
        %1636 = vmatpush2.xpose.msra.mxu0 0.0
        %1637 = vmatprep.subr.mxu0 0.0
        %1638 = vmatpush2.xpose.msra.mxu0 0.0
        %1639 = vmatprep.subr.mxu0 0.0
        %1640 = vmatpush2.xpose.msra.mxu0 0.0
        %1641 = vmatprep.subr.mxu0 0.0
        %1642 = vmatpush2.xpose.msra.mxu0 0.0
        %1643 = vmatprep.subr.mxu0 0.0
        %1644 = vmatpush2.xpose.msra.mxu0 0.0
        %1645 = vmatprep.subr.mxu0 0.0
        %1646 = vmatpush2.xpose.msra.mxu0 0.0
        %1647 = vmatprep.subr.mxu0 0.0
        %1648 = vmatpush2.xpose.msra.mxu0 0.0
        %1649 = vmatprep.subr.mxu0 0.0
        %1650 = vmatpush2.xpose.msra.mxu0 0.0
        %1651 = vmatprep.subr.mxu0 0.0
        %1652 = vmatpush2.xpose.msra.mxu0 0.0
        %1653 = vmatprep.subr.mxu0 0.0
        %1654 = vmatpush2.xpose.msra.mxu0 0.0
        %1655 = vmatprep.subr.mxu0 0.0
        %1656 = vmatpush2.xpose.msra.mxu0 0.0
        %1657 = vmatprep.subr.mxu0 0.0
        %1658 = vmatpush2.xpose.msra.mxu0 0.0
        %1659 = vmatprep.subr.mxu0 0.0
        %1660 = vmatpush2.xpose.msra.mxu0 0.0
        %1661 = vmatprep.subr.mxu0 0.0
        %1662 = vmatpush2.xpose.msra.mxu0 0.0
        %1663 = vmatprep.subr.mxu0 0.0
        %1664 = vmatpush2.xpose.msra.mxu0 0.0
        %1665 = vmatprep.subr.mxu0 0.0
        %1666 = vmatpush2.xpose.msra.mxu0 0.0
        %1667 = vmatprep.mubr.f32.mxu0 0.0
        %1668 = vmatmul.mubr.f32.gmra.mxu0 %v1599
        %v1669 = vpop.f32.mrf.mxu0
        %v1670 = vadd.f32 0.0, %v1669
        %v1671 = vpop.f32.mrf.mxu0
        %1672 = vdwg.mxu0
        %v1673 = vsel %vm757, %v1670, -inf
        %1674 = vmax.xlane.f32.xlu0 %v1673
        %v1675 = vpop.xlane.xlu0 %1674
        %v1676 = vsub.f32 %v1670, %v1675
        %v1677 = vmul.f32 %v1676, 1.442695
        %v1678 = vpow.pop %v1677
        %v1679 = vsel %vm757, %v1678, 0.0
        %1680 = vadd.xlane.f32.xlu0 %v1679
        %v1681 = vpop.xlane.xlu0 %1680
        %v1682 = vrcp.pop %v1681
        %v1683 = vmul.f32 %v1678, %v1682
        %1684 = vrot.lane.b32.xlu0 %v751, 56
        %v1685 = vpop.permute.xlu0 %1684
        %v1688 = vsel %vm757, %v1683, 0
        %1690 = vmatprep.subr.mxu0 0.0
        %1691 = vmatpush1.msra.mxu0 0.0
        %1692 = vmatprep.subr.mxu0 0.0
        %1693 = vmatpush1.msra.mxu0 0.0
        %1694 = vmatprep.subr.mxu0 0.0
        %1695 = vmatpush1.msra.mxu0 0.0
        %1696 = vmatprep.subr.mxu0 0.0
        %1697 = vmatpush1.msra.mxu0 0.0
        %1698 = vmatprep.subr.mxu0 0.0
        %1699 = vmatpush1.msra.mxu0 0.0
        %1700 = vmatprep.subr.mxu0 0.0
        %1701 = vmatpush1.msra.mxu0 0.0
        %1702 = vmatprep.subr.mxu0 0.0
        %1703 = vmatpush1.msra.mxu0 0.0
        %1704 = vmatprep.subr.mxu0 0.0
        %1705 = vmatpush1.msra.mxu0 0.0
        %1706 = vmatprep.subr.mxu0 0.0
        %1707 = vmatpush1.msra.mxu0 0.0
        %1708 = vmatprep.subr.mxu0 0.0
        %1709 = vmatpush1.msra.mxu0 0.0
        %1710 = vmatprep.subr.mxu0 0.0
        %1711 = vmatpush1.msra.mxu0 0.0
        %1712 = vmatprep.subr.mxu0 0.0
        %1713 = vmatpush1.msra.mxu0 0.0
        %1714 = vmatprep.subr.mxu0 0.0
        %1715 = vmatpush1.msra.mxu0 0.0
        %1716 = vmatprep.subr.mxu0 0.0
        %1717 = vmatpush1.msra.mxu0 0.0
        %1718 = vmatprep.subr.mxu0 0.0
        %1719 = vmatpush1.msra.mxu0 0.0
        %1720 = vmatprep.subr.mxu0 0.0
        %1721 = vmatpush1.msra.mxu0 %v1685
        %1722 = vmatprep.subr.mxu0 0.0
        %1723 = vmatpush2.msra.mxu0 0.0
        %1724 = vmatprep.subr.mxu0 0.0
        %1725 = vmatpush2.msra.mxu0 0.0
        %1726 = vmatprep.subr.mxu0 0.0
        %1727 = vmatpush2.msra.mxu0 0.0
        %1728 = vmatprep.subr.mxu0 0.0
        %1729 = vmatpush2.msra.mxu0 0.0
        %1730 = vmatprep.subr.mxu0 0.0
        %1731 = vmatpush2.msra.mxu0 0.0
        %1732 = vmatprep.subr.mxu0 0.0
        %1733 = vmatpush2.msra.mxu0 0.0
        %1734 = vmatprep.subr.mxu0 0.0
        %1735 = vmatpush2.msra.mxu0 0.0
        %1736 = vmatprep.subr.mxu0 0.0
        %1737 = vmatpush2.msra.mxu0 0.0
        %1738 = vmatprep.subr.mxu0 0.0
        %1739 = vmatpush2.msra.mxu0 0.0
        %1740 = vmatprep.subr.mxu0 0.0
        %1741 = vmatpush2.msra.mxu0 0.0
        %1742 = vmatprep.subr.mxu0 0.0
        %1743 = vmatpush2.msra.mxu0 0.0
        %1744 = vmatprep.subr.mxu0 0.0
        %1745 = vmatpush2.msra.mxu0 0.0
        %1746 = vmatprep.subr.mxu0 0.0
        %1747 = vmatpush2.msra.mxu0 0.0
        %1748 = vmatprep.subr.mxu0 0.0
        %1749 = vmatpush2.msra.mxu0 0.0
        %1750 = vmatprep.subr.mxu0 0.0
        %1751 = vmatpush2.msra.mxu0 0.0
        %1752 = vmatprep.subr.mxu0 0.0
        %1753 = vmatpush2.msra.mxu0 0.0
        %1754 = vmatprep.mubr.f32.mxu0 0.0
        %1755 = vmatmul.mubr.f32.gmra.mxu0 %v1688
        %v1756 = vpop.f32.mrf.mxu0
        %v1757 = vadd.f32 0.0, %v1756
        %v1758 = vpop.f32.mrf.mxu0
        %1759 = vdwg.mxu0
        %1760 = vrot.lane.b32.xlu0 %v751, 112
        %v1761 = vpop.permute.xlu0 %1760
        %1762 = vrot.lane.b32.xlu0 %v751, 80
        %v1763 = vpop.permute.xlu0 %1762
        %v1764 = vsel %vm757, %v1761, 0
        %v1766 = vsel %vm757, %v1763, 0
        %1768 = vmatprep.subr.mxu0 0.0
        %1769 = vmatpush1.xpose.msra.mxu0 0.0
        %1770 = vmatprep.subr.mxu0 0.0
        %1771 = vmatpush1.xpose.msra.mxu0 0.0
        %1772 = vmatprep.subr.mxu0 0.0
        %1773 = vmatpush1.xpose.msra.mxu0 0.0
        %1774 = vmatprep.subr.mxu0 0.0
        %1775 = vmatpush1.xpose.msra.mxu0 0.0
        %1776 = vmatprep.subr.mxu0 0.0
        %1777 = vmatpush1.xpose.msra.mxu0 0.0
        %1778 = vmatprep.subr.mxu0 0.0
        %1779 = vmatpush1.xpose.msra.mxu0 0.0
        %1780 = vmatprep.subr.mxu0 0.0
        %1781 = vmatpush1.xpose.msra.mxu0 0.0
        %1782 = vmatprep.subr.mxu0 0.0
        %1783 = vmatpush1.xpose.msra.mxu0 0.0
        %1784 = vmatprep.subr.mxu0 0.0
        %1785 = vmatpush1.xpose.msra.mxu0 0.0
        %1786 = vmatprep.subr.mxu0 0.0
        %1787 = vmatpush1.xpose.msra.mxu0 0.0
        %1788 = vmatprep.subr.mxu0 0.0
        %1789 = vmatpush1.xpose.msra.mxu0 0.0
        %1790 = vmatprep.subr.mxu0 0.0
        %1791 = vmatpush1.xpose.msra.mxu0 0.0
        %1792 = vmatprep.subr.mxu0 0.0
        %1793 = vmatpush1.xpose.msra.mxu0 0.0
        %1794 = vmatprep.subr.mxu0 0.0
        %1795 = vmatpush1.xpose.msra.mxu0 0.0
        %1796 = vmatprep.subr.mxu0 0.0
        %1797 = vmatpush1.xpose.msra.mxu0 0.0
        %1798 = vmatprep.subr.mxu0 0.0
        %1799 = vmatpush1.xpose.msra.mxu0 %v1766
        %1800 = vmatprep.subr.mxu0 0.0
        %1801 = vmatpush2.xpose.msra.mxu0 0.0
        %1802 = vmatprep.subr.mxu0 0.0
        %1803 = vmatpush2.xpose.msra.mxu0 0.0
        %1804 = vmatprep.subr.mxu0 0.0
        %1805 = vmatpush2.xpose.msra.mxu0 0.0
        %1806 = vmatprep.subr.mxu0 0.0
        %1807 = vmatpush2.xpose.msra.mxu0 0.0
        %1808 = vmatprep.subr.mxu0 0.0
        %1809 = vmatpush2.xpose.msra.mxu0 0.0
        %1810 = vmatprep.subr.mxu0 0.0
        %1811 = vmatpush2.xpose.msra.mxu0 0.0
        %1812 = vmatprep.subr.mxu0 0.0
        %1813 = vmatpush2.xpose.msra.mxu0 0.0
        %1814 = vmatprep.subr.mxu0 0.0
        %1815 = vmatpush2.xpose.msra.mxu0 0.0
        %1816 = vmatprep.subr.mxu0 0.0
        %1817 = vmatpush2.xpose.msra.mxu0 0.0
        %1818 = vmatprep.subr.mxu0 0.0
        %1819 = vmatpush2.xpose.msra.mxu0 0.0
        %1820 = vmatprep.subr.mxu0 0.0
        %1821 = vmatpush2.xpose.msra.mxu0 0.0
        %1822 = vmatprep.subr.mxu0 0.0
        %1823 = vmatpush2.xpose.msra.mxu0 0.0
        %1824 = vmatprep.subr.mxu0 0.0
        %1825 = vmatpush2.xpose.msra.mxu0 0.0
        %1826 = vmatprep.subr.mxu0 0.0
        %1827 = vmatpush2.xpose.msra.mxu0 0.0
        %1828 = vmatprep.subr.mxu0 0.0
        %1829 = vmatpush2.xpose.msra.mxu0 0.0
        %1830 = vmatprep.subr.mxu0 0.0
        %1831 = vmatpush2.xpose.msra.mxu0 0.0
        %1832 = vmatprep.mubr.f32.mxu0 0.0
        %1833 = vmatmul.mubr.f32.gmra.mxu0 %v1764
        %v1834 = vpop.f32.mrf.mxu0
        %v1835 = vadd.f32 0.0, %v1834
        %v1836 = vpop.f32.mrf.mxu0
        %1837 = vdwg.mxu0
        %v1838 = vsel %vm757, %v1835, -inf
        %1839 = vmax.xlane.f32.xlu0 %v1838
        %v1840 = vpop.xlane.xlu0 %1839
        %v1841 = vsub.f32 %v1835, %v1840
        %v1842 = vmul.f32 %v1841, 1.442695
        %v1843 = vpow.pop %v1842
        %v1844 = vsel %vm757, %v1843, 0.0
        %1845 = vadd.xlane.f32.xlu0 %v1844
        %v1846 = vpop.xlane.xlu0 %1845
        %v1847 = vrcp.pop %v1846
        %v1848 = vmul.f32 %v1843, %v1847
        %1849 = vrot.lane.b32.xlu0 %v751, 48
        %v1850 = vpop.permute.xlu0 %1849
        %v1853 = vsel %vm757, %v1848, 0
        %1855 = vmatprep.subr.mxu0 0.0
        %1856 = vmatpush1.msra.mxu0 0.0
        %1857 = vmatprep.subr.mxu0 0.0
        %1858 = vmatpush1.msra.mxu0 0.0
        %1859 = vmatprep.subr.mxu0 0.0
        %1860 = vmatpush1.msra.mxu0 0.0
        %1861 = vmatprep.subr.mxu0 0.0
        %1862 = vmatpush1.msra.mxu0 0.0
        %1863 = vmatprep.subr.mxu0 0.0
        %1864 = vmatpush1.msra.mxu0 0.0
        %1865 = vmatprep.subr.mxu0 0.0
        %1866 = vmatpush1.msra.mxu0 0.0
        %1867 = vmatprep.subr.mxu0 0.0
        %1868 = vmatpush1.msra.mxu0 0.0
        %1869 = vmatprep.subr.mxu0 0.0
        %1870 = vmatpush1.msra.mxu0 0.0
        %1871 = vmatprep.subr.mxu0 0.0
        %1872 = vmatpush1.msra.mxu0 0.0
        %1873 = vmatprep.subr.mxu0 0.0
        %1874 = vmatpush1.msra.mxu0 0.0
        %1875 = vmatprep.subr.mxu0 0.0
        %1876 = vmatpush1.msra.mxu0 0.0
        %1877 = vmatprep.subr.mxu0 0.0
        %1878 = vmatpush1.msra.mxu0 0.0
        %1879 = vmatprep.subr.mxu0 0.0
        %1880 = vmatpush1.msra.mxu0 0.0
        %1881 = vmatprep.subr.mxu0 0.0
        %1882 = vmatpush1.msra.mxu0 0.0
        %1883 = vmatprep.subr.mxu0 0.0
        %1884 = vmatpush1.msra.mxu0 0.0
        %1885 = vmatprep.subr.mxu0 0.0
        %1886 = vmatpush1.msra.mxu0 %v1850
        %1887 = vmatprep.subr.mxu0 0.0
        %1888 = vmatpush2.msra.mxu0 0.0
        %1889 = vmatprep.subr.mxu0 0.0
        %1890 = vmatpush2.msra.mxu0 0.0
        %1891 = vmatprep.subr.mxu0 0.0
        %1892 = vmatpush2.msra.mxu0 0.0
        %1893 = vmatprep.subr.mxu0 0.0
        %1894 = vmatpush2.msra.mxu0 0.0
        %1895 = vmatprep.subr.mxu0 0.0
        %1896 = vmatpush2.msra.mxu0 0.0
        %1897 = vmatprep.subr.mxu0 0.0
        %1898 = vmatpush2.msra.mxu0 0.0
        %1899 = vmatprep.subr.mxu0 0.0
        %1900 = vmatpush2.msra.mxu0 0.0
        %1901 = vmatprep.subr.mxu0 0.0
        %1902 = vmatpush2.msra.mxu0 0.0
        %1903 = vmatprep.subr.mxu0 0.0
        %1904 = vmatpush2.msra.mxu0 0.0
        %1905 = vmatprep.subr.mxu0 0.0
        %1906 = vmatpush2.msra.mxu0 0.0
        %1907 = vmatprep.subr.mxu0 0.0
        %1908 = vmatpush2.msra.mxu0 0.0
        %1909 = vmatprep.subr.mxu0 0.0
        %1910 = vmatpush2.msra.mxu0 0.0
        %1911 = vmatprep.subr.mxu0 0.0
        %1912 = vmatpush2.msra.mxu0 0.0
        %1913 = vmatprep.subr.mxu0 0.0
        %1914 = vmatpush2.msra.mxu0 0.0
        %1915 = vmatprep.subr.mxu0 0.0
        %1916 = vmatpush2.msra.mxu0 0.0
        %1917 = vmatprep.subr.mxu0 0.0
        %1918 = vmatpush2.msra.mxu0 0.0
        %1919 = vmatprep.mubr.f32.mxu0 0.0
        %1920 = vmatmul.mubr.f32.gmra.mxu0 %v1853
        %v1921 = vpop.f32.mrf.mxu0
        %v1922 = vadd.f32 0.0, %v1921
        %v1923 = vpop.f32.mrf.mxu0
        %1924 = vdwg.mxu0
        %1925 = vrot.lane.b32.xlu0 %v751, 104
        %v1926 = vpop.permute.xlu0 %1925
        %1927 = vrot.lane.b32.xlu0 %v751, 72
        %v1928 = vpop.permute.xlu0 %1927
        %v1929 = vsel %vm757, %v1926, 0
        %v1931 = vsel %vm757, %v1928, 0
        %1933 = vmatprep.subr.mxu0 0.0
        %1934 = vmatpush1.xpose.msra.mxu0 0.0
        %1935 = vmatprep.subr.mxu0 0.0
        %1936 = vmatpush1.xpose.msra.mxu0 0.0
        %1937 = vmatprep.subr.mxu0 0.0
        %1938 = vmatpush1.xpose.msra.mxu0 0.0
        %1939 = vmatprep.subr.mxu0 0.0
        %1940 = vmatpush1.xpose.msra.mxu0 0.0
        %1941 = vmatprep.subr.mxu0 0.0
        %1942 = vmatpush1.xpose.msra.mxu0 0.0
        %1943 = vmatprep.subr.mxu0 0.0
        %1944 = vmatpush1.xpose.msra.mxu0 0.0
        %1945 = vmatprep.subr.mxu0 0.0
        %1946 = vmatpush1.xpose.msra.mxu0 0.0
        %1947 = vmatprep.subr.mxu0 0.0
        %1948 = vmatpush1.xpose.msra.mxu0 0.0
        %1949 = vmatprep.subr.mxu0 0.0
        %1950 = vmatpush1.xpose.msra.mxu0 0.0
        %1951 = vmatprep.subr.mxu0 0.0
        %1952 = vmatpush1.xpose.msra.mxu0 0.0
        %1953 = vmatprep.subr.mxu0 0.0
        %1954 = vmatpush1.xpose.msra.mxu0 0.0
        %1955 = vmatprep.subr.mxu0 0.0
        %1956 = vmatpush1.xpose.msra.mxu0 0.0
        %1957 = vmatprep.subr.mxu0 0.0
        %1958 = vmatpush1.xpose.msra.mxu0 0.0
        %1959 = vmatprep.subr.mxu0 0.0
        %1960 = vmatpush1.xpose.msra.mxu0 0.0
        %1961 = vmatprep.subr.mxu0 0.0
        %1962 = vmatpush1.xpose.msra.mxu0 0.0
        %1963 = vmatprep.subr.mxu0 0.0
        %1964 = vmatpush1.xpose.msra.mxu0 %v1931
        %1965 = vmatprep.subr.mxu0 0.0
        %1966 = vmatpush2.xpose.msra.mxu0 0.0
        %1967 = vmatprep.subr.mxu0 0.0
        %1968 = vmatpush2.xpose.msra.mxu0 0.0
        %1969 = vmatprep.subr.mxu0 0.0
        %1970 = vmatpush2.xpose.msra.mxu0 0.0
        %1971 = vmatprep.subr.mxu0 0.0
        %1972 = vmatpush2.xpose.msra.mxu0 0.0
        %1973 = vmatprep.subr.mxu0 0.0
        %1974 = vmatpush2.xpose.msra.mxu0 0.0
        %1975 = vmatprep.subr.mxu0 0.0
        %1976 = vmatpush2.xpose.msra.mxu0 0.0
        %1977 = vmatprep.subr.mxu0 0.0
        %1978 = vmatpush2.xpose.msra.mxu0 0.0
        %1979 = vmatprep.subr.mxu0 0.0
        %1980 = vmatpush2.xpose.msra.mxu0 0.0
        %1981 = vmatprep.subr.mxu0 0.0
        %1982 = vmatpush2.xpose.msra.mxu0 0.0
        %1983 = vmatprep.subr.mxu0 0.0
        %1984 = vmatpush2.xpose.msra.mxu0 0.0
        %1985 = vmatprep.subr.mxu0 0.0
        %1986 = vmatpush2.xpose.msra.mxu0 0.0
        %1987 = vmatprep.subr.mxu0 0.0
        %1988 = vmatpush2.xpose.msra.mxu0 0.0
        %1989 = vmatprep.subr.mxu0 0.0
        %1990 = vmatpush2.xpose.msra.mxu0 0.0
        %1991 = vmatprep.subr.mxu0 0.0
        %1992 = vmatpush2.xpose.msra.mxu0 0.0
        %1993 = vmatprep.subr.mxu0 0.0
        %1994 = vmatpush2.xpose.msra.mxu0 0.0
        %1995 = vmatprep.subr.mxu0 0.0
        %1996 = vmatpush2.xpose.msra.mxu0 0.0
        %1997 = vmatprep.mubr.f32.mxu0 0.0
        %1998 = vmatmul.mubr.f32.gmra.mxu0 %v1929
        %v1999 = vpop.f32.mrf.mxu0
        %v2000 = vadd.f32 0.0, %v1999
        %v2001 = vpop.f32.mrf.mxu0
        %2002 = vdwg.mxu0
        %v2003 = vsel %vm757, %v2000, -inf
        %2004 = vmax.xlane.f32.xlu0 %v2003
        %v2005 = vpop.xlane.xlu0 %2004
        %v2006 = vsub.f32 %v2000, %v2005
        %v2007 = vmul.f32 %v2006, 1.442695
        %v2008 = vpow.pop %v2007
        %v2009 = vsel %vm757, %v2008, 0.0
        %2010 = vadd.xlane.f32.xlu0 %v2009
        %v2011 = vpop.xlane.xlu0 %2010
        %v2012 = vrcp.pop %v2011
        %v2013 = vmul.f32 %v2008, %v2012
        %2014 = vrot.lane.b32.xlu0 %v751, 40
        %v2015 = vpop.permute.xlu0 %2014
        %v2018 = vsel %vm757, %v2013, 0
        %2020 = vmatprep.subr.mxu0 0.0
        %2021 = vmatpush1.msra.mxu0 0.0
        %2022 = vmatprep.subr.mxu0 0.0
        %2023 = vmatpush1.msra.mxu0 0.0
        %2024 = vmatprep.subr.mxu0 0.0
        %2025 = vmatpush1.msra.mxu0 0.0
        %2026 = vmatprep.subr.mxu0 0.0
        %2027 = vmatpush1.msra.mxu0 0.0
        %2028 = vmatprep.subr.mxu0 0.0
        %2029 = vmatpush1.msra.mxu0 0.0
        %2030 = vmatprep.subr.mxu0 0.0
        %2031 = vmatpush1.msra.mxu0 0.0
        %2032 = vmatprep.subr.mxu0 0.0
        %2033 = vmatpush1.msra.mxu0 0.0
        %2034 = vmatprep.subr.mxu0 0.0
        %2035 = vmatpush1.msra.mxu0 0.0
        %2036 = vmatprep.subr.mxu0 0.0
        %2037 = vmatpush1.msra.mxu0 0.0
        %2038 = vmatprep.subr.mxu0 0.0
        %2039 = vmatpush1.msra.mxu0 0.0
        %2040 = vmatprep.subr.mxu0 0.0
        %2041 = vmatpush1.msra.mxu0 0.0
        %2042 = vmatprep.subr.mxu0 0.0
        %2043 = vmatpush1.msra.mxu0 0.0
        %2044 = vmatprep.subr.mxu0 0.0
        %2045 = vmatpush1.msra.mxu0 0.0
        %2046 = vmatprep.subr.mxu0 0.0
        %2047 = vmatpush1.msra.mxu0 0.0
        %2048 = vmatprep.subr.mxu0 0.0
        %2049 = vmatpush1.msra.mxu0 0.0
        %2050 = vmatprep.subr.mxu0 0.0
        %2051 = vmatpush1.msra.mxu0 %v2015
        %2052 = vmatprep.subr.mxu0 0.0
        %2053 = vmatpush2.msra.mxu0 0.0
        %2054 = vmatprep.subr.mxu0 0.0
        %2055 = vmatpush2.msra.mxu0 0.0
        %2056 = vmatprep.subr.mxu0 0.0
        %2057 = vmatpush2.msra.mxu0 0.0
        %2058 = vmatprep.subr.mxu0 0.0
        %2059 = vmatpush2.msra.mxu0 0.0
        %2060 = vmatprep.subr.mxu0 0.0
        %2061 = vmatpush2.msra.mxu0 0.0
        %2062 = vmatprep.subr.mxu0 0.0
        %2063 = vmatpush2.msra.mxu0 0.0
        %2064 = vmatprep.subr.mxu0 0.0
        %2065 = vmatpush2.msra.mxu0 0.0
        %2066 = vmatprep.subr.mxu0 0.0
        %2067 = vmatpush2.msra.mxu0 0.0
        %2068 = vmatprep.subr.mxu0 0.0
        %2069 = vmatpush2.msra.mxu0 0.0
        %2070 = vmatprep.subr.mxu0 0.0
        %2071 = vmatpush2.msra.mxu0 0.0
        %2072 = vmatprep.subr.mxu0 0.0
        %2073 = vmatpush2.msra.mxu0 0.0
        %2074 = vmatprep.subr.mxu0 0.0
        %2075 = vmatpush2.msra.mxu0 0.0
        %2076 = vmatprep.subr.mxu0 0.0
        %2077 = vmatpush2.msra.mxu0 0.0
        %2078 = vmatprep.subr.mxu0 0.0
        %2079 = vmatpush2.msra.mxu0 0.0
        %2080 = vmatprep.subr.mxu0 0.0
        %2081 = vmatpush2.msra.mxu0 0.0
        %2082 = vmatprep.subr.mxu0 0.0
        %2083 = vmatpush2.msra.mxu0 0.0
        %2084 = vmatprep.mubr.f32.mxu0 0.0
        %2085 = vmatmul.mubr.f32.gmra.mxu0 %v2018
        %v2086 = vpop.f32.mrf.mxu0
        %v2087 = vadd.f32 0.0, %v2086
        %v2088 = vpop.f32.mrf.mxu0
        %2089 = vdwg.mxu0
        %2091 = vrot.lane.b32.xlu0 %v1757, 8
        %v2092 = vpop.permute.xlu0 %2091
        %2095 = vrot.lane.b32.xlu0 %v1922, 16
        %v2096 = vpop.permute.xlu0 %2095
        %2099 = vrot.lane.b32.xlu0 %v2087, 24
        %v2100 = vpop.permute.xlu0 %2099
        %v2102 = vsel %vm757, %v1592, %v2092
        %v2103 = vsel %vm1427, %v2102, %v2096
        %v2104 = vsel %vm1429, %v2103, %v2100
        %v2105 = vld [vmem:[%s568] sm:$0xff]
        %v2106 = vld [vmem:[%s568 + $0x8] sm:$0xff]
        %v2107 = vld [vmem:[%s568 + $0x10] sm:$0xff]
        %v2108 = vld [vmem:[%s568 + $0x18] sm:$0xff]
        %v2110 = vsel %vm672, %v1430, 0
        %v2113 = vsel %vm672, %v2104, 0
        %2115 = vmatprep.subr.mxu0 0.0
        %2116 = vmatpush1.msra.mxu0 0.0
        %2117 = vmatprep.subr.mxu0 0.0
        %2118 = vmatpush1.msra.mxu0 0.0
        %2119 = vmatprep.subr.mxu0 0.0
        %2120 = vmatpush1.msra.mxu0 0.0
        %2121 = vmatprep.subr.mxu0 0.0
        %2122 = vmatpush1.msra.mxu0 0.0
        %2123 = vmatprep.subr.mxu0 0.0
        %2124 = vmatpush1.msra.mxu0 0.0
        %2125 = vmatprep.subr.mxu0 0.0
        %2126 = vmatpush1.msra.mxu0 0.0
        %2127 = vmatprep.subr.mxu0 0.0
        %2128 = vmatpush1.msra.mxu0 0.0
        %2129 = vmatprep.subr.mxu0 0.0
        %2130 = vmatpush1.msra.mxu0 0.0
        %2131 = vmatprep.subr.mxu0 0.0
        %2132 = vmatpush1.msra.mxu0 0.0
        %2133 = vmatprep.subr.mxu0 0.0
        %2134 = vmatpush1.msra.mxu0 0.0
        %2135 = vmatprep.subr.mxu0 0.0
        %2136 = vmatpush1.msra.mxu0 0.0
        %2137 = vmatprep.subr.mxu0 0.0
        %2138 = vmatpush1.msra.mxu0 0.0
        %2139 = vmatprep.subr.mxu0 0.0
        %2140 = vmatpush1.msra.mxu0 %v2108
        %2141 = vmatprep.subr.mxu0 0.0
        %2142 = vmatpush1.msra.mxu0 %v2107
        %2143 = vmatprep.subr.mxu0 0.0
        %2144 = vmatpush1.msra.mxu0 %v2106
        %2145 = vmatprep.subr.mxu0 0.0
        %2146 = vmatpush1.msra.mxu0 %v2105
        %2147 = vmatprep.subr.mxu0 0.0
        %2148 = vmatpush2.msra.mxu0 0.0
        %2149 = vmatprep.subr.mxu0 0.0
        %2150 = vmatpush2.msra.mxu0 0.0
        %2151 = vmatprep.subr.mxu0 0.0
        %2152 = vmatpush2.msra.mxu0 0.0
        %2153 = vmatprep.subr.mxu0 0.0
        %2154 = vmatpush2.msra.mxu0 0.0
        %2155 = vmatprep.subr.mxu0 0.0
        %2156 = vmatpush2.msra.mxu0 0.0
        %2157 = vmatprep.subr.mxu0 0.0
        %2158 = vmatpush2.msra.mxu0 0.0
        %2159 = vmatprep.subr.mxu0 0.0
        %2160 = vmatpush2.msra.mxu0 0.0
        %2161 = vmatprep.subr.mxu0 0.0
        %2162 = vmatpush2.msra.mxu0 0.0
        %2163 = vmatprep.subr.mxu0 0.0
        %2164 = vmatpush2.msra.mxu0 0.0
        %2165 = vmatprep.subr.mxu0 0.0
        %2166 = vmatpush2.msra.mxu0 0.0
        %2167 = vmatprep.subr.mxu0 0.0
        %2168 = vmatpush2.msra.mxu0 0.0
        %2169 = vmatprep.subr.mxu0 0.0
        %2170 = vmatpush2.msra.mxu0 0.0
        %2171 = vmatprep.subr.mxu0 0.0
        %2172 = vmatpush2.msra.mxu0 0.0
        %2173 = vmatprep.subr.mxu0 0.0
        %2174 = vmatpush2.msra.mxu0 0.0
        %2175 = vmatprep.subr.mxu0 0.0
        %2176 = vmatpush2.msra.mxu0 0.0
        %2177 = vmatprep.subr.mxu0 0.0
        %2178 = vmatpush2.msra.mxu0 0.0
        %2179 = vmatprep.mubr.f32.mxu0 0.0
        %2180 = vmatmul.mubr.f32.gmra.mxu0 %v2110
        %v2181 = vpop.f32.mrf.mxu0
        %v2182 = vadd.f32 0.0, %v2181
        %v2183 = vpop.f32.mrf.mxu0
        %2184 = vmatprep.mubr.f32.mxu0 0.0
        %2185 = vmatmul.mubr.f32.gmra.mxu0 %v2113
        %v2186 = vpop.f32.mrf.mxu0
        %v2187 = vadd.f32 0.0, %v2186
        %v2188 = vpop.f32.mrf.mxu0
        %2189 = vdwg.mxu0
        %v2190 = vadd.f32 %v666, %v2182
        %v2191 = vadd.f32 %v667, %v2187
        %v2192 = vld [vmem:[%s571] sm:$0x1]
        %v2193 = vld [vmem:[%s574] sm:$0x1]
        %v2194 = vsel %vm672, %v2190, 0.0
        %v2195 = vsel %vm672, %v2191, 0.0
        %v2196 = vadd.f32 %v2194, %v2195
        %v2197 = vrot.slane %v2196, 4
        %v2198 = vadd.f32 %v2196, %v2197
        %v2199 = vrot.slane %v2198, 2
        %v2200 = vadd.f32 %v2198, %v2199
        %v2201 = vrot.slane %v2200, 1
        %v2202 = vadd.f32 %v2200, %v2201
        %v2203 = vrcp.pop 16.0
        %v2204 = vmul.f32 %v2202, %v2203
        %v2205 = vsub.f32 %v2190, %v2204
        %v2206 = vsub.f32 %v2191, %v2204
        %v2207 = vmul.f32 %v2205, %v2205
        %v2208 = vmul.f32 %v2206, %v2206
        %v2209 = vsel %vm672, %v2207, 0.0
        %v2210 = vsel %vm672, %v2208, 0.0
        %v2211 = vadd.f32 %v2209, %v2210
        %v2212 = vrot.slane %v2211, 4
        %v2213 = vadd.f32 %v2211, %v2212
        %v2214 = vrot.slane %v2213, 2
        %v2215 = vadd.f32 %v2213, %v2214
        %v2216 = vrot.slane %v2215, 1
        %v2217 = vadd.f32 %v2215, %v2216
        %v2218 = vmul.f32 %v2217, %v2203
        %v2219 = vadd.f32 %v2218, 1e-05
        %v2220 = vrsqrt.pop %v2219
        %v2221 = vmul.f32 %v2205, %v2220
        %v2222 = vmul.f32 %v2206, %v2220
        %v2224 = vlaneseq
        %v2225 = vshrl.u32 %v2224, 7
        %v2226 = vsub.s32 0, %v2225
        %v2227 = vrot.slane %v2192, %v2226
        %v2229 = vmul.f32 %v2221, %v2227
        %v2230 = vmul.f32 %v2222, %v2227
        %v2232 = vlaneseq
        %v2233 = vshrl.u32 %v2232, 7
        %v2234 = vsub.s32 0, %v2233
        %v2235 = vrot.slane %v2193, %v2234
        %v2237 = vadd.f32 %v2229, %v2235
        %v2238 = vadd.f32 %v2230, %v2235
        %v2239 = vld [vmem:[%s579] sm:$0xff]
        %v2240 = vld [vmem:[%s579 + $0x8] sm:$0xff]
        %v2241 = vld [vmem:[%s579 + $0x10] sm:$0xff]
        %v2242 = vld [vmem:[%s579 + $0x18] sm:$0xff]
        %v2243 = vld [vmem:[%s582] sm:$0x1]
        %v2245 = vlaneseq
        %v2246 = vshrl.u32 %v2245, 7
        %v2247 = vsub.s32 0, %v2246
        %v2248 = vrot.slane %v2243, %v2247
        %v2251 = vsel %vm672, %v2237, 0
        %v2254 = vsel %vm672, %v2238, 0
        %2256 = vmatprep.subr.mxu0 0.0
        %2257 = vmatpush1.msra.mxu0 0.0
        %2258 = vmatprep.subr.mxu0 0.0
        %2259 = vmatpush1.msra.mxu0 0.0
        %2260 = vmatprep.subr.mxu0 0.0
        %2261 = vmatpush1.msra.mxu0 0.0
        %2262 = vmatprep.subr.mxu0 0.0
        %2263 = vmatpush1.msra.mxu0 0.0
        %2264 = vmatprep.subr.mxu0 0.0
        %2265 = vmatpush1.msra.mxu0 0.0
        %2266 = vmatprep.subr.mxu0 0.0
        %2267 = vmatpush1.msra.mxu0 0.0
        %2268 = vmatprep.subr.mxu0 0.0
        %2269 = vmatpush1.msra.mxu0 0.0
        %2270 = vmatprep.subr.mxu0 0.0
        %2271 = vmatpush1.msra.mxu0 0.0
        %2272 = vmatprep.subr.mxu0 0.0
        %2273 = vmatpush1.msra.mxu0 0.0
        %2274 = vmatprep.subr.mxu0 0.0
        %2275 = vmatpush1.msra.mxu0 0.0
        %2276 = vmatprep.subr.mxu0 0.0
        %2277 = vmatpush1.msra.mxu0 0.0
        %2278 = vmatprep.subr.mxu0 0.0
        %2279 = vmatpush1.msra.mxu0 0.0
        %2280 = vmatprep.subr.mxu0 0.0
        %2281 = vmatpush1.msra.mxu0 %v2242
        %2282 = vmatprep.subr.mxu0 0.0
        %2283 = vmatpush1.msra.mxu0 %v2241
        %2284 = vmatprep.subr.mxu0 0.0
        %2285 = vmatpush1.msra.mxu0 %v2240
        %2286 = vmatprep.subr.mxu0 0.0
        %2287 = vmatpush1.msra.mxu0 %v2239
        %2288 = vmatprep.subr.mxu0 0.0
        %2289 = vmatpush2.msra.mxu0 0.0
        %2290 = vmatprep.subr.mxu0 0.0
        %2291 = vmatpush2.msra.mxu0 0.0
        %2292 = vmatprep.subr.mxu0 0.0
        %2293 = vmatpush2.msra.mxu0 0.0
        %2294 = vmatprep.subr.mxu0 0.0
        %2295 = vmatpush2.msra.mxu0 0.0
        %2296 = vmatprep.subr.mxu0 0.0
        %2297 = vmatpush2.msra.mxu0 0.0
        %2298 = vmatprep.subr.mxu0 0.0
        %2299 = vmatpush2.msra.mxu0 0.0
        %2300 = vmatprep.subr.mxu0 0.0
        %2301 = vmatpush2.msra.mxu0 0.0
        %2302 = vmatprep.subr.mxu0 0.0
        %2303 = vmatpush2.msra.mxu0 0.0
        %2304 = vmatprep.subr.mxu0 0.0
        %2305 = vmatpush2.msra.mxu0 0.0
        %2306 = vmatprep.subr.mxu0 0.0
        %2307 = vmatpush2.msra.mxu0 0.0
        %2308 = vmatprep.subr.mxu0 0.0
        %2309 = vmatpush2.msra.mxu0 0.0
        %2310 = vmatprep.subr.mxu0 0.0
        %2311 = vmatpush2.msra.mxu0 0.0
        %2312 = vmatprep.subr.mxu0 0.0
        %2313 = vmatpush2.msra.mxu0 0.0
        %2314 = vmatprep.subr.mxu0 0.0
        %2315 = vmatpush2.msra.mxu0 0.0
        %2316 = vmatprep.subr.mxu0 0.0
        %2317 = vmatpush2.msra.mxu0 0.0
        %2318 = vmatprep.subr.mxu0 0.0
        %2319 = vmatpush2.msra.mxu0 0.0
        %2320 = vmatprep.mubr.f32.mxu0 0.0
        %2321 = vmatmul.mubr.f32.gmra.mxu0 %v2251
        %v2322 = vpop.f32.mrf.mxu0
        %v2323 = vadd.f32 %v2248, %v2322
        %v2324 = vpop.f32.mrf.mxu0
        %2325 = vmatprep.mubr.f32.mxu0 0.0
        %2326 = vmatmul.mubr.f32.gmra.mxu0 %v2254
        %v2327 = vpop.f32.mrf.mxu0
        %v2328 = vadd.f32 %v2248, %v2327
        %v2329 = vpop.f32.mrf.mxu0
        %2330 = vdwg.mxu0
        %v2331 = vmax.f32 %v2323, 0.0
        %v2332 = vmax.f32 %v2328, 0.0
        %v2333 = vld [vmem:[%s587] sm:$0xff]
        %v2334 = vld [vmem:[%s587 + $0x8] sm:$0xff]
        %v2335 = vld [vmem:[%s587 + $0x10] sm:$0xff]
        %v2336 = vld [vmem:[%s587 + $0x18] sm:$0xff]
        %v2337 = vld [vmem:[%s587 + $0x20] sm:$0xff]
        %v2338 = vld [vmem:[%s587 + $0x28] sm:$0xff]
        %v2339 = vld [vmem:[%s587 + $0x30] sm:$0xff]
        %v2340 = vld [vmem:[%s587 + $0x38] sm:$0xff]
        %v2341 = vld [vmem:[%s587 + $0x40] sm:$0xff]
        %v2342 = vld [vmem:[%s587 + $0x48] sm:$0xff]
        %v2343 = vld [vmem:[%s587 + $0x50] sm:$0xff]
        %v2344 = vld [vmem:[%s587 + $0x58] sm:$0xff]
        %v2345 = vld [vmem:[%s587 + $0x60] sm:$0xff]
        %v2346 = vld [vmem:[%s587 + $0x68] sm:$0xff]
        %v2347 = vld [vmem:[%s587 + $0x70] sm:$0xff]
        %v2348 = vld [vmem:[%s587 + $0x78] sm:$0xff]
        %2349 = vmatprep.subr.mxu0 0.0
        %2350 = vmatpush1.msra.mxu0 %v2348
        %2351 = vmatprep.subr.mxu0 0.0
        %2352 = vmatpush1.msra.mxu0 %v2347
        %2353 = vmatprep.subr.mxu0 0.0
        %2354 = vmatpush1.msra.mxu0 %v2346
        %2355 = vmatprep.subr.mxu0 0.0
        %2356 = vmatpush1.msra.mxu0 %v2345
        %2357 = vmatprep.subr.mxu0 0.0
        %2358 = vmatpush1.msra.mxu0 %v2344
        %2359 = vmatprep.subr.mxu0 0.0
        %2360 = vmatpush1.msra.mxu0 %v2343
        %2361 = vmatprep.subr.mxu0 0.0
        %2362 = vmatpush1.msra.mxu0 %v2342
        %2363 = vmatprep.subr.mxu0 0.0
        %2364 = vmatpush1.msra.mxu0 %v2341
        %2365 = vmatprep.subr.mxu0 0.0
        %2366 = vmatpush1.msra.mxu0 %v2340
        %2367 = vmatprep.subr.mxu0 0.0
        %2368 = vmatpush1.msra.mxu0 %v2339
        %2369 = vmatprep.subr.mxu0 0.0
        %2370 = vmatpush1.msra.mxu0 %v2338
        %2371 = vmatprep.subr.mxu0 0.0
        %2372 = vmatpush1.msra.mxu0 %v2337
        %2373 = vmatprep.subr.mxu0 0.0
        %2374 = vmatpush1.msra.mxu0 %v2336
        %2375 = vmatprep.subr.mxu0 0.0
        %2376 = vmatpush1.msra.mxu0 %v2335
        %2377 = vmatprep.subr.mxu0 0.0
        %2378 = vmatpush1.msra.mxu0 %v2334
        %2379 = vmatprep.subr.mxu0 0.0
        %2380 = vmatpush1.msra.mxu0 %v2333
        %2381 = vmatprep.subr.mxu0 0.0
        %2382 = vmatpush2.msra.mxu0 0.0
        %2383 = vmatprep.subr.mxu0 0.0
        %2384 = vmatpush2.msra.mxu0 0.0
        %2385 = vmatprep.subr.mxu0 0.0
        %2386 = vmatpush2.msra.mxu0 0.0
        %2387 = vmatprep.subr.mxu0 0.0
        %2388 = vmatpush2.msra.mxu0 0.0
        %2389 = vmatprep.subr.mxu0 0.0
        %2390 = vmatpush2.msra.mxu0 0.0
        %2391 = vmatprep.subr.mxu0 0.0
        %2392 = vmatpush2.msra.mxu0 0.0
        %2393 = vmatprep.subr.mxu0 0.0
        %2394 = vmatpush2.msra.mxu0 0.0
        %2395 = vmatprep.subr.mxu0 0.0
        %2396 = vmatpush2.msra.mxu0 0.0
        %2397 = vmatprep.subr.mxu0 0.0
        %2398 = vmatpush2.msra.mxu0 0.0
        %2399 = vmatprep.subr.mxu0 0.0
        %2400 = vmatpush2.msra.mxu0 0.0
        %2401 = vmatprep.subr.mxu0 0.0
        %2402 = vmatpush2.msra.mxu0 0.0
        %2403 = vmatprep.subr.mxu0 0.0
        %2404 = vmatpush2.msra.mxu0 0.0
        %2405 = vmatprep.subr.mxu0 0.0
        %2406 = vmatpush2.msra.mxu0 0.0
        %2407 = vmatprep.subr.mxu0 0.0
        %2408 = vmatpush2.msra.mxu0 0.0
        %2409 = vmatprep.subr.mxu0 0.0
        %2410 = vmatpush2.msra.mxu0 0.0
        %2411 = vmatprep.subr.mxu0 0.0
        %2412 = vmatpush2.msra.mxu0 0.0
        %2413 = vmatprep.mubr.f32.mxu0 0.0
        %2414 = vmatmul.mubr.f32.gmra.mxu0 %v2331
        %v2415 = vpop.f32.mrf.mxu0
        %v2416 = vadd.f32 0.0, %v2415
        %v2417 = vpop.f32.mrf.mxu0
        %2418 = vmatprep.mubr.f32.mxu0 0.0
        %2419 = vmatmul.mubr.f32.gmra.mxu0 %v2332
        %v2420 = vpop.f32.mrf.mxu0
        %v2421 = vadd.f32 0.0, %v2420
        %v2422 = vpop.f32.mrf.mxu0
        %2423 = vdwg.mxu0
        %v2424 = vadd.f32 %v2237, %v2416
        %v2425 = vadd.f32 %v2238, %v2421
        %v2426 = vld [vmem:[%s590] sm:$0x1]
        %v2428 = vlaneseq
        %v2429 = vshrl.u32 %v2428, 7
        %v2430 = vsub.s32 0, %v2429
        %v2431 = vrot.slane %v2426, %v2430
        %v2433 = vadd.f32 %v2424, %v2431
        %v2434 = vadd.f32 %v2425, %v2431
        %v2435 = vld [vmem:[%s593] sm:$0x1]
        %v2436 = vld [vmem:[%s596] sm:$0x1]
        %v2437 = vsel %vm672, %v2433, 0.0
        %v2438 = vsel %vm672, %v2434, 0.0
        %v2439 = vadd.f32 %v2437, %v2438
        %v2440 = vrot.slane %v2439, 4
        %v2441 = vadd.f32 %v2439, %v2440
        %v2442 = vrot.slane %v2441, 2
        %v2443 = vadd.f32 %v2441, %v2442
        %v2444 = vrot.slane %v2443, 1
        %v2445 = vadd.f32 %v2443, %v2444
        %v2446 = vmul.f32 %v2445, %v2203
        %v2447 = vsub.f32 %v2433, %v2446
        %v2448 = vsub.f32 %v2434, %v2446
        %v2449 = vmul.f32 %v2447, %v2447
        %v2450 = vmul.f32 %v2448, %v2448
        %v2451 = vsel %vm672, %v2449, 0.0
        %v2452 = vsel %vm672, %v2450, 0.0
        %v2453 = vadd.f32 %v2451, %v2452
        %v2454 = vrot.slane %v2453, 4
        %v2455 = vadd.f32 %v2453, %v2454
        %v2456 = vrot.slane %v2455, 2
        %v2457 = vadd.f32 %v2455, %v2456
        %v2458 = vrot.slane %v2457, 1
        %v2459 = vadd.f32 %v2457, %v2458
        %v2460 = vmul.f32 %v2459, %v2203
        %v2461 = vadd.f32 %v2460, 1e-05
        %v2462 = vrsqrt.pop %v2461
        %v2463 = vmul.f32 %v2447, %v2462
        %v2464 = vmul.f32 %v2448, %v2462
        %v2466 = vlaneseq
        %v2467 = vshrl.u32 %v2466, 7
        %v2468 = vsub.s32 0, %v2467
        %v2469 = vrot.slane %v2435, %v2468
        %v2471 = vmul.f32 %v2463, %v2469
        %v2472 = vmul.f32 %v2464, %v2469
        %v2474 = vlaneseq
        %v2475 = vshrl.u32 %v2474, 7
        %v2476 = vsub.s32 0, %v2475
        %v2477 = vrot.slane %v2436, %v2476
        %v2479 = vadd.f32 %v2471, %v2477
        %v2480 = vadd.f32 %v2472, %v2477
        %2481 = vst.msk [vmem:[#allocation2] sm:$0xff] %vm672, %v2479
        %2482 = vst.msk [vmem:[#allocation2 + $0x8] sm:$0xff] %vm672, %v2480
        %p2483 = scmp.eq.s32.totalorder %s28, 1
        // Predicated region
        $region77: #{tpu_custom_call.1} parent=71 // pred_check
          %p2484 = pneg %p2483
        $region78: #{tpu_custom_call.1} parent=71 // pred_check_branch
          %2486 = sbr.rel (%p2484) target = $region80
        $region79: #{tpu_custom_call.1} parent=71 // pred_region
          %2487 = vst.msk [vmem:[#allocation3] sm:$0xff] %vm672, %v2479
          %2488 = vst.msk [vmem:[#allocation3 + $0x8] sm:$0xff] %vm672, %v2480
          %v2489 = vsel %vm672, %v2479, 0.0
          %v2490 = vrot.slane %v2489, 4
          %v2491 = vadd.f32 %v2489, %v2490
          %v2492 = vrot.slane %v2491, 2
          %v2493 = vadd.f32 %v2491, %v2492
          %v2494 = vrot.slane %v2493, 1
          %v2495 = vadd.f32 %v2493, %v2494
          %v2496 = vrcp.pop 8.0
          %v2497 = vmul.f32 %v2495, %v2496
          %v2498 = vsel %vm672, %v2480, 0.0
          %v2499 = vrot.slane %v2498, 4
          %v2500 = vadd.f32 %v2498, %v2499
          %v2501 = vrot.slane %v2500, 2
          %v2502 = vadd.f32 %v2500, %v2501
          %v2503 = vrot.slane %v2502, 1
          %v2504 = vadd.f32 %v2502, %v2503
          %v2505 = vmul.f32 %v2504, %v2496
          %vm2506 = vcmask 1040384
          %v2507 = vsel %vm2506, %v2497, %v2505
          %vm2508 = vcmask 254976
          %2509 = vst.msk [vmem:[#allocation5] sm:$0x3] %vm2508, %v2507
        $region80: #{tpu_custom_call.1} parent=71 // pred_fallthru
          _
        // Predicated region
        $region81: #{tpu_custom_call.1} parent=71 // pred_check
          %p2510 = pneg %p364
        $region82: #{tpu_custom_call.1} parent=71 // pred_check_branch
          %2512 = sbr.rel (%p2510) target = $region84
        $region83: #{tpu_custom_call.1} parent=71 // pred_region
          %s2514 = ssub.s32 256, 256
          %2515 = vsyncadd [#allocation4], %s2514
          %s2516 = sshll.u32 [#allocation3], 4
          %s2517 = int_to_ptr.vmem [resolvable:$true] %s2516
          %2522 = dma.vmem_to_hbm [thread:$0]  %s2517, 256, %s13, [#allocation4], 128, 128, 8
        $region84: #{tpu_custom_call.1} parent=71 // pred_fallthru
          _
        // Predicated region
        $region85: #{tpu_custom_call.1} parent=71 // pred_check
          %p2523 = pneg %p385
        $region86: #{tpu_custom_call.1} parent=71 // pred_check_branch
          %2525 = sbr.rel (%p2523) target = $region88
        $region87: #{tpu_custom_call.1} parent=71 // pred_region
          %s2527 = ssub.s32 32, 32
          %2528 = vsyncadd [#allocation6], %s2527
          %s2530 = sshll.u32 [#allocation5], 4
          %s2531 = int_to_ptr.vmem [resolvable:$true] %s2530
          %2533 = dma.vmem_to_hbm [thread:$0]  %s2531, 32, %s14, [#allocation6]
        $region88: #{tpu_custom_call.1} parent=71 // pred_fallthru
          _
        // Predicated region
        $region89: #{tpu_custom_call.1} parent=71 // pred_check
          %p2534 = pneg %p364
        $region90: #{tpu_custom_call.1} parent=71 // pred_check_branch
          %2536 = sbr.rel (%p2534) target = $region92
        $region91: #{tpu_custom_call.1} parent=71 // pred_region
          %2537 = dma.done [#allocation4], 256
        $region92: #{tpu_custom_call.1} parent=71 // pred_fallthru
          _
        // Predicated region
        $region93: #{tpu_custom_call.1} parent=71 // pred_check
          %p2538 = pneg %p385
        $region94: #{tpu_custom_call.1} parent=71 // pred_check_branch
          %2540 = sbr.rel (%p2538) target = $region96
        $region95: #{tpu_custom_call.1} parent=71 // pred_region
          %2541 = dma.done [#allocation6], 32
        $region96: #{tpu_custom_call.1} parent=71 // pred_fallthru
          _
      $region72: #{tpu_custom_call.1} parent=5 // pred_fallthru
        _
      %p2542 = scmp.le.s32.totalorder 2, %s23
      // Predicated region
      $region97: #{tpu_custom_call.1} parent=5 // pred_check
        %p2543 = pneg %p2542
      $region98: #{tpu_custom_call.1} parent=5 // pred_check_branch
        %2545 = sbr.rel (%p2543) target = $region100
      $region99: #{tpu_custom_call.1} parent=5 // pred_region
        %s2546 = ssub.s32 %s23, 2
      $region100: #{tpu_custom_call.1} parent=5 // pred_fallthru
        _
    $region6: #{tpu_custom_call.1} parent=1 // loop_footer
      %s27 = sadd.s32 1, %s23
    $region7: #{tpu_custom_call.1} parent=1 // loop_footer_branch
      %22 = sbr.rel target = $region3
    $region8: #{tpu_custom_call.1} parent=1 // loop_exit
      _
    %2547 = vsyncpa [#allocation4], 1
    %s2548 = scalar_lea.sflag [#allocation4], 1
    %2549 = vsyncpa %s2548, 1
    %2550 = vsyncpa [#allocation6], 1

</llo_original>
